<compile_context>
chip_gen: v7x
topology: tpu7x:2x2x1
jax: 0.10.0
libtpu: 0.0.40
codegen_flags: <defaults>
</compile_context>

<pallas_src>
import jax
import jax.numpy as jnp
from jax.experimental import pallas as pl
from jax.experimental.pallas import tpu as pltpu

NUM_POINTS = 84
HIDDEN = [64, 128, 256, 512, 256, 128, 64]   # 7 hidden Linear layers (each + PReLU)
BN_LAYERS = 6                                # BatchNorm1d after hidden layers 0..5
OUT_DIM = 9261
EPS = 1e-5

TILE_N = 2048                                             # head column tile (multiple of 128)
OUT_DIM_PAD = ((OUT_DIM + TILE_N - 1) // TILE_N) * TILE_N  # 10240 = 5 * TILE_N


def mlp_kernel(alpha_ref, x_ref, *refs):
    """refs = (w0..w6, b0..b6, w7_tile, b7_tile, out_tile, h_scratch)."""
    w_refs = refs[0:7]
    b_refs = refs[7:14]
    w7_ref, b7_ref, o_ref, h_ref = refs[14], refs[15], refs[16], refs[17]

    # Trunk: computed once (grid step 0); result persists in VMEM scratch.
    @pl.when(pl.program_id(0) == 0)
    def _():
        h = x_ref[...].astype(jnp.bfloat16)
        for i in range(7):
            y = jnp.dot(h, w_refs[i][...], preferred_element_type=jnp.float32)
            y = y + b_refs[i][...]
            a = alpha_ref[i]                       # shared PReLU alpha (SMEM scalar)
            y = jnp.where(y >= 0.0, y, a * y)
            h = y.astype(jnp.bfloat16)
        h_ref[...] = h

    # Head tile: Linear(64 -> TILE_N columns of the padded 9261) + Sigmoid.
    z = jnp.dot(h_ref[...], w7_ref[...], preferred_element_type=jnp.float32)
    o_ref[...] = jax.nn.sigmoid(z + b7_ref[...])


def init_params(key):
    """PyTorch-Linear-style init, plus non-trivial BN running stats to exercise the fold."""
    dims = [NUM_POINTS] + HIDDEN + [OUT_DIM]
    ws, bs = [], []
    for i in range(8):
        fan_in, fan_out = dims[i], dims[i + 1]
        key, k1, k2 = jax.random.split(key, 3)
        bound = 1.0 / float(fan_in) ** 0.5
        ws.append(jax.random.uniform(k1, (fan_in, fan_out), jnp.float32, -bound, bound))
        bs.append(jax.random.uniform(k2, (fan_out,), jnp.float32, -bound, bound))
    alphas = jnp.full((7,), 0.25, dtype=jnp.float32)
    bn = []
    for i in range(BN_LAYERS):
        n = HIDDEN[i]
        key, k1, k2, k3, k4 = jax.random.split(key, 5)
        gamma = jax.random.uniform(k1, (n,), jnp.float32, 0.5, 1.5)
        beta = 0.1 * jax.random.normal(k2, (n,), jnp.float32)
        mean = 0.1 * jax.random.normal(k3, (n,), jnp.float32)
        var = jax.random.uniform(k4, (n,), jnp.float32, 0.5, 1.5)
        bn.append((gamma, beta, mean, var))
    return ws, bs, alphas, bn


def prepare_params(params):
    """Fold eval-mode BN into the following Linear, pad the head, cast weights to bf16."""
    ws, bs, alphas, bn = params
    ws = list(ws)
    bs = list(bs)
    for i in range(BN_LAYERS):
        gamma, beta, mean, var = bn[i]
        s = gamma / jnp.sqrt(var + EPS)
        t = beta - mean * s
        W, b = ws[i + 1], bs[i + 1]
        bs[i + 1] = b + t @ W                 # uses the ORIGINAL W
        ws[i + 1] = s[:, None] * W
    # Pad head to a lane-dense multiple of TILE_N (zeros -> discarded columns).
    w7 = jnp.pad(ws[7], ((0, 0), (0, OUT_DIM_PAD - OUT_DIM)))
    b7 = jnp.pad(bs[7], (0, OUT_DIM_PAD - OUT_DIM))
    trunk_ws = [w.astype(jnp.bfloat16) for w in ws[:7]]
    trunk_bs = [b.reshape(1, -1) for b in bs[:7]]
    return alphas, trunk_ws, trunk_bs, w7.astype(jnp.bfloat16), b7.reshape(1, -1)


def net_forward(x, prepared):
    alphas, trunk_ws, trunk_bs, w7, b7 = prepared
    B = x.shape[0]
    grid = (OUT_DIM_PAD // TILE_N,)

    def fixed(shape):
        # trunk arrays: whole-array block, constant index map -> single DMA, stays resident
        return pl.BlockSpec(shape, lambda n, *_: (0, 0))

    in_specs = (
        [fixed((B, NUM_POINTS))]
        + [fixed(w.shape) for w in trunk_ws]
        + [fixed(b.shape) for b in trunk_bs]
        + [
            pl.BlockSpec((HIDDEN[-1], TILE_N), lambda n, *_: (0, n)),   # W7 column tile
            pl.BlockSpec((1, TILE_N), lambda n, *_: (0, n)),            # b7 column tile
        ]
    )
    out_specs = pl.BlockSpec((B, TILE_N), lambda n, *_: (0, n))

    grid_spec = pltpu.PrefetchScalarGridSpec(
        num_scalar_prefetch=1,              # PReLU alphas -> SMEM
        grid=grid,
        in_specs=in_specs,
        out_specs=out_specs,
        scratch_shapes=[pltpu.VMEM((B, HIDDEN[-1]), jnp.bfloat16)],   # trunk output h
    )

    out = pl.pallas_call(
        mlp_kernel,
        grid_spec=grid_spec,
        out_shape=jax.ShapeDtypeStruct((B, OUT_DIM_PAD), jnp.float32),
        compiler_params=pltpu.CompilerParams(
            # "arbitrary": the head tiles must run sequentially on one core so
            # the step-0 trunk scratch is visible to all later steps.
            dimension_semantics=("arbitrary",),
            vmem_limit_bytes=16 * 1024 * 1024,
        ),
    )(alphas, x, *trunk_ws, *trunk_bs, w7, b7)

    return out[:, :OUT_DIM].reshape(-1)     # matches .view(-1) in the PyTorch forward


def reference_forward(x, params):
    """Pure-JAX f32 eval-mode reference (un-folded params)."""
    ws, bs, alphas, bn = params
    h = x
    for i in range(7):
        h = h @ ws[i] + bs[i]
        h = jnp.where(h >= 0.0, h, alphas[i] * h)
        if i < BN_LAYERS:
            gamma, beta, mean, var = bn[i]
            h = (h - mean) / jnp.sqrt(var + EPS) * gamma + beta
    z = h @ ws[7] + bs[7]
    return jax.nn.sigmoid(z).reshape(-1)


if __name__ == "__main__":
    key = jax.random.PRNGKey(0)
    k_param, k_x = jax.random.split(key)

    params = init_params(k_param)
    prepared = prepare_params(params)

    B = 8
    x = jax.random.normal(k_x, (B, NUM_POINTS), dtype=jnp.float32)

    y = net_forward(x, prepared)
    y = jax.block_until_ready(y)

    assert y.shape == (B * OUT_DIM,), y.shape
    assert bool(jnp.all(jnp.isfinite(y)))
    assert bool(jnp.all((y >= 0.0) & (y <= 1.0)))          # sigmoid range

    y_ref = reference_forward(x, params)
    max_err = float(jnp.max(jnp.abs(y - y_ref)))
    assert max_err < 5e-2, f"max abs err vs f32 reference: {max_err}"
    print("KERNEL_OK")
</pallas_src>

<mosaic_0001>
module attributes {stable_mosaic.version = 11 : i64} {
  func.func @mlp_kernel(%arg0: i32, %arg1: memref<7xf32, #tpu.memory_space<smem>>, %arg2: memref<8x84xf32, #tpu.memory_space<vmem>>, %arg3: memref<84x64xbf16, #tpu.memory_space<vmem>>, %arg4: memref<64x128xbf16, #tpu.memory_space<vmem>>, %arg5: memref<128x256xbf16, #tpu.memory_space<vmem>>, %arg6: memref<256x512xbf16, #tpu.memory_space<vmem>>, %arg7: memref<512x256xbf16, #tpu.memory_space<vmem>>, %arg8: memref<256x128xbf16, #tpu.memory_space<vmem>>, %arg9: memref<128x64xbf16, #tpu.memory_space<vmem>>, %arg10: memref<1x64xf32, #tpu.memory_space<vmem>>, %arg11: memref<1x128xf32, #tpu.memory_space<vmem>>, %arg12: memref<1x256xf32, #tpu.memory_space<vmem>>, %arg13: memref<1x512xf32, #tpu.memory_space<vmem>>, %arg14: memref<1x256xf32, #tpu.memory_space<vmem>>, %arg15: memref<1x128xf32, #tpu.memory_space<vmem>>, %arg16: memref<1x64xf32, #tpu.memory_space<vmem>>, %arg17: memref<64x2048xbf16, #tpu.memory_space<vmem>>, %arg18: memref<1x2048xf32, #tpu.memory_space<vmem>>, %arg19: memref<8x2048xf32, #tpu.memory_space<vmem>>, %arg20: memref<8x64xbf16, #tpu.memory_space<vmem>>) attributes {dimension_semantics = [#tpu.dimension_semantics<arbitrary>], iteration_bounds = array<i64: 5>, scalar_prefetch = 1 : i64, scratch_operands = 1 : i64, tpu.core_type = #tpu.core_type<tc>, window_params = [{pipeline_mode = #tpu.pipeline_mode<synchronous>, transform_indices = @transform_0, window_bounds = array<i64: 8, 84>}, {pipeline_mode = #tpu.pipeline_mode<synchronous>, transform_indices = @transform_1, window_bounds = array<i64: 84, 64>}, {pipeline_mode = #tpu.pipeline_mode<synchronous>, transform_indices = @transform_2, window_bounds = array<i64: 64, 128>}, {pipeline_mode = #tpu.pipeline_mode<synchronous>, transform_indices = @transform_3, window_bounds = array<i64: 128, 256>}, {pipeline_mode = #tpu.pipeline_mode<synchronous>, transform_indices = @transform_4, window_bounds = array<i64: 256, 512>}, {pipeline_mode = #tpu.pipeline_mode<synchronous>, transform_indices = @transform_5, window_bounds = array<i64: 512, 256>}, {pipeline_mode = #tpu.pipeline_mode<synchronous>, transform_indices = @transform_6, window_bounds = array<i64: 256, 128>}, {pipeline_mode = #tpu.pipeline_mode<synchronous>, transform_indices = @transform_7, window_bounds = array<i64: 128, 64>}, {pipeline_mode = #tpu.pipeline_mode<synchronous>, transform_indices = @transform_8, window_bounds = array<i64: 1, 64>}, {pipeline_mode = #tpu.pipeline_mode<synchronous>, transform_indices = @transform_9, window_bounds = array<i64: 1, 128>}, {pipeline_mode = #tpu.pipeline_mode<synchronous>, transform_indices = @transform_10, window_bounds = array<i64: 1, 256>}, {pipeline_mode = #tpu.pipeline_mode<synchronous>, transform_indices = @transform_11, window_bounds = array<i64: 1, 512>}, {pipeline_mode = #tpu.pipeline_mode<synchronous>, transform_indices = @transform_12, window_bounds = array<i64: 1, 256>}, {pipeline_mode = #tpu.pipeline_mode<synchronous>, transform_indices = @transform_13, window_bounds = array<i64: 1, 128>}, {pipeline_mode = #tpu.pipeline_mode<synchronous>, transform_indices = @transform_14, window_bounds = array<i64: 1, 64>}, {transform_indices = @transform_15, window_bounds = array<i64: 64, 2048>}, {transform_indices = @transform_16, window_bounds = array<i64: 1, 2048>}, {transform_indices = @transform_17, window_bounds = array<i64: 8, 2048>}]} {
    %c0_i32 = arith.constant 0 : i32
    %0 = arith.cmpi eq, %arg0, %c0_i32 : i32
    %1 = arith.extui %0 : i1 to i32
    %c0_i32_0 = arith.constant 0 : i32
    %2 = arith.cmpi ne, %1, %c0_i32_0 : i32
    scf.if %2 {
      %c0_9 = arith.constant 0 : index
      %c0_10 = arith.constant 0 : index
      %15 = vector.load %arg2[%c0_9, %c0_10] : memref<8x84xf32, #tpu.memory_space<vmem>>, vector<8x84xf32>
      %16 = arith.truncf %15 : vector<8x84xf32> to vector<8x84xbf16>
      %c0_11 = arith.constant 0 : index
      %c0_12 = arith.constant 0 : index
      %17 = vector.load %arg3[%c0_11, %c0_12] : memref<84x64xbf16, #tpu.memory_space<vmem>>, vector<84x64xbf16>
      %cst_13 = arith.constant dense<0.000000e+00> : vector<8x64xf32>
      %18 = tpu.matmul %16, %17, %cst_13 {dimension_numbers = #tpu.dot_dimension_numbers<[1], [0], [0], [1], [0, 0, 1, 1], [], []>} : vector<8x84xbf16>, vector<84x64xbf16>, vector<8x64xf32> -> vector<8x64xf32>
      %c0_14 = arith.constant 0 : index
      %c0_15 = arith.constant 0 : index
      %19 = vector.load %arg10[%c0_14, %c0_15] : memref<1x64xf32, #tpu.memory_space<vmem>>, vector<1x64xf32>
      %20 = vector.broadcast %19 : vector<1x64xf32> to vector<8x64xf32>
      %21 = arith.addf %18, %20 : vector<8x64xf32>
      %c0_16 = arith.constant 0 : index
      %22 = memref.load %arg1[%c0_16] : memref<7xf32, #tpu.memory_space<smem>>
      %cst_17 = arith.constant 0.000000e+00 : f32
      %23 = vector.broadcast %cst_17 : f32 to vector<8x64xf32>
      %24 = arith.cmpf oge, %21, %23 : vector<8x64xf32>
      %25 = vector.broadcast %22 : f32 to vector<8x64xf32>
      %26 = arith.mulf %25, %21 : vector<8x64xf32>
      %27 = arith.select %24, %21, %26 : vector<8x64xi1>, vector<8x64xf32>
      %28 = arith.truncf %27 : vector<8x64xf32> to vector<8x64xbf16>
      %c0_18 = arith.constant 0 : index
      %c0_19 = arith.constant 0 : index
      %29 = vector.load %arg4[%c0_18, %c0_19] : memref<64x128xbf16, #tpu.memory_space<vmem>>, vector<64x128xbf16>
      %cst_20 = arith.constant dense<0.000000e+00> : vector<8x128xf32>
      %30 = tpu.matmul %28, %29, %cst_20 {dimension_numbers = #tpu.dot_dimension_numbers<[1], [0], [0], [1], [0, 0, 1, 1], [], []>} : vector<8x64xbf16>, vector<64x128xbf16>, vector<8x128xf32> -> vector<8x128xf32>
      %c0_21 = arith.constant 0 : index
      %c0_22 = arith.constant 0 : index
      %31 = vector.load %arg11[%c0_21, %c0_22] : memref<1x128xf32, #tpu.memory_space<vmem>>, vector<1x128xf32>
      %32 = vector.broadcast %31 : vector<1x128xf32> to vector<8x128xf32>
      %33 = arith.addf %30, %32 : vector<8x128xf32>
      %c1 = arith.constant 1 : index
      %34 = memref.load %arg1[%c1] : memref<7xf32, #tpu.memory_space<smem>>
      %cst_23 = arith.constant 0.000000e+00 : f32
      %35 = vector.broadcast %cst_23 : f32 to vector<8x128xf32>
      %36 = arith.cmpf oge, %33, %35 : vector<8x128xf32>
      %37 = vector.broadcast %34 : f32 to vector<8x128xf32>
      %38 = arith.mulf %37, %33 : vector<8x128xf32>
      %39 = arith.select %36, %33, %38 : vector<8x128xi1>, vector<8x128xf32>
      %40 = arith.truncf %39 : vector<8x128xf32> to vector<8x128xbf16>
      %c0_24 = arith.constant 0 : index
      %c0_25 = arith.constant 0 : index
      %41 = vector.load %arg5[%c0_24, %c0_25] : memref<128x256xbf16, #tpu.memory_space<vmem>>, vector<128x256xbf16>
      %cst_26 = arith.constant dense<0.000000e+00> : vector<8x256xf32>
      %42 = tpu.matmul %40, %41, %cst_26 {dimension_numbers = #tpu.dot_dimension_numbers<[1], [0], [0], [1], [0, 0, 1, 1], [], []>} : vector<8x128xbf16>, vector<128x256xbf16>, vector<8x256xf32> -> vector<8x256xf32>
      %c0_27 = arith.constant 0 : index
      %c0_28 = arith.constant 0 : index
      %43 = vector.load %arg12[%c0_27, %c0_28] : memref<1x256xf32, #tpu.memory_space<vmem>>, vector<1x256xf32>
      %44 = vector.broadcast %43 : vector<1x256xf32> to vector<8x256xf32>
      %45 = arith.addf %42, %44 : vector<8x256xf32>
      %c2 = arith.constant 2 : index
      %46 = memref.load %arg1[%c2] : memref<7xf32, #tpu.memory_space<smem>>
      %cst_29 = arith.constant 0.000000e+00 : f32
      %47 = vector.broadcast %cst_29 : f32 to vector<8x256xf32>
      %48 = arith.cmpf oge, %45, %47 : vector<8x256xf32>
      %49 = vector.broadcast %46 : f32 to vector<8x256xf32>
      %50 = arith.mulf %49, %45 : vector<8x256xf32>
      %51 = arith.select %48, %45, %50 : vector<8x256xi1>, vector<8x256xf32>
      %52 = arith.truncf %51 : vector<8x256xf32> to vector<8x256xbf16>
      %c0_30 = arith.constant 0 : index
      %c0_31 = arith.constant 0 : index
      %53 = vector.load %arg6[%c0_30, %c0_31] : memref<256x512xbf16, #tpu.memory_space<vmem>>, vector<256x512xbf16>
      %cst_32 = arith.constant dense<0.000000e+00> : vector<8x512xf32>
      %54 = tpu.matmul %52, %53, %cst_32 {dimension_numbers = #tpu.dot_dimension_numbers<[1], [0], [0], [1], [0, 0, 1, 1], [], []>} : vector<8x256xbf16>, vector<256x512xbf16>, vector<8x512xf32> -> vector<8x512xf32>
      %c0_33 = arith.constant 0 : index
      %c0_34 = arith.constant 0 : index
      %55 = vector.load %arg13[%c0_33, %c0_34] : memref<1x512xf32, #tpu.memory_space<vmem>>, vector<1x512xf32>
      %56 = vector.broadcast %55 : vector<1x512xf32> to vector<8x512xf32>
      %57 = arith.addf %54, %56 : vector<8x512xf32>
      %c3 = arith.constant 3 : index
      %58 = memref.load %arg1[%c3] : memref<7xf32, #tpu.memory_space<smem>>
      %cst_35 = arith.constant 0.000000e+00 : f32
      %59 = vector.broadcast %cst_35 : f32 to vector<8x512xf32>
      %60 = arith.cmpf oge, %57, %59 : vector<8x512xf32>
      %61 = vector.broadcast %58 : f32 to vector<8x512xf32>
      %62 = arith.mulf %61, %57 : vector<8x512xf32>
      %63 = arith.select %60, %57, %62 : vector<8x512xi1>, vector<8x512xf32>
      %64 = arith.truncf %63 : vector<8x512xf32> to vector<8x512xbf16>
      %c0_36 = arith.constant 0 : index
      %c0_37 = arith.constant 0 : index
      %65 = vector.load %arg7[%c0_36, %c0_37] : memref<512x256xbf16, #tpu.memory_space<vmem>>, vector<512x256xbf16>
      %cst_38 = arith.constant dense<0.000000e+00> : vector<8x256xf32>
      %66 = tpu.matmul %64, %65, %cst_38 {dimension_numbers = #tpu.dot_dimension_numbers<[1], [0], [0], [1], [0, 0, 1, 1], [], []>} : vector<8x512xbf16>, vector<512x256xbf16>, vector<8x256xf32> -> vector<8x256xf32>
      %c0_39 = arith.constant 0 : index
      %c0_40 = arith.constant 0 : index
      %67 = vector.load %arg14[%c0_39, %c0_40] : memref<1x256xf32, #tpu.memory_space<vmem>>, vector<1x256xf32>
      %68 = vector.broadcast %67 : vector<1x256xf32> to vector<8x256xf32>
      %69 = arith.addf %66, %68 : vector<8x256xf32>
      %c4 = arith.constant 4 : index
      %70 = memref.load %arg1[%c4] : memref<7xf32, #tpu.memory_space<smem>>
      %cst_41 = arith.constant 0.000000e+00 : f32
      %71 = vector.broadcast %cst_41 : f32 to vector<8x256xf32>
      %72 = arith.cmpf oge, %69, %71 : vector<8x256xf32>
      %73 = vector.broadcast %70 : f32 to vector<8x256xf32>
      %74 = arith.mulf %73, %69 : vector<8x256xf32>
      %75 = arith.select %72, %69, %74 : vector<8x256xi1>, vector<8x256xf32>
      %76 = arith.truncf %75 : vector<8x256xf32> to vector<8x256xbf16>
      %c0_42 = arith.constant 0 : index
      %c0_43 = arith.constant 0 : index
      %77 = vector.load %arg8[%c0_42, %c0_43] : memref<256x128xbf16, #tpu.memory_space<vmem>>, vector<256x128xbf16>
      %cst_44 = arith.constant dense<0.000000e+00> : vector<8x128xf32>
      %78 = tpu.matmul %76, %77, %cst_44 {dimension_numbers = #tpu.dot_dimension_numbers<[1], [0], [0], [1], [0, 0, 1, 1], [], []>} : vector<8x256xbf16>, vector<256x128xbf16>, vector<8x128xf32> -> vector<8x128xf32>
      %c0_45 = arith.constant 0 : index
      %c0_46 = arith.constant 0 : index
      %79 = vector.load %arg15[%c0_45, %c0_46] : memref<1x128xf32, #tpu.memory_space<vmem>>, vector<1x128xf32>
      %80 = vector.broadcast %79 : vector<1x128xf32> to vector<8x128xf32>
      %81 = arith.addf %78, %80 : vector<8x128xf32>
      %c5 = arith.constant 5 : index
      %82 = memref.load %arg1[%c5] : memref<7xf32, #tpu.memory_space<smem>>
      %cst_47 = arith.constant 0.000000e+00 : f32
      %83 = vector.broadcast %cst_47 : f32 to vector<8x128xf32>
      %84 = arith.cmpf oge, %81, %83 : vector<8x128xf32>
      %85 = vector.broadcast %82 : f32 to vector<8x128xf32>
      %86 = arith.mulf %85, %81 : vector<8x128xf32>
      %87 = arith.select %84, %81, %86 : vector<8x128xi1>, vector<8x128xf32>
      %88 = arith.truncf %87 : vector<8x128xf32> to vector<8x128xbf16>
      %c0_48 = arith.constant 0 : index
      %c0_49 = arith.constant 0 : index
      %89 = vector.load %arg9[%c0_48, %c0_49] : memref<128x64xbf16, #tpu.memory_space<vmem>>, vector<128x64xbf16>
      %cst_50 = arith.constant dense<0.000000e+00> : vector<8x64xf32>
      %90 = tpu.matmul %88, %89, %cst_50 {dimension_numbers = #tpu.dot_dimension_numbers<[1], [0], [0], [1], [0, 0, 1, 1], [], []>} : vector<8x128xbf16>, vector<128x64xbf16>, vector<8x64xf32> -> vector<8x64xf32>
      %c0_51 = arith.constant 0 : index
      %c0_52 = arith.constant 0 : index
      %91 = vector.load %arg16[%c0_51, %c0_52] : memref<1x64xf32, #tpu.memory_space<vmem>>, vector<1x64xf32>
      %92 = vector.broadcast %91 : vector<1x64xf32> to vector<8x64xf32>
      %93 = arith.addf %90, %92 : vector<8x64xf32>
      %c6 = arith.constant 6 : index
      %94 = memref.load %arg1[%c6] : memref<7xf32, #tpu.memory_space<smem>>
      %cst_53 = arith.constant 0.000000e+00 : f32
      %95 = vector.broadcast %cst_53 : f32 to vector<8x64xf32>
      %96 = arith.cmpf oge, %93, %95 : vector<8x64xf32>
      %97 = vector.broadcast %94 : f32 to vector<8x64xf32>
      %98 = arith.mulf %97, %93 : vector<8x64xf32>
      %99 = arith.select %96, %93, %98 : vector<8x64xi1>, vector<8x64xf32>
      %100 = arith.truncf %99 : vector<8x64xf32> to vector<8x64xbf16>
      %c0_54 = arith.constant 0 : index
      %c0_55 = arith.constant 0 : index
      %101 = vector.load %arg20[%c0_54, %c0_55] : memref<8x64xbf16, #tpu.memory_space<vmem>>, vector<8x64xbf16>
      tpu.vector_store %arg20[%c0_54, %c0_55], %100 {strides = array<i32>} : memref<8x64xbf16, #tpu.memory_space<vmem>>, vector<8x64xbf16>,
    } else {
    }
    %c0 = arith.constant 0 : index
    %c0_1 = arith.constant 0 : index
    %3 = vector.load %arg20[%c0, %c0_1] : memref<8x64xbf16, #tpu.memory_space<vmem>>, vector<8x64xbf16>
    %c0_2 = arith.constant 0 : index
    %c0_3 = arith.constant 0 : index
    %4 = vector.load %arg17[%c0_2, %c0_3] : memref<64x2048xbf16, #tpu.memory_space<vmem>>, vector<64x2048xbf16>
    %cst = arith.constant dense<0.000000e+00> : vector<8x2048xf32>
    %5 = tpu.matmul %3, %4, %cst {dimension_numbers = #tpu.dot_dimension_numbers<[1], [0], [0], [1], [0, 0, 1, 1], [], []>} : vector<8x64xbf16>, vector<64x2048xbf16>, vector<8x2048xf32> -> vector<8x2048xf32>
    %c0_4 = arith.constant 0 : index
    %c0_5 = arith.constant 0 : index
    %6 = vector.load %arg18[%c0_4, %c0_5] : memref<1x2048xf32, #tpu.memory_space<vmem>>, vector<1x2048xf32>
    %7 = vector.broadcast %6 : vector<1x2048xf32> to vector<8x2048xf32>
    %8 = arith.addf %5, %7 : vector<8x2048xf32>
    %9 = arith.negf %8 : vector<8x2048xf32>
    %10 = math.exp %9 : vector<8x2048xf32>
    %cst_6 = arith.constant 1.000000e+00 : f32
    %11 = vector.broadcast %cst_6 : f32 to vector<8x2048xf32>
    %12 = arith.addf %11, %10 : vector<8x2048xf32>
    %13 = arith.divf %11, %12 : vector<8x2048xf32>
    %c0_7 = arith.constant 0 : index
    %c0_8 = arith.constant 0 : index
    %14 = vector.load %arg19[%c0_7, %c0_8] : memref<8x2048xf32, #tpu.memory_space<vmem>>, vector<8x2048xf32>
    tpu.vector_store %arg19[%c0_7, %c0_8], %13 {strides = array<i32>} : memref<8x2048xf32, #tpu.memory_space<vmem>>, vector<8x2048xf32>,
    return
  }
  func.func @transform_0(%arg0: i32, %arg1: memref<7xf32, #tpu.memory_space<smem>>) -> (i32, i32) {
    %c0_i32 = arith.constant 0 : i32
    %c0_i32_0 = arith.constant 0 : i32
    %c0_i32_1 = arith.constant 0 : i32
    return %c0_i32, %c0_i32_0 : i32, i32
  }
  func.func @transform_1(%arg0: i32, %arg1: memref<7xf32, #tpu.memory_space<smem>>) -> (i32, i32) {
    %c0_i32 = arith.constant 0 : i32
    %c0_i32_0 = arith.constant 0 : i32
    %c0_i32_1 = arith.constant 0 : i32
    return %c0_i32, %c0_i32_0 : i32, i32
  }
  func.func @transform_2(%arg0: i32, %arg1: memref<7xf32, #tpu.memory_space<smem>>) -> (i32, i32) {
    %c0_i32 = arith.constant 0 : i32
    %c0_i32_0 = arith.constant 0 : i32
    %c0_i32_1 = arith.constant 0 : i32
    return %c0_i32, %c0_i32_0 : i32, i32
  }
  func.func @transform_3(%arg0: i32, %arg1: memref<7xf32, #tpu.memory_space<smem>>) -> (i32, i32) {
    %c0_i32 = arith.constant 0 : i32
    %c0_i32_0 = arith.constant 0 : i32
    %c0_i32_1 = arith.constant 0 : i32
    return %c0_i32, %c0_i32_0 : i32, i32
  }
  func.func @transform_4(%arg0: i32, %arg1: memref<7xf32, #tpu.memory_space<smem>>) -> (i32, i32) {
    %c0_i32 = arith.constant 0 : i32
    %c0_i32_0 = arith.constant 0 : i32
    %c0_i32_1 = arith.constant 0 : i32
    return %c0_i32, %c0_i32_0 : i32, i32
  }
  func.func @transform_5(%arg0: i32, %arg1: memref<7xf32, #tpu.memory_space<smem>>) -> (i32, i32) {
    %c0_i32 = arith.constant 0 : i32
    %c0_i32_0 = arith.constant 0 : i32
    %c0_i32_1 = arith.constant 0 : i32
    return %c0_i32, %c0_i32_0 : i32, i32
  }
  func.func @transform_6(%arg0: i32, %arg1: memref<7xf32, #tpu.memory_space<smem>>) -> (i32, i32) {
    %c0_i32 = arith.constant 0 : i32
    %c0_i32_0 = arith.constant 0 : i32
    %c0_i32_1 = arith.constant 0 : i32
    return %c0_i32, %c0_i32_0 : i32, i32
  }
  func.func @transform_7(%arg0: i32, %arg1: memref<7xf32, #tpu.memory_space<smem>>) -> (i32, i32) {
    %c0_i32 = arith.constant 0 : i32
    %c0_i32_0 = arith.constant 0 : i32
    %c0_i32_1 = arith.constant 0 : i32
    return %c0_i32, %c0_i32_0 : i32, i32
  }
  func.func @transform_8(%arg0: i32, %arg1: memref<7xf32, #tpu.memory_space<smem>>) -> (i32, i32) {
    %c0_i32 = arith.constant 0 : i32
    %c0_i32_0 = arith.constant 0 : i32
    %c0_i32_1 = arith.constant 0 : i32
    return %c0_i32, %c0_i32_0 : i32, i32
  }
  func.func @transform_9(%arg0: i32, %arg1: memref<7xf32, #tpu.memory_space<smem>>) -> (i32, i32) {
    %c0_i32 = arith.constant 0 : i32
    %c0_i32_0 = arith.constant 0 : i32
    %c0_i32_1 = arith.constant 0 : i32
    return %c0_i32, %c0_i32_0 : i32, i32
  }
  func.func @transform_10(%arg0: i32, %arg1: memref<7xf32, #tpu.memory_space<smem>>) -> (i32, i32) {
    %c0_i32 = arith.constant 0 : i32
    %c0_i32_0 = arith.constant 0 : i32
    %c0_i32_1 = arith.constant 0 : i32
    return %c0_i32, %c0_i32_0 : i32, i32
  }
  func.func @transform_11(%arg0: i32, %arg1: memref<7xf32, #tpu.memory_space<smem>>) -> (i32, i32) {
    %c0_i32 = arith.constant 0 : i32
    %c0_i32_0 = arith.constant 0 : i32
    %c0_i32_1 = arith.constant 0 : i32
    return %c0_i32, %c0_i32_0 : i32, i32
  }
  func.func @transform_12(%arg0: i32, %arg1: memref<7xf32, #tpu.memory_space<smem>>) -> (i32, i32) {
    %c0_i32 = arith.constant 0 : i32
    %c0_i32_0 = arith.constant 0 : i32
    %c0_i32_1 = arith.constant 0 : i32
    return %c0_i32, %c0_i32_0 : i32, i32
  }
  func.func @transform_13(%arg0: i32, %arg1: memref<7xf32, #tpu.memory_space<smem>>) -> (i32, i32) {
    %c0_i32 = arith.constant 0 : i32
    %c0_i32_0 = arith.constant 0 : i32
    %c0_i32_1 = arith.constant 0 : i32
    return %c0_i32, %c0_i32_0 : i32, i32
  }
  func.func @transform_14(%arg0: i32, %arg1: memref<7xf32, #tpu.memory_space<smem>>) -> (i32, i32) {
    %c0_i32 = arith.constant 0 : i32
    %c0_i32_0 = arith.constant 0 : i32
    %c0_i32_1 = arith.constant 0 : i32
    return %c0_i32, %c0_i32_0 : i32, i32
  }
  func.func @transform_15(%arg0: i32, %arg1: memref<7xf32, #tpu.memory_space<smem>>) -> (i32, i32) {
    %c0_i32 = arith.constant 0 : i32
    %c0_i32_0 = arith.constant 0 : i32
    return %c0_i32, %arg0 : i32, i32
  }
  func.func @transform_16(%arg0: i32, %arg1: memref<7xf32, #tpu.memory_space<smem>>) -> (i32, i32) {
    %c0_i32 = arith.constant 0 : i32
    %c0_i32_0 = arith.constant 0 : i32
    return %c0_i32, %arg0 : i32, i32
  }
  func.func @transform_17(%arg0: i32, %arg1: memref<7xf32, #tpu.memory_space<smem>>) -> (i32, i32) {
    %c0_i32 = arith.constant 0 : i32
    %c0_i32_0 = arith.constant 0 : i32
    return %c0_i32, %arg0 : i32, i32
  }
}

</mosaic_0001>

<llo_original>
// kernel: tpu_custom_call.1
$region0: #{tpu_custom_call.1}
  #allocation0 [shape = 'u32[]', space=smem, size = 0x4, offset = 0x4, fixed_abs, tag = 'smem constant byte address 0x4 - core index']
  #allocation1 [shape = 'u32[144,128]{1,0:T(1,128)}', space=vmem, size = 0x12000, scoped, tag = 'internal scratch']
  #allocation2 [shape = 'bf16[8,64]{1,0:T(8,128)(2,1)}', space=vmem, size = 0x800, scoped, tag = 'scratch operand']
  #allocation3 [shape = 's32[1]{0}', space=sflag, size = 0x4, scoped, tag = 'scoped memory for tpu_custom_call.1']
  #allocation4 [shape = 'u8[512]{0}', space=smem, size = 0x200, scoped, tag = 'prefetched SMEM operand 0']
  %s0 = inlined_call_operand.hbm [shape: f32[7], index: 0, kind: input, shape index: {}]
  %s1 = inlined_call_operand.hbm [shape: f32[8,84], index: 1, kind: input, shape index: {}]
  %s2 = inlined_call_operand.vmem [shape: bf16[84,64], index: 2, kind: input, shape index: {}]
  %s3 = inlined_call_operand.hbm [shape: bf16[64,128], index: 3, kind: input, shape index: {}]
  %s4 = inlined_call_operand.hbm [shape: bf16[128,256], index: 4, kind: input, shape index: {}]
  %s5 = inlined_call_operand.hbm [shape: bf16[256,512], index: 5, kind: input, shape index: {}]
  %s6 = inlined_call_operand.hbm [shape: bf16[512,256], index: 6, kind: input, shape index: {}]
  %s7 = inlined_call_operand.hbm [shape: bf16[256,128], index: 7, kind: input, shape index: {}]
  %s8 = inlined_call_operand.vmem [shape: bf16[128,64], index: 8, kind: input, shape index: {}]
  %s9 = inlined_call_operand.hbm [shape: f32[1,64], index: 9, kind: input, shape index: {}]
  %s10 = inlined_call_operand.hbm [shape: f32[1,128], index: 10, kind: input, shape index: {}]
  %s11 = inlined_call_operand.hbm [shape: f32[1,256], index: 11, kind: input, shape index: {}]
  %s12 = inlined_call_operand.hbm [shape: f32[1,512], index: 12, kind: input, shape index: {}]
  %s13 = inlined_call_operand.hbm [shape: f32[1,256], index: 13, kind: input, shape index: {}]
  %s14 = inlined_call_operand.hbm [shape: f32[1,128], index: 14, kind: input, shape index: {}]
  %s15 = inlined_call_operand.hbm [shape: f32[1,64], index: 15, kind: input, shape index: {}]
  %s16 = inlined_call_operand.hbm [shape: bf16[64,10240], index: 16, kind: input, shape index: {}]
  %s17 = inlined_call_operand.hbm [shape: f32[1,10240], index: 17, kind: input, shape index: {}]
  %s18 = inlined_call_operand.hbm [shape: f32[8,10240], index: 18, kind: output, shape index: {}]
  %s19 = sld [smem:[#allocation0]]
  $region165: #{tpu_custom_call.1} parent=0
    _
  %s21 = ssub.s32 1, %s19
  %s22 = scalar_select 0, %s21, %s19
  %24 = dma.hbm_to_smem %s0, 16, [#allocation4], [#allocation3]
  %25 = dma.done [#allocation3], 16
  %26 = sfence
  $region1: #{tpu_custom_call.1} parent=0
    #allocation5 [shape = 'u8[4096]{0}', space=vmem, size = 0x1000, scoped, tag = 'input window, operand 1, single buffered']
    #allocation6 [shape = 's32[2]{0}', space=sflag, size = 0x8, scoped, tag = 'scoped memory for tpu_custom_call.1']
    #allocation7 [shape = 's32[2]{0}', space=sflag, size = 0x8, scoped, tag = 'scoped memory for tpu_custom_call.1']
    #allocation8 [shape = 'u8[16384]{0}', space=vmem, size = 0x4000, scoped, tag = 'input window, operand 3, single buffered']
    #allocation9 [shape = 's32[1]{0}', space=sflag, size = 0x4, scoped, tag = 'scoped memory for tpu_custom_call.1']
    #allocation10 [shape = 'u8[65536]{0}', space=vmem, size = 0x10000, scoped, tag = 'input window, operand 4, single buffered']
    #allocation11 [shape = 'u8[262144]{0}', space=vmem, size = 0x40000, scoped, tag = 'input window, operand 5, single buffered']
    #allocation12 [shape = 's32[1]{0}', space=sflag, size = 0x4, scoped, tag = 'scoped memory for tpu_custom_call.1']
    #allocation13 [shape = 'u8[262144]{0}', space=vmem, size = 0x40000, scoped, tag = 'input window, operand 6, single buffered']
    #allocation14 [shape = 'u8[65536]{0}', space=vmem, size = 0x10000, scoped, tag = 'input window, operand 7, single buffered']
    #allocation15 [shape = 's32[1]{0}', space=sflag, size = 0x4, scoped, tag = 'scoped memory for tpu_custom_call.1']
    #allocation16 [shape = 'u8[512]{0}', space=vmem, size = 0x400, scoped, tag = 'input window, operand 9, single buffered']
    #allocation17 [shape = 'u8[512]{0}', space=vmem, size = 0x400, scoped, tag = 'input window, operand 10, single buffered']
    #allocation18 [shape = 's32[1]{0}', space=sflag, size = 0x4, scoped, tag = 'scoped memory for tpu_custom_call.1']
    #allocation19 [shape = 'u8[1024]{0}', space=vmem, size = 0x400, scoped, tag = 'input window, operand 11, single buffered']
    #allocation20 [shape = 'u8[2048]{0}', space=vmem, size = 0x800, scoped, tag = 'input window, operand 12, single buffered']
    #allocation21 [shape = 's32[1]{0}', space=sflag, size = 0x4, scoped, tag = 'scoped memory for tpu_custom_call.1']
    #allocation22 [shape = 'u8[1024]{0}', space=vmem, size = 0x400, scoped, tag = 'input window, operand 13, single buffered']
    #allocation23 [shape = 'u8[512]{0}', space=vmem, size = 0x400, scoped, tag = 'input window, operand 14, single buffered']
    #allocation24 [shape = 's32[1]{0}', space=sflag, size = 0x4, scoped, tag = 'scoped memory for tpu_custom_call.1']
    #allocation25 [shape = 'u8[512]{0}', space=vmem, size = 0x400, scoped, tag = 'input window, operand 15, single buffered']
    #allocation26 [shape = 'u8[524288]{0}', space=vmem, size = 0x80000, scoped, tag = 'input window, operand 16']
    #allocation27 [shape = 's32[2]{0}', space=sflag, size = 0x8, scoped, tag = 'scoped memory for tpu_custom_call.1']
    #allocation28 [shape = 'u8[16384]{0}', space=vmem, size = 0x4000, scoped, tag = 'input window, operand 17']
    #allocation29 [shape = 'u8[131072]{0}', space=vmem, size = 0x20000, scoped, tag = 'output window, operand 0']
    %27 = vsyncpa [#allocation6], 0
    %28 = vsyncpa [#allocation9], 0
    %29 = vsyncpa [#allocation12], 0
    %30 = vsyncpa [#allocation15], 0
    %31 = vsyncpa [#allocation18], 0
    %32 = vsyncpa [#allocation21], 0
    %33 = vsyncpa [#allocation24], 0
    %34 = vsyncpa [#allocation27], 0
    %s35 = scalar_lea.sflag [#allocation27], 1
    %36 = vsyncpa %s35, 0
    %37 = vsyncpa [#allocation7], 0
    %s38 = scalar_lea.sflag [#allocation7], 1
    %39 = vsyncpa %s38, 0
    loop: start=0, step=1, limit=7
    $region2: #{tpu_custom_call.1} parent=1 // loop_pre_header
      _
    $region3: #{tpu_custom_call.1} parent=1 // loop_header
      %s41 = sphi 0, %s45
      %p42 = scmp.ge.s32.totalorder %s41, 7
      %s49 = sphi 0, %s49
      %s51 = sphi 0, %s49
      %s52 = sphi 0, %s51
      %s66 = sphi 0, %s52
      %s70 = sphi 0, %s70
      %s72 = sphi 0, %s70
      %s73 = sphi 0, %s72
      %s87 = sphi 0, %s73
      %s91 = sphi 0, %s91
      %s93 = sphi 0, %s91
      %s94 = sphi 0, %s93
      %s108 = sphi 0, %s94
      %s112 = sphi 0, %s112
      %s114 = sphi 0, %s112
      %s115 = sphi 0, %s114
      %s129 = sphi 0, %s115
      %s133 = sphi 0, %s133
      %s135 = sphi 0, %s133
      %s136 = sphi 0, %s135
      %s150 = sphi 0, %s136
      %s154 = sphi 0, %s154
      %s156 = sphi 0, %s154
      %s157 = sphi 0, %s156
      %s171 = sphi 0, %s157
      %s175 = sphi 0, %s175
      %s177 = sphi 0, %s175
      %s178 = sphi 0, %s177
      %s192 = sphi 0, %s178
      %s196 = sphi 0, %s196
      %s198 = sphi 0, %s196
      %s199 = sphi 0, %s198
      %s213 = sphi 0, %s199
      %s217 = sphi 0, %s217
      %s219 = sphi 0, %s217
      %s220 = sphi 0, %s219
      %s234 = sphi 0, %s220
      %s238 = sphi 0, %s238
      %s240 = sphi 0, %s238
      %s241 = sphi 0, %s240
      %s255 = sphi 0, %s241
      %s259 = sphi 0, %s259
      %s261 = sphi 0, %s259
      %s262 = sphi 0, %s261
      %s276 = sphi 0, %s262
      %s280 = sphi 0, %s280
      %s282 = sphi 0, %s280
      %s283 = sphi 0, %s282
      %s297 = sphi 0, %s283
      %s301 = sphi 0, %s301
      %s303 = sphi 0, %s301
      %s304 = sphi 0, %s303
      %s318 = sphi 0, %s304
      %s322 = sphi 0, %s322
      %s324 = sphi 0, %s322
      %s325 = sphi 0, %s324
      %s339 = sphi 0, %s325
      %s343 = sphi 0, %s343
      %s345 = sphi 0, %s343
      %s346 = sphi 0, %s345
      %s360 = sphi 0, %s346
      %s366 = sphi 0, %s368
      %s369 = sphi 0, %s366
      %s370 = sphi 0, %s369
      %s386 = sphi 0, %s370
      %s392 = sphi 0, %s394
      %s395 = sphi 0, %s392
      %s396 = sphi 0, %s395
      %s412 = sphi 0, %s396
      %s418 = sphi 0, %s420
      %s421 = sphi 0, %s418
      %s422 = sphi 0, %s421
      %s438 = sphi 0, %s422
    $region4: #{tpu_custom_call.1} parent=1 // loop_header_branch
      %44 = sbr.rel (%p42) target = $region8
    $region5: #{tpu_custom_call.1} parent=1 // loop_body
      %s46 = ssub.s32 %s41, 1
      %s47 = ssub.s32 %s41, 2
      %s48 = sadd.s32 %s41, 1
      %s50 = sadd.s32 %s49, 1
      %p53 = scmp.eq.s32.totalorder %s41, 4
      %p54 = scmp.ne.s32.totalorder %s49, %s51
      %p55 = scmp.eq.s32.totalorder %s41, 0
      %p56 = por %p54, %p55
      %p57 = scmp.ne.s32.totalorder %s49, %s51
      %p58 = scmp.eq.s32.totalorder %s46, 4
      %p59 = por %p57, %p58
      %p60 = scmp.ne.s32.totalorder %s51, %s52
      %p61 = scmp.eq.s32.totalorder %s46, 0
      %p62 = por %p60, %p61
      %p63 = scmp.ne.s32.totalorder %s51, %s52
      %p64 = scmp.eq.s32.totalorder %s47, 4
      %p65 = por %p63, %p64
      %p67 = scmp.ne.s32.totalorder %s52, %s66
      %p68 = scmp.eq.s32.totalorder %s47, 0
      %p69 = por %p67, %p68
      %s71 = sadd.s32 %s70, 1
      %p74 = scmp.eq.s32.totalorder %s41, 4
      %p75 = scmp.ne.s32.totalorder %s70, %s72
      %p76 = scmp.eq.s32.totalorder %s41, 0
      %p77 = por %p75, %p76
      %p78 = scmp.ne.s32.totalorder %s70, %s72
      %p79 = scmp.eq.s32.totalorder %s46, 4
      %p80 = por %p78, %p79
      %p81 = scmp.ne.s32.totalorder %s72, %s73
      %p82 = scmp.eq.s32.totalorder %s46, 0
      %p83 = por %p81, %p82
      %p84 = scmp.ne.s32.totalorder %s72, %s73
      %p85 = scmp.eq.s32.totalorder %s47, 4
      %p86 = por %p84, %p85
      %p88 = scmp.ne.s32.totalorder %s73, %s87
      %p89 = scmp.eq.s32.totalorder %s47, 0
      %p90 = por %p88, %p89
      %s92 = sadd.s32 %s91, 1
      %p95 = scmp.eq.s32.totalorder %s41, 4
      %p96 = scmp.ne.s32.totalorder %s91, %s93
      %p97 = scmp.eq.s32.totalorder %s41, 0
      %p98 = por %p96, %p97
      %p99 = scmp.ne.s32.totalorder %s91, %s93
      %p100 = scmp.eq.s32.totalorder %s46, 4
      %p101 = por %p99, %p100
      %p102 = scmp.ne.s32.totalorder %s93, %s94
      %p103 = scmp.eq.s32.totalorder %s46, 0
      %p104 = por %p102, %p103
      %p105 = scmp.ne.s32.totalorder %s93, %s94
      %p106 = scmp.eq.s32.totalorder %s47, 4
      %p107 = por %p105, %p106
      %p109 = scmp.ne.s32.totalorder %s94, %s108
      %p110 = scmp.eq.s32.totalorder %s47, 0
      %p111 = por %p109, %p110
      %s113 = sadd.s32 %s112, 1
      %p116 = scmp.eq.s32.totalorder %s41, 4
      %p117 = scmp.ne.s32.totalorder %s112, %s114
      %p118 = scmp.eq.s32.totalorder %s41, 0
      %p119 = por %p117, %p118
      %p120 = scmp.ne.s32.totalorder %s112, %s114
      %p121 = scmp.eq.s32.totalorder %s46, 4
      %p122 = por %p120, %p121
      %p123 = scmp.ne.s32.totalorder %s114, %s115
      %p124 = scmp.eq.s32.totalorder %s46, 0
      %p125 = por %p123, %p124
      %p126 = scmp.ne.s32.totalorder %s114, %s115
      %p127 = scmp.eq.s32.totalorder %s47, 4
      %p128 = por %p126, %p127
      %p130 = scmp.ne.s32.totalorder %s115, %s129
      %p131 = scmp.eq.s32.totalorder %s47, 0
      %p132 = por %p130, %p131
      %s134 = sadd.s32 %s133, 1
      %p137 = scmp.eq.s32.totalorder %s41, 4
      %p138 = scmp.ne.s32.totalorder %s133, %s135
      %p139 = scmp.eq.s32.totalorder %s41, 0
      %p140 = por %p138, %p139
      %p141 = scmp.ne.s32.totalorder %s133, %s135
      %p142 = scmp.eq.s32.totalorder %s46, 4
      %p143 = por %p141, %p142
      %p144 = scmp.ne.s32.totalorder %s135, %s136
      %p145 = scmp.eq.s32.totalorder %s46, 0
      %p146 = por %p144, %p145
      %p147 = scmp.ne.s32.totalorder %s135, %s136
      %p148 = scmp.eq.s32.totalorder %s47, 4
      %p149 = por %p147, %p148
      %p151 = scmp.ne.s32.totalorder %s136, %s150
      %p152 = scmp.eq.s32.totalorder %s47, 0
      %p153 = por %p151, %p152
      %s155 = sadd.s32 %s154, 1
      %p158 = scmp.eq.s32.totalorder %s41, 4
      %p159 = scmp.ne.s32.totalorder %s154, %s156
      %p160 = scmp.eq.s32.totalorder %s41, 0
      %p161 = por %p159, %p160
      %p162 = scmp.ne.s32.totalorder %s154, %s156
      %p163 = scmp.eq.s32.totalorder %s46, 4
      %p164 = por %p162, %p163
      %p165 = scmp.ne.s32.totalorder %s156, %s157
      %p166 = scmp.eq.s32.totalorder %s46, 0
      %p167 = por %p165, %p166
      %p168 = scmp.ne.s32.totalorder %s156, %s157
      %p169 = scmp.eq.s32.totalorder %s47, 4
      %p170 = por %p168, %p169
      %p172 = scmp.ne.s32.totalorder %s157, %s171
      %p173 = scmp.eq.s32.totalorder %s47, 0
      %p174 = por %p172, %p173
      %s176 = sadd.s32 %s175, 1
      %p179 = scmp.eq.s32.totalorder %s41, 4
      %p180 = scmp.ne.s32.totalorder %s175, %s177
      %p181 = scmp.eq.s32.totalorder %s41, 0
      %p182 = por %p180, %p181
      %p183 = scmp.ne.s32.totalorder %s175, %s177
      %p184 = scmp.eq.s32.totalorder %s46, 4
      %p185 = por %p183, %p184
      %p186 = scmp.ne.s32.totalorder %s177, %s178
      %p187 = scmp.eq.s32.totalorder %s46, 0
      %p188 = por %p186, %p187
      %p189 = scmp.ne.s32.totalorder %s177, %s178
      %p190 = scmp.eq.s32.totalorder %s47, 4
      %p191 = por %p189, %p190
      %p193 = scmp.ne.s32.totalorder %s178, %s192
      %p194 = scmp.eq.s32.totalorder %s47, 0
      %p195 = por %p193, %p194
      %s197 = sadd.s32 %s196, 1
      %p200 = scmp.eq.s32.totalorder %s41, 4
      %p201 = scmp.ne.s32.totalorder %s196, %s198
      %p202 = scmp.eq.s32.totalorder %s41, 0
      %p203 = por %p201, %p202
      %p204 = scmp.ne.s32.totalorder %s196, %s198
      %p205 = scmp.eq.s32.totalorder %s46, 4
      %p206 = por %p204, %p205
      %p207 = scmp.ne.s32.totalorder %s198, %s199
      %p208 = scmp.eq.s32.totalorder %s46, 0
      %p209 = por %p207, %p208
      %p210 = scmp.ne.s32.totalorder %s198, %s199
      %p211 = scmp.eq.s32.totalorder %s47, 4
      %p212 = por %p210, %p211
      %p214 = scmp.ne.s32.totalorder %s199, %s213
      %p215 = scmp.eq.s32.totalorder %s47, 0
      %p216 = por %p214, %p215
      %s218 = sadd.s32 %s217, 1
      %p221 = scmp.eq.s32.totalorder %s41, 4
      %p222 = scmp.ne.s32.totalorder %s217, %s219
      %p223 = scmp.eq.s32.totalorder %s41, 0
      %p224 = por %p222, %p223
      %p225 = scmp.ne.s32.totalorder %s217, %s219
      %p226 = scmp.eq.s32.totalorder %s46, 4
      %p227 = por %p225, %p226
      %p228 = scmp.ne.s32.totalorder %s219, %s220
      %p229 = scmp.eq.s32.totalorder %s46, 0
      %p230 = por %p228, %p229
      %p231 = scmp.ne.s32.totalorder %s219, %s220
      %p232 = scmp.eq.s32.totalorder %s47, 4
      %p233 = por %p231, %p232
      %p235 = scmp.ne.s32.totalorder %s220, %s234
      %p236 = scmp.eq.s32.totalorder %s47, 0
      %p237 = por %p235, %p236
      %s239 = sadd.s32 %s238, 1
      %p242 = scmp.eq.s32.totalorder %s41, 4
      %p243 = scmp.ne.s32.totalorder %s238, %s240
      %p244 = scmp.eq.s32.totalorder %s41, 0
      %p245 = por %p243, %p244
      %p246 = scmp.ne.s32.totalorder %s238, %s240
      %p247 = scmp.eq.s32.totalorder %s46, 4
      %p248 = por %p246, %p247
      %p249 = scmp.ne.s32.totalorder %s240, %s241
      %p250 = scmp.eq.s32.totalorder %s46, 0
      %p251 = por %p249, %p250
      %p252 = scmp.ne.s32.totalorder %s240, %s241
      %p253 = scmp.eq.s32.totalorder %s47, 4
      %p254 = por %p252, %p253
      %p256 = scmp.ne.s32.totalorder %s241, %s255
      %p257 = scmp.eq.s32.totalorder %s47, 0
      %p258 = por %p256, %p257
      %s260 = sadd.s32 %s259, 1
      %p263 = scmp.eq.s32.totalorder %s41, 4
      %p264 = scmp.ne.s32.totalorder %s259, %s261
      %p265 = scmp.eq.s32.totalorder %s41, 0
      %p266 = por %p264, %p265
      %p267 = scmp.ne.s32.totalorder %s259, %s261
      %p268 = scmp.eq.s32.totalorder %s46, 4
      %p269 = por %p267, %p268
      %p270 = scmp.ne.s32.totalorder %s261, %s262
      %p271 = scmp.eq.s32.totalorder %s46, 0
      %p272 = por %p270, %p271
      %p273 = scmp.ne.s32.totalorder %s261, %s262
      %p274 = scmp.eq.s32.totalorder %s47, 4
      %p275 = por %p273, %p274
      %p277 = scmp.ne.s32.totalorder %s262, %s276
      %p278 = scmp.eq.s32.totalorder %s47, 0
      %p279 = por %p277, %p278
      %s281 = sadd.s32 %s280, 1
      %p284 = scmp.eq.s32.totalorder %s41, 4
      %p285 = scmp.ne.s32.totalorder %s280, %s282
      %p286 = scmp.eq.s32.totalorder %s41, 0
      %p287 = por %p285, %p286
      %p288 = scmp.ne.s32.totalorder %s280, %s282
      %p289 = scmp.eq.s32.totalorder %s46, 4
      %p290 = por %p288, %p289
      %p291 = scmp.ne.s32.totalorder %s282, %s283
      %p292 = scmp.eq.s32.totalorder %s46, 0
      %p293 = por %p291, %p292
      %p294 = scmp.ne.s32.totalorder %s282, %s283
      %p295 = scmp.eq.s32.totalorder %s47, 4
      %p296 = por %p294, %p295
      %p298 = scmp.ne.s32.totalorder %s283, %s297
      %p299 = scmp.eq.s32.totalorder %s47, 0
      %p300 = por %p298, %p299
      %s302 = sadd.s32 %s301, 1
      %p305 = scmp.eq.s32.totalorder %s41, 4
      %p306 = scmp.ne.s32.totalorder %s301, %s303
      %p307 = scmp.eq.s32.totalorder %s41, 0
      %p308 = por %p306, %p307
      %p309 = scmp.ne.s32.totalorder %s301, %s303
      %p310 = scmp.eq.s32.totalorder %s46, 4
      %p311 = por %p309, %p310
      %p312 = scmp.ne.s32.totalorder %s303, %s304
      %p313 = scmp.eq.s32.totalorder %s46, 0
      %p314 = por %p312, %p313
      %p315 = scmp.ne.s32.totalorder %s303, %s304
      %p316 = scmp.eq.s32.totalorder %s47, 4
      %p317 = por %p315, %p316
      %p319 = scmp.ne.s32.totalorder %s304, %s318
      %p320 = scmp.eq.s32.totalorder %s47, 0
      %p321 = por %p319, %p320
      %s323 = sadd.s32 %s322, 1
      %p326 = scmp.eq.s32.totalorder %s41, 4
      %p327 = scmp.ne.s32.totalorder %s322, %s324
      %p328 = scmp.eq.s32.totalorder %s41, 0
      %p329 = por %p327, %p328
      %p330 = scmp.ne.s32.totalorder %s322, %s324
      %p331 = scmp.eq.s32.totalorder %s46, 4
      %p332 = por %p330, %p331
      %p333 = scmp.ne.s32.totalorder %s324, %s325
      %p334 = scmp.eq.s32.totalorder %s46, 0
      %p335 = por %p333, %p334
      %p336 = scmp.ne.s32.totalorder %s324, %s325
      %p337 = scmp.eq.s32.totalorder %s47, 4
      %p338 = por %p336, %p337
      %p340 = scmp.ne.s32.totalorder %s325, %s339
      %p341 = scmp.eq.s32.totalorder %s47, 0
      %p342 = por %p340, %p341
      %s344 = sadd.s32 %s343, 1
      %p347 = scmp.eq.s32.totalorder %s41, 4
      %p348 = scmp.ne.s32.totalorder %s343, %s345
      %p349 = scmp.eq.s32.totalorder %s41, 0
      %p350 = por %p348, %p349
      %p351 = scmp.ne.s32.totalorder %s343, %s345
      %p352 = scmp.eq.s32.totalorder %s46, 4
      %p353 = por %p351, %p352
      %p354 = scmp.ne.s32.totalorder %s345, %s346
      %p355 = scmp.eq.s32.totalorder %s46, 0
      %p356 = por %p354, %p355
      %p357 = scmp.ne.s32.totalorder %s345, %s346
      %p358 = scmp.eq.s32.totalorder %s47, 4
      %p359 = por %p357, %p358
      %p361 = scmp.ne.s32.totalorder %s346, %s360
      %p362 = scmp.eq.s32.totalorder %s47, 0
      %p363 = por %p361, %p362
      %s364 = ssub.s32 %s41, %s48
      %p365 = scmp.eq.s32.totalorder %s364, 0
      %s367 = sadd.s32 %s366, 1
      %s368 = scalar_select %p365, %s366, %s367
      %p371 = pneg %p365
      %p372 = scmp.eq.s32.totalorder %s41, 4
      %p373 = por %p371, %p372
      %p374 = scmp.ne.s32.totalorder %s366, %s369
      %p375 = scmp.eq.s32.totalorder %s41, 0
      %p376 = por %p374, %p375
      %p377 = scmp.ne.s32.totalorder %s366, %s369
      %p378 = scmp.eq.s32.totalorder %s46, 4
      %p379 = por %p377, %p378
      %p380 = scmp.ne.s32.totalorder %s369, %s370
      %p381 = scmp.eq.s32.totalorder %s46, 0
      %p382 = por %p380, %p381
      %p383 = scmp.ne.s32.totalorder %s369, %s370
      %p384 = scmp.eq.s32.totalorder %s47, 4
      %p385 = por %p383, %p384
      %p387 = scmp.ne.s32.totalorder %s370, %s386
      %p388 = scmp.eq.s32.totalorder %s47, 0
      %p389 = por %p387, %p388
      %s390 = ssub.s32 %s41, %s48
      %p391 = scmp.eq.s32.totalorder %s390, 0
      %s393 = sadd.s32 %s392, 1
      %s394 = scalar_select %p391, %s392, %s393
      %p397 = pneg %p391
      %p398 = scmp.eq.s32.totalorder %s41, 4
      %p399 = por %p397, %p398
      %p400 = scmp.ne.s32.totalorder %s392, %s395
      %p401 = scmp.eq.s32.totalorder %s41, 0
      %p402 = por %p400, %p401
      %p403 = scmp.ne.s32.totalorder %s392, %s395
      %p404 = scmp.eq.s32.totalorder %s46, 4
      %p405 = por %p403, %p404
      %p406 = scmp.ne.s32.totalorder %s395, %s396
      %p407 = scmp.eq.s32.totalorder %s46, 0
      %p408 = por %p406, %p407
      %p409 = scmp.ne.s32.totalorder %s395, %s396
      %p410 = scmp.eq.s32.totalorder %s47, 4
      %p411 = por %p409, %p410
      %p413 = scmp.ne.s32.totalorder %s396, %s412
      %p414 = scmp.eq.s32.totalorder %s47, 0
      %p415 = por %p413, %p414
      %s416 = ssub.s32 %s41, %s48
      %p417 = scmp.eq.s32.totalorder %s416, 0
      %s419 = sadd.s32 %s418, 1
      %s420 = scalar_select %p417, %s418, %s419
      %p423 = pneg %p417
      %p424 = scmp.eq.s32.totalorder %s41, 4
      %p425 = por %p423, %p424
      %p426 = scmp.ne.s32.totalorder %s418, %s421
      %p427 = scmp.eq.s32.totalorder %s41, 0
      %p428 = por %p426, %p427
      %p429 = scmp.ne.s32.totalorder %s418, %s421
      %p430 = scmp.eq.s32.totalorder %s46, 4
      %p431 = por %p429, %p430
      %p432 = scmp.ne.s32.totalorder %s421, %s422
      %p433 = scmp.eq.s32.totalorder %s46, 0
      %p434 = por %p432, %p433
      %p435 = scmp.ne.s32.totalorder %s421, %s422
      %p436 = scmp.eq.s32.totalorder %s47, 4
      %p437 = por %p435, %p436
      %p439 = scmp.ne.s32.totalorder %s422, %s438
      %p440 = scmp.eq.s32.totalorder %s47, 0
      %p441 = por %p439, %p440
      %p442 = scmp.le.s32.totalorder 1, %s41
      %p443 = scmp.lt.s32.totalorder %s41, 6
      %p444 = pnand %p442, %p443
      %p445 = pneg %p444
      // Predicated region
      $region9: #{tpu_custom_call.1} parent=5 // pred_check
        _
      $region10: #{tpu_custom_call.1} parent=5 // pred_check_branch
        %447 = sbr.rel (%p444) target = $region12
      $region11: #{tpu_custom_call.1} parent=5 // pred_region
        %s448 = ssub.s32 %s41, 1
        // Predicated region
        $region13: #{tpu_custom_call.1} parent=11 // pred_check
          %p449 = pneg %p62
        $region14: #{tpu_custom_call.1} parent=11 // pred_check_branch
          %451 = sbr.rel (%p449) target = $region16
        $region15: #{tpu_custom_call.1} parent=11 // pred_region
          %s453 = ssub.s32 128, 128
          %454 = vsyncadd [#allocation6], %s453
          %s456 = sshll.u32 [#allocation5], 4
          %s457 = int_to_ptr.vmem [resolvable:$true] %s456
          %459 = dma.hbm_to_vmem [thread:$0]  %s1, 128, %s457, [#allocation6]
        $region16: #{tpu_custom_call.1} parent=11 // pred_fallthru
          _
        // Predicated region
        $region17: #{tpu_custom_call.1} parent=11 // pred_check
          %p460 = pneg %p83
        $region18: #{tpu_custom_call.1} parent=11 // pred_check_branch
          %462 = sbr.rel (%p460) target = $region20
        $region19: #{tpu_custom_call.1} parent=11 // pred_region
          _
        $region20: #{tpu_custom_call.1} parent=11 // pred_fallthru
          _
        // Predicated region
        $region21: #{tpu_custom_call.1} parent=11 // pred_check
          %p463 = pneg %p104
        $region22: #{tpu_custom_call.1} parent=11 // pred_check_branch
          %465 = sbr.rel (%p463) target = $region24
        $region23: #{tpu_custom_call.1} parent=11 // pred_region
          %s467 = ssub.s32 512, 512
          %468 = vsyncadd [#allocation9], %s467
          %s469 = sshll.u32 [#allocation8], 4
          %s470 = int_to_ptr.vmem [resolvable:$true] %s469
          %475 = dma.hbm_to_vmem [thread:$0]  %s3, 512, %s470, [#allocation9], 64, 64, 4
        $region24: #{tpu_custom_call.1} parent=11 // pred_fallthru
          _
        // Predicated region
        $region25: #{tpu_custom_call.1} parent=11 // pred_check
          %p476 = pneg %p125
        $region26: #{tpu_custom_call.1} parent=11 // pred_check_branch
          %478 = sbr.rel (%p476) target = $region28
        $region27: #{tpu_custom_call.1} parent=11 // pred_region
          %s480 = ssub.s32 2048, 2048
          %481 = vsyncadd [#allocation9], %s480
          %s482 = sshll.u32 [#allocation10], 4
          %s483 = int_to_ptr.vmem [resolvable:$true] %s482
          %488 = dma.hbm_to_vmem [thread:$0]  %s4, 2048, %s483, [#allocation9], 128, 128, 8
        $region28: #{tpu_custom_call.1} parent=11 // pred_fallthru
          _
        // Predicated region
        $region29: #{tpu_custom_call.1} parent=11 // pred_check
          %p489 = pneg %p146
        $region30: #{tpu_custom_call.1} parent=11 // pred_check_branch
          %491 = sbr.rel (%p489) target = $region32
        $region31: #{tpu_custom_call.1} parent=11 // pred_region
          %s493 = ssub.s32 8192, 8192
          %494 = vsyncadd [#allocation12], %s493
          %s495 = sshll.u32 [#allocation11], 4
          %s496 = int_to_ptr.vmem [resolvable:$true] %s495
          %501 = dma.hbm_to_vmem [thread:$0]  %s5, 8192, %s496, [#allocation12], 256, 256, 16
        $region32: #{tpu_custom_call.1} parent=11 // pred_fallthru
          _
        // Predicated region
        $region33: #{tpu_custom_call.1} parent=11 // pred_check
          %p502 = pneg %p167
        $region34: #{tpu_custom_call.1} parent=11 // pred_check_branch
          %504 = sbr.rel (%p502) target = $region36
        $region35: #{tpu_custom_call.1} parent=11 // pred_region
          %s506 = ssub.s32 8192, 8192
          %507 = vsyncadd [#allocation12], %s506
          %s508 = sshll.u32 [#allocation13], 4
          %s509 = int_to_ptr.vmem [resolvable:$true] %s508
          %514 = dma.hbm_to_vmem [thread:$0]  %s6, 8192, %s509, [#allocation12], 128, 128, 8
        $region36: #{tpu_custom_call.1} parent=11 // pred_fallthru
          _
        // Predicated region
        $region37: #{tpu_custom_call.1} parent=11 // pred_check
          %p515 = pneg %p188
        $region38: #{tpu_custom_call.1} parent=11 // pred_check_branch
          %517 = sbr.rel (%p515) target = $region40
        $region39: #{tpu_custom_call.1} parent=11 // pred_region
          %s519 = ssub.s32 2048, 2048
          %520 = vsyncadd [#allocation15], %s519
          %s521 = sshll.u32 [#allocation14], 4
          %s522 = int_to_ptr.vmem [resolvable:$true] %s521
          %527 = dma.hbm_to_vmem [thread:$0]  %s7, 2048, %s522, [#allocation15], 64, 64, 4
        $region40: #{tpu_custom_call.1} parent=11 // pred_fallthru
          _
        // Predicated region
        $region41: #{tpu_custom_call.1} parent=11 // pred_check
          %p528 = pneg %p209
        $region42: #{tpu_custom_call.1} parent=11 // pred_check_branch
          %530 = sbr.rel (%p528) target = $region44
        $region43: #{tpu_custom_call.1} parent=11 // pred_region
          _
        $region44: #{tpu_custom_call.1} parent=11 // pred_fallthru
          _
        // Predicated region
        $region45: #{tpu_custom_call.1} parent=11 // pred_check
          %p531 = pneg %p230
        $region46: #{tpu_custom_call.1} parent=11 // pred_check_branch
          %533 = sbr.rel (%p531) target = $region48
        $region47: #{tpu_custom_call.1} parent=11 // pred_region
          %s535 = ssub.s32 16, 16
          %536 = vsyncadd [#allocation15], %s535
          %s538 = sshll.u32 [#allocation16], 4
          %s539 = int_to_ptr.vmem [resolvable:$true] %s538
          %541 = dma.hbm_to_vmem [thread:$0]  %s9, 16, %s539, [#allocation15]
        $region48: #{tpu_custom_call.1} parent=11 // pred_fallthru
          _
        // Predicated region
        $region49: #{tpu_custom_call.1} parent=11 // pred_check
          %p542 = pneg %p251
        $region50: #{tpu_custom_call.1} parent=11 // pred_check_branch
          %544 = sbr.rel (%p542) target = $region52
        $region51: #{tpu_custom_call.1} parent=11 // pred_region
          %s546 = ssub.s32 16, 16
          %547 = vsyncadd [#allocation18], %s546
          %s549 = sshll.u32 [#allocation17], 4
          %s550 = int_to_ptr.vmem [resolvable:$true] %s549
          %552 = dma.hbm_to_vmem [thread:$0]  %s10, 16, %s550, [#allocation18]
        $region52: #{tpu_custom_call.1} parent=11 // pred_fallthru
          _
        // Predicated region
        $region53: #{tpu_custom_call.1} parent=11 // pred_check
          %p553 = pneg %p272
        $region54: #{tpu_custom_call.1} parent=11 // pred_check_branch
          %555 = sbr.rel (%p553) target = $region56
        $region55: #{tpu_custom_call.1} parent=11 // pred_region
          %s557 = ssub.s32 32, 32
          %558 = vsyncadd [#allocation18], %s557
          %s560 = sshll.u32 [#allocation19], 4
          %s561 = int_to_ptr.vmem [resolvable:$true] %s560
          %563 = dma.hbm_to_vmem [thread:$0]  %s11, 32, %s561, [#allocation18]
        $region56: #{tpu_custom_call.1} parent=11 // pred_fallthru
          _
        // Predicated region
        $region57: #{tpu_custom_call.1} parent=11 // pred_check
          %p564 = pneg %p293
        $region58: #{tpu_custom_call.1} parent=11 // pred_check_branch
          %566 = sbr.rel (%p564) target = $region60
        $region59: #{tpu_custom_call.1} parent=11 // pred_region
          %s568 = ssub.s32 64, 64
          %569 = vsyncadd [#allocation21], %s568
          %s571 = sshll.u32 [#allocation20], 4
          %s572 = int_to_ptr.vmem [resolvable:$true] %s571
          %574 = dma.hbm_to_vmem [thread:$0]  %s12, 64, %s572, [#allocation21]
        $region60: #{tpu_custom_call.1} parent=11 // pred_fallthru
          _
        // Predicated region
        $region61: #{tpu_custom_call.1} parent=11 // pred_check
          %p575 = pneg %p314
        $region62: #{tpu_custom_call.1} parent=11 // pred_check_branch
          %577 = sbr.rel (%p575) target = $region64
        $region63: #{tpu_custom_call.1} parent=11 // pred_region
          %s579 = ssub.s32 32, 32
          %580 = vsyncadd [#allocation21], %s579
          %s582 = sshll.u32 [#allocation22], 4
          %s583 = int_to_ptr.vmem [resolvable:$true] %s582
          %585 = dma.hbm_to_vmem [thread:$0]  %s13, 32, %s583, [#allocation21]
        $region64: #{tpu_custom_call.1} parent=11 // pred_fallthru
          _
        // Predicated region
        $region65: #{tpu_custom_call.1} parent=11 // pred_check
          %p586 = pneg %p335
        $region66: #{tpu_custom_call.1} parent=11 // pred_check_branch
          %588 = sbr.rel (%p586) target = $region68
        $region67: #{tpu_custom_call.1} parent=11 // pred_region
          %s590 = ssub.s32 16, 16
          %591 = vsyncadd [#allocation24], %s590
          %s593 = sshll.u32 [#allocation23], 4
          %s594 = int_to_ptr.vmem [resolvable:$true] %s593
          %596 = dma.hbm_to_vmem [thread:$0]  %s14, 16, %s594, [#allocation24]
        $region68: #{tpu_custom_call.1} parent=11 // pred_fallthru
          _
        // Predicated region
        $region69: #{tpu_custom_call.1} parent=11 // pred_check
          %p597 = pneg %p356
        $region70: #{tpu_custom_call.1} parent=11 // pred_check_branch
          %599 = sbr.rel (%p597) target = $region72
        $region71: #{tpu_custom_call.1} parent=11 // pred_region
          %s601 = ssub.s32 16, 16
          %602 = vsyncadd [#allocation24], %s601
          %s604 = sshll.u32 [#allocation25], 4
          %s605 = int_to_ptr.vmem [resolvable:$true] %s604
          %607 = dma.hbm_to_vmem [thread:$0]  %s15, 16, %s605, [#allocation24]
        $region72: #{tpu_custom_call.1} parent=11 // pred_fallthru
          _
      $region12: #{tpu_custom_call.1} parent=5 // pred_fallthru
        _
      %p608 = scmp.lt.s32.totalorder %s41, 5
      // Predicated region
      $region73: #{tpu_custom_call.1} parent=5 // pred_check
        %p609 = pneg %p608
      $region74: #{tpu_custom_call.1} parent=5 // pred_check_branch
        %611 = sbr.rel (%p609) target = $region76
      $region75: #{tpu_custom_call.1} parent=5 // pred_region
        // Predicated region
        $region77: #{tpu_custom_call.1} parent=75 // pred_check
          %p612 = pneg %p376
        $region78: #{tpu_custom_call.1} parent=75 // pred_check_branch
          %614 = sbr.rel (%p612) target = $region80
        $region79: #{tpu_custom_call.1} parent=75 // pred_region
          %s615 = sand.u32 %s41, 1
          %s616 = scalar_lea.sflag [#allocation27], %s615
          %s617 = sand.u32 %s366, 1
          %s618 = smul.addr %s617, 512
          %s619 = scalar_lea.vmem [#allocation26], %s618
          %s620 = smul.u32 16, %s41
          %s622 = ssub.s32 8192, 8192
          %623 = vsyncadd %s616, %s622
          %s624 = smul.addr %s620, 64
          %s625 = scalar_lea.hbm %s16, %s624
          %s626 = sshll.u32 %s619, 4
          %s627 = int_to_ptr.vmem [resolvable:$true] %s626
          %632 = dma.hbm_to_vmem [thread:$0]  %s625, 8192, %s627, %s616, 5120, 1024, 64
        $region80: #{tpu_custom_call.1} parent=75 // pred_fallthru
          _
        // Predicated region
        $region81: #{tpu_custom_call.1} parent=75 // pred_check
          %p633 = pneg %p402
        $region82: #{tpu_custom_call.1} parent=75 // pred_check_branch
          %635 = sbr.rel (%p633) target = $region84
        $region83: #{tpu_custom_call.1} parent=75 // pred_region
          %s636 = sand.u32 %s41, 1
          %s637 = scalar_lea.sflag [#allocation27], %s636
          %s638 = sand.u32 %s392, 1
          %s639 = smul.addr %s638, 16
          %s640 = scalar_lea.vmem [#allocation28], %s639
          %s641 = smul.u32 16, %s41
          %s643 = ssub.s32 256, 256
          %644 = vsyncadd %s637, %s643
          %s645 = smul.addr %s641, 16
          %s646 = scalar_lea.hbm %s17, %s645
          %s648 = sshll.u32 %s640, 4
          %s649 = int_to_ptr.vmem [resolvable:$true] %s648
          %651 = dma.hbm_to_vmem [thread:$0]  %s646, 256, %s649, %s637
        $region84: #{tpu_custom_call.1} parent=75 // pred_fallthru
          _
      $region76: #{tpu_custom_call.1} parent=5 // pred_fallthru
        _
      %p652 = scmp.le.s32.totalorder 1, %s41
      %p653 = scmp.lt.s32.totalorder %s41, 6
      %p654 = pnand %p652, %p653
      %p655 = pneg %p654
      // Predicated region
      $region85: #{tpu_custom_call.1} parent=5 // pred_check
        _
      $region86: #{tpu_custom_call.1} parent=5 // pred_check_branch
        %657 = sbr.rel (%p654) target = $region88
      $region87: #{tpu_custom_call.1} parent=5 // pred_region
        %s658 = ssub.s32 %s41, 1
        // Predicated region
        $region89: #{tpu_custom_call.1} parent=87 // pred_check
          %p659 = pneg %p62
        $region90: #{tpu_custom_call.1} parent=87 // pred_check_branch
          %661 = sbr.rel (%p659) target = $region92
        $region91: #{tpu_custom_call.1} parent=87 // pred_region
          %662 = dma.done [#allocation6], 128
        $region92: #{tpu_custom_call.1} parent=87 // pred_fallthru
          _
        // Predicated region
        $region93: #{tpu_custom_call.1} parent=87 // pred_check
          %p663 = pneg %p104
        $region94: #{tpu_custom_call.1} parent=87 // pred_check_branch
          %665 = sbr.rel (%p663) target = $region96
        $region95: #{tpu_custom_call.1} parent=87 // pred_region
          %666 = dma.done [#allocation9], 512
        $region96: #{tpu_custom_call.1} parent=87 // pred_fallthru
          _
        // Predicated region
        $region97: #{tpu_custom_call.1} parent=87 // pred_check
          %p667 = pneg %p125
        $region98: #{tpu_custom_call.1} parent=87 // pred_check_branch
          %669 = sbr.rel (%p667) target = $region100
        $region99: #{tpu_custom_call.1} parent=87 // pred_region
          %670 = dma.done [#allocation9], 2048
        $region100: #{tpu_custom_call.1} parent=87 // pred_fallthru
          _
        // Predicated region
        $region101: #{tpu_custom_call.1} parent=87 // pred_check
          %p671 = pneg %p146
        $region102: #{tpu_custom_call.1} parent=87 // pred_check_branch
          %673 = sbr.rel (%p671) target = $region104
        $region103: #{tpu_custom_call.1} parent=87 // pred_region
          %674 = dma.done [#allocation12], 8192
        $region104: #{tpu_custom_call.1} parent=87 // pred_fallthru
          _
        // Predicated region
        $region105: #{tpu_custom_call.1} parent=87 // pred_check
          %p675 = pneg %p167
        $region106: #{tpu_custom_call.1} parent=87 // pred_check_branch
          %677 = sbr.rel (%p675) target = $region108
        $region107: #{tpu_custom_call.1} parent=87 // pred_region
          %678 = dma.done [#allocation12], 8192
        $region108: #{tpu_custom_call.1} parent=87 // pred_fallthru
          _
        // Predicated region
        $region109: #{tpu_custom_call.1} parent=87 // pred_check
          %p679 = pneg %p188
        $region110: #{tpu_custom_call.1} parent=87 // pred_check_branch
          %681 = sbr.rel (%p679) target = $region112
        $region111: #{tpu_custom_call.1} parent=87 // pred_region
          %682 = dma.done [#allocation15], 2048
        $region112: #{tpu_custom_call.1} parent=87 // pred_fallthru
          _
        // Predicated region
        $region113: #{tpu_custom_call.1} parent=87 // pred_check
          %p683 = pneg %p230
        $region114: #{tpu_custom_call.1} parent=87 // pred_check_branch
          %685 = sbr.rel (%p683) target = $region116
        $region115: #{tpu_custom_call.1} parent=87 // pred_region
          %686 = dma.done [#allocation15], 16
        $region116: #{tpu_custom_call.1} parent=87 // pred_fallthru
          _
        // Predicated region
        $region117: #{tpu_custom_call.1} parent=87 // pred_check
          %p687 = pneg %p251
        $region118: #{tpu_custom_call.1} parent=87 // pred_check_branch
          %689 = sbr.rel (%p687) target = $region120
        $region119: #{tpu_custom_call.1} parent=87 // pred_region
          %690 = dma.done [#allocation18], 16
        $region120: #{tpu_custom_call.1} parent=87 // pred_fallthru
          _
        // Predicated region
        $region121: #{tpu_custom_call.1} parent=87 // pred_check
          %p691 = pneg %p272
        $region122: #{tpu_custom_call.1} parent=87 // pred_check_branch
          %693 = sbr.rel (%p691) target = $region124
        $region123: #{tpu_custom_call.1} parent=87 // pred_region
          %694 = dma.done [#allocation18], 32
        $region124: #{tpu_custom_call.1} parent=87 // pred_fallthru
          _
        // Predicated region
        $region125: #{tpu_custom_call.1} parent=87 // pred_check
          %p695 = pneg %p293
        $region126: #{tpu_custom_call.1} parent=87 // pred_check_branch
          %697 = sbr.rel (%p695) target = $region128
        $region127: #{tpu_custom_call.1} parent=87 // pred_region
          %698 = dma.done [#allocation21], 64
        $region128: #{tpu_custom_call.1} parent=87 // pred_fallthru
          _
        // Predicated region
        $region129: #{tpu_custom_call.1} parent=87 // pred_check
          %p699 = pneg %p314
        $region130: #{tpu_custom_call.1} parent=87 // pred_check_branch
          %701 = sbr.rel (%p699) target = $region132
        $region131: #{tpu_custom_call.1} parent=87 // pred_region
          %702 = dma.done [#allocation21], 32
        $region132: #{tpu_custom_call.1} parent=87 // pred_fallthru
          _
        // Predicated region
        $region133: #{tpu_custom_call.1} parent=87 // pred_check
          %p703 = pneg %p335
        $region134: #{tpu_custom_call.1} parent=87 // pred_check_branch
          %705 = sbr.rel (%p703) target = $region136
        $region135: #{tpu_custom_call.1} parent=87 // pred_region
          %706 = dma.done [#allocation24], 16
        $region136: #{tpu_custom_call.1} parent=87 // pred_fallthru
          _
        // Predicated region
        $region137: #{tpu_custom_call.1} parent=87 // pred_check
          %p707 = pneg %p356
        $region138: #{tpu_custom_call.1} parent=87 // pred_check_branch
          %709 = sbr.rel (%p707) target = $region140
        $region139: #{tpu_custom_call.1} parent=87 // pred_region
          %710 = dma.done [#allocation24], 16
        $region140: #{tpu_custom_call.1} parent=87 // pred_fallthru
          _
        %s711 = sand.u32 %s46, 1
        %s712 = scalar_lea.sflag [#allocation27], %s711
        %s713 = sand.u32 %s369, 1
        %s714 = smul.addr %s713, 512
        %s715 = scalar_lea.vmem [#allocation26], %s714
        // Predicated region
        $region141: #{tpu_custom_call.1} parent=87 // pred_check
          %p716 = pneg %p382
        $region142: #{tpu_custom_call.1} parent=87 // pred_check_branch
          %718 = sbr.rel (%p716) target = $region144
        $region143: #{tpu_custom_call.1} parent=87 // pred_region
          %719 = dma.done %s712, 8192
        $region144: #{tpu_custom_call.1} parent=87 // pred_fallthru
          _
        %s720 = sand.u32 %s46, 1
        %s721 = scalar_lea.sflag [#allocation27], %s720
        %s722 = sand.u32 %s395, 1
        %s723 = smul.addr %s722, 16
        %s724 = scalar_lea.vmem [#allocation28], %s723
        // Predicated region
        $region145: #{tpu_custom_call.1} parent=87 // pred_check
          %p725 = pneg %p408
        $region146: #{tpu_custom_call.1} parent=87 // pred_check_branch
          %727 = sbr.rel (%p725) target = $region148
        $region147: #{tpu_custom_call.1} parent=87 // pred_region
          %728 = dma.done %s721, 256
        $region148: #{tpu_custom_call.1} parent=87 // pred_fallthru
          _
        %p729 = pneg %p62
        %p730 = pneg %p59
        %p731 = pneg %p83
        %p732 = pneg %p80
        %p733 = pneg %p104
        %p734 = pneg %p101
        %p735 = pneg %p125
        %p736 = pneg %p122
        %p737 = pneg %p146
        %p738 = pneg %p143
        %p739 = pneg %p167
        %p740 = pneg %p164
        %p741 = pneg %p188
        %p742 = pneg %p185
        %p743 = pneg %p209
        %p744 = pneg %p206
        %p745 = pneg %p230
        %p746 = pneg %p227
        %p747 = pneg %p251
        %p748 = pneg %p248
        %p749 = pneg %p272
        %p750 = pneg %p269
        %p751 = pneg %p293
        %p752 = pneg %p290
        %p753 = pneg %p314
        %p754 = pneg %p311
        %p755 = pneg %p335
        %p756 = pneg %p332
        %p757 = pneg %p356
        %p758 = pneg %p353
        %s759 = sand.u32 %s46, 1
        %s760 = scalar_lea.sflag [#allocation27], %s759
        %s761 = sand.u32 %s369, 1
        %s762 = smul.addr %s761, 512
        %s763 = scalar_lea.vmem [#allocation26], %s762
        %p764 = pneg %p382
        %p765 = pneg %p379
        %s766 = sand.u32 %s46, 1
        %s767 = scalar_lea.sflag [#allocation27], %s766
        %s768 = sand.u32 %s395, 1
        %s769 = smul.addr %s768, 16
        %s770 = scalar_lea.vmem [#allocation28], %s769
        %p771 = pneg %p408
        %p772 = pneg %p405
        %p773 = pneg %p434
        %p774 = pneg %p431
        %s775 = sand.u32 %s421, 1
        %s776 = scalar_lea.sflag [#allocation7], %s775
        %s777 = sand.u32 %s421, 1
        %s778 = smul.addr %s777, 128
        %s779 = scalar_lea.vmem [#allocation29], %s778
        %s780 = smul.u32 16, %s46
        %s781 = smul.u32 16, %s46
        %s782 = smul.u32 16, %s46
        %p784 = scmp.eq.s32.totalorder %s46, 0
        // Predicated region
        $region149: #{tpu_custom_call.1} parent=87 // pred_check
          %p785 = pneg %p784
        $region150: #{tpu_custom_call.1} parent=87 // pred_check_branch
          %787 = sbr.rel (%p785) target = $region152
        $region151: #{tpu_custom_call.1} parent=87 // pred_region
          %v788 = vld [vmem:[#allocation5] sm:$0xff]
          %v789 = vpack.c.bf16 %v788, %v788
          %v790 = vld [vmem:[%s2] sm:$0xf]
          %v791 = vld [vmem:[%s2 + $0x4] sm:$0xf]
          %v792 = vld [vmem:[%s2 + $0x8] sm:$0xf]
          %v793 = vld [vmem:[%s2 + $0xc] sm:$0xf]
          %v794 = vld [vmem:[%s2 + $0x10] sm:$0xf]
          %v795 = vld [vmem:[%s2 + $0x14] sm:$0xf]
          %v796 = vld [vmem:[%s2 + $0x18] sm:$0xf]
          %v797 = vld [vmem:[%s2 + $0x1c] sm:$0xf]
          %v798 = vld [vmem:[%s2 + $0x20] sm:$0xf]
          %v799 = vld [vmem:[%s2 + $0x24] sm:$0xf]
          %v800 = vld [vmem:[%s2 + $0x28] sm:$0x3]
          %v801 = vld [vmem:[#allocation16] sm:$0x1]
          %v803 = vlaneseq
          %v804 = vshrl.u32 %v803, 7
          %v805 = vsub.s32 0, %v804
          %v806 = vrot.slane %v801, %v805
          %v819 = vunpack.c.l.b16 %v790
          %v820 = vunpack.c.l.b16 %v791
          %v821 = vunpack.c.l.b16 %v792
          %v822 = vunpack.c.l.b16 %v793
          %v823 = vunpack.c.l.b16 %v794
          %v824 = vunpack.c.l.b16 %v795
          %v825 = vunpack.c.l.b16 %v796
          %v826 = vunpack.c.l.b16 %v797
          %v827 = vunpack.c.l.b16 %v798
          %v828 = vunpack.c.l.b16 %v799
          %v829 = vunpack.c.l.b16 %v800
          %v830 = vpack.c.b16 %v820, %v819
          %v831 = vpack.c.b16 %v822, %v821
          %v832 = vpack.c.b16 %v824, %v823
          %v833 = vpack.c.b16 %v826, %v825
          %v834 = vpack.c.b16 %v828, %v827
          %v835 = vpack.c.b16 %v829, %v829
          %vm841 = vcmask 687104
          %v843 = vsel %vm841, %v789, 0
          %vm845 = vcmask 1041408
          %v847 = vsel %vm845, %v835, 0
          %849 = vmatprep.subr.bf16.mxu0 0
          %850 = vmatpush1.bf16.msra.mxu0 %v830
          %851 = vmatprep.subr.bf16.mxu0 0
          %852 = vmatpush1.bf16.msra.mxu0 %v831
          %853 = vmatprep.subr.bf16.mxu0 0
          %854 = vmatpush1.bf16.msra.mxu0 %v832
          %855 = vmatprep.subr.bf16.mxu0 0
          %856 = vmatpush1.bf16.msra.mxu0 %v833
          %857 = vmatprep.subr.bf16.mxu0 0
          %858 = vmatpush1.bf16.msra.mxu0 %v834
          %859 = vmatprep.subr.bf16.mxu0 0
          %860 = vmatpush1.bf16.msra.mxu0 %v847
          %861 = vmatprep.subr.bf16.mxu0 0
          %862 = vmatpush1.bf16.msra.mxu0 0
          %863 = vmatprep.subr.bf16.mxu0 0
          %864 = vmatpush1.bf16.msra.mxu0 0
          %865 = vmatprep.subr.bf16.mxu0 0
          %866 = vmatpush1.bf16.msra.mxu0 0
          %867 = vmatprep.subr.bf16.mxu0 0
          %868 = vmatpush1.bf16.msra.mxu0 0
          %869 = vmatprep.subr.bf16.mxu0 0
          %870 = vmatpush1.bf16.msra.mxu0 0
          %871 = vmatprep.subr.bf16.mxu0 0
          %872 = vmatpush1.bf16.msra.mxu0 0
          %873 = vmatprep.subr.bf16.mxu0 0
          %874 = vmatpush1.bf16.msra.mxu0 0
          %875 = vmatprep.subr.bf16.mxu0 0
          %876 = vmatpush1.bf16.msra.mxu0 0
          %877 = vmatprep.subr.bf16.mxu0 0
          %878 = vmatpush1.bf16.msra.mxu0 0
          %879 = vmatprep.subr.bf16.mxu0 0
          %880 = vmatpush1.bf16.msra.mxu0 0
          %881 = vmatprep.mubr.bf16.mxu0 0
          %882 = vmatmul.mubr.bf16.gmra.mrb[0].mxu0 %v843
          %v883 = vpop.f32.mrb[0].mxu0
          %v884 = vadd.f32 %v806, %v883
          %v885 = vpop.f32.mrb[0].mxu0
          %v886 = vpop.f32.mrb[0].mxu0
          %v887 = vpop.f32.mrb[0].mxu0
          %888 = vdwg.mxu0
          %s889 = sld [smem:[#allocation4]]
          %vm890 = vcmp.ge.f32.partialorder %v884, 0.0
          %v891 = vstv %s889
          %v892 = vmul.f32 %v891, %v884
          %v893 = vsel %vm890, %v884, %v892
          %v894 = vpack.c.bf16 %v893, %v893
          %v895 = vld [vmem:[#allocation8] sm:$0xf]
          %v896 = vld [vmem:[#allocation8 + $0x4] sm:$0xf]
          %v897 = vld [vmem:[#allocation8 + $0x8] sm:$0xf]
          %v898 = vld [vmem:[#allocation8 + $0xc] sm:$0xf]
          %v899 = vld [vmem:[#allocation8 + $0x10] sm:$0xf]
          %v900 = vld [vmem:[#allocation8 + $0x14] sm:$0xf]
          %v901 = vld [vmem:[#allocation8 + $0x18] sm:$0xf]
          %v902 = vld [vmem:[#allocation8 + $0x1c] sm:$0xf]
          %v903 = vld [vmem:[#allocation17] sm:$0x1]
          %v905 = vlaneseq
          %v906 = vshrl.u32 %v905, 7
          %v907 = vsub.s32 0, %v906
          %v908 = vrot.slane %v903, %v907
          %v918 = vunpack.c.l.b16 %v895
          %v919 = vunpack.c.l.b16 %v896
          %v920 = vunpack.c.l.b16 %v897
          %v921 = vunpack.c.l.b16 %v898
          %v922 = vunpack.c.l.b16 %v899
          %v923 = vunpack.c.l.b16 %v900
          %v924 = vunpack.c.l.b16 %v901
          %v925 = vunpack.c.l.b16 %v902
          %v926 = vpack.c.b16 %v919, %v918
          %v927 = vpack.c.b16 %v921, %v920
          %v928 = vpack.c.b16 %v923, %v922
          %v929 = vpack.c.b16 %v925, %v924
          %vm934 = vcmask 523264
          %v936 = vsel %vm934, %v894, 0
          %938 = vmatprep.subr.bf16.mxu0 0
          %939 = vmatpush1.bf16.msra.mxu0 %v926
          %940 = vmatprep.subr.bf16.mxu0 0
          %941 = vmatpush1.bf16.msra.mxu0 %v927
          %942 = vmatprep.subr.bf16.mxu0 0
          %943 = vmatpush1.bf16.msra.mxu0 %v928
          %944 = vmatprep.subr.bf16.mxu0 0
          %945 = vmatpush1.bf16.msra.mxu0 %v929
          %946 = vmatprep.subr.bf16.mxu0 0
          %947 = vmatpush1.bf16.msra.mxu0 0
          %948 = vmatprep.subr.bf16.mxu0 0
          %949 = vmatpush1.bf16.msra.mxu0 0
          %950 = vmatprep.subr.bf16.mxu0 0
          %951 = vmatpush1.bf16.msra.mxu0 0
          %952 = vmatprep.subr.bf16.mxu0 0
          %953 = vmatpush1.bf16.msra.mxu0 0
          %954 = vmatprep.subr.bf16.mxu0 0
          %955 = vmatpush1.bf16.msra.mxu0 0
          %956 = vmatprep.subr.bf16.mxu0 0
          %957 = vmatpush1.bf16.msra.mxu0 0
          %958 = vmatprep.subr.bf16.mxu0 0
          %959 = vmatpush1.bf16.msra.mxu0 0
          %960 = vmatprep.subr.bf16.mxu0 0
          %961 = vmatpush1.bf16.msra.mxu0 0
          %962 = vmatprep.subr.bf16.mxu0 0
          %963 = vmatpush1.bf16.msra.mxu0 0
          %964 = vmatprep.subr.bf16.mxu0 0
          %965 = vmatpush1.bf16.msra.mxu0 0
          %966 = vmatprep.subr.bf16.mxu0 0
          %967 = vmatpush1.bf16.msra.mxu0 0
          %968 = vmatprep.subr.bf16.mxu0 0
          %969 = vmatpush1.bf16.msra.mxu0 0
          %970 = vmatprep.mubr.bf16.mxu0 0
          %971 = vmatmul.mubr.bf16.gmra.mrb[0].mxu0 %v936
          %v972 = vpop.f32.mrb[0].mxu0
          %v973 = vadd.f32 %v908, %v972
          %v974 = vpop.f32.mrb[0].mxu0
          %v975 = vpop.f32.mrb[0].mxu0
          %v976 = vpop.f32.mrb[0].mxu0
          %977 = vdwg.mxu0
          %s978 = sld [smem:[#allocation4 + $0x1]]
          %vm979 = vcmp.ge.f32.partialorder %v973, 0.0
          %v980 = vstv %s978
          %v981 = vmul.f32 %v980, %v973
          %v982 = vsel %vm979, %v973, %v981
          %v983 = vpack.c.bf16 %v982, %v982
          %v984 = vld [vmem:[#allocation10] sm:$0xff]
          %v985 = vld [vmem:[#allocation10 + $0x8] sm:$0xff]
          %v986 = vld [vmem:[#allocation10 + $0x10] sm:$0xff]
          %v987 = vld [vmem:[#allocation10 + $0x18] sm:$0xff]
          %v988 = vld [vmem:[#allocation10 + $0x20] sm:$0xff]
          %v989 = vld [vmem:[#allocation10 + $0x28] sm:$0xff]
          %v990 = vld [vmem:[#allocation10 + $0x30] sm:$0xff]
          %v991 = vld [vmem:[#allocation10 + $0x38] sm:$0xff]
          %v992 = vld [vmem:[#allocation10 + $0x40] sm:$0xff]
          %v993 = vld [vmem:[#allocation10 + $0x48] sm:$0xff]
          %v994 = vld [vmem:[#allocation10 + $0x50] sm:$0xff]
          %v995 = vld [vmem:[#allocation10 + $0x58] sm:$0xff]
          %v996 = vld [vmem:[#allocation10 + $0x60] sm:$0xff]
          %v997 = vld [vmem:[#allocation10 + $0x68] sm:$0xff]
          %v998 = vld [vmem:[#allocation10 + $0x70] sm:$0xff]
          %v999 = vld [vmem:[#allocation10 + $0x78] sm:$0xff]
          %v1000 = vld [vmem:[#allocation19] sm:$0x3]
          %v1002 = vlaneseq
          %v1003 = vshrl.u32 %v1002, 7
          %v1004 = vsub.s32 0, %v1003
          %v1005 = vrot.slane %v1000, %v1004
          %v1006 = vlaneseq
          %v1007 = vshrl.u32 %v1006, 7
          %v1008 = vsub.s32 1, %v1007
          %v1009 = vrot.slane %v1000, %v1008
          %v1028 = vunpack.c.l.b16 %v984
          %v1029 = vunpack.c.h.b16 %v984
          %v1030 = vunpack.c.l.b16 %v985
          %v1031 = vunpack.c.h.b16 %v985
          %v1032 = vunpack.c.l.b16 %v986
          %v1033 = vunpack.c.h.b16 %v986
          %v1034 = vunpack.c.l.b16 %v987
          %v1035 = vunpack.c.h.b16 %v987
          %v1036 = vunpack.c.l.b16 %v988
          %v1037 = vunpack.c.h.b16 %v988
          %v1038 = vunpack.c.l.b16 %v989
          %v1039 = vunpack.c.h.b16 %v989
          %v1040 = vunpack.c.l.b16 %v990
          %v1041 = vunpack.c.h.b16 %v990
          %v1042 = vunpack.c.l.b16 %v991
          %v1043 = vunpack.c.h.b16 %v991
          %v1044 = vunpack.c.l.b16 %v992
          %v1045 = vunpack.c.h.b16 %v992
          %v1046 = vunpack.c.l.b16 %v993
          %v1047 = vunpack.c.h.b16 %v993
          %v1048 = vunpack.c.l.b16 %v994
          %v1049 = vunpack.c.h.b16 %v994
          %v1050 = vunpack.c.l.b16 %v995
          %v1051 = vunpack.c.h.b16 %v995
          %v1052 = vunpack.c.l.b16 %v996
          %v1053 = vunpack.c.h.b16 %v996
          %v1054 = vunpack.c.l.b16 %v997
          %v1055 = vunpack.c.h.b16 %v997
          %v1056 = vunpack.c.l.b16 %v998
          %v1057 = vunpack.c.h.b16 %v998
          %v1058 = vunpack.c.l.b16 %v999
          %v1059 = vunpack.c.h.b16 %v999
          %v1060 = vpack.c.b16 %v1030, %v1028
          %v1061 = vpack.c.b16 %v1031, %v1029
          %v1062 = vpack.c.b16 %v1034, %v1032
          %v1063 = vpack.c.b16 %v1035, %v1033
          %v1064 = vpack.c.b16 %v1038, %v1036
          %v1065 = vpack.c.b16 %v1039, %v1037
          %v1066 = vpack.c.b16 %v1042, %v1040
          %v1067 = vpack.c.b16 %v1043, %v1041
          %v1068 = vpack.c.b16 %v1046, %v1044
          %v1069 = vpack.c.b16 %v1047, %v1045
          %v1070 = vpack.c.b16 %v1050, %v1048
          %v1071 = vpack.c.b16 %v1051, %v1049
          %v1072 = vpack.c.b16 %v1054, %v1052
          %v1073 = vpack.c.b16 %v1055, %v1053
          %v1074 = vpack.c.b16 %v1058, %v1056
          %v1075 = vpack.c.b16 %v1059, %v1057
          %1092 = vmatprep.subr.bf16.mxu0 %v1061
          %1093 = vmatpush1.bf16.msra.mxu0 %v1060
          %1094 = vmatprep.subr.bf16.mxu0 %v1063
          %1095 = vmatpush1.bf16.msra.mxu0 %v1062
          %1096 = vmatprep.subr.bf16.mxu0 %v1065
          %1097 = vmatpush1.bf16.msra.mxu0 %v1064
          %1098 = vmatprep.subr.bf16.mxu0 %v1067
          %1099 = vmatpush1.bf16.msra.mxu0 %v1066
          %1100 = vmatprep.subr.bf16.mxu0 %v1069
          %1101 = vmatpush1.bf16.msra.mxu0 %v1068
          %1102 = vmatprep.subr.bf16.mxu0 %v1071
          %1103 = vmatpush1.bf16.msra.mxu0 %v1070
          %1104 = vmatprep.subr.bf16.mxu0 %v1073
          %1105 = vmatpush1.bf16.msra.mxu0 %v1072
          %1106 = vmatprep.subr.bf16.mxu0 %v1075
          %1107 = vmatpush1.bf16.msra.mxu0 %v1074
          %1108 = vmatprep.subr.bf16.mxu0 0
          %1109 = vmatpush1.bf16.msra.mxu0 0
          %1110 = vmatprep.subr.bf16.mxu0 0
          %1111 = vmatpush1.bf16.msra.mxu0 0
          %1112 = vmatprep.subr.bf16.mxu0 0
          %1113 = vmatpush1.bf16.msra.mxu0 0
          %1114 = vmatprep.subr.bf16.mxu0 0
          %1115 = vmatpush1.bf16.msra.mxu0 0
          %1116 = vmatprep.subr.bf16.mxu0 0
          %1117 = vmatpush1.bf16.msra.mxu0 0
          %1118 = vmatprep.subr.bf16.mxu0 0
          %1119 = vmatpush1.bf16.msra.mxu0 0
          %1120 = vmatprep.subr.bf16.mxu0 0
          %1121 = vmatpush1.bf16.msra.mxu0 0
          %1122 = vmatprep.subr.bf16.mxu0 0
          %1123 = vmatpush1.bf16.msra.mxu0 0
          %1124 = vmatprep.mubr.bf16.mxu0 0
          %1125 = vmatmul.mubr.bf16.gmra.mrb[0].mxu0 %v983
          %v1126 = vpop.f32.mrb[0].mxu0
          %v1127 = vadd.f32 %v1005, %v1126
          %v1128 = vpop.f32.mrb[0].mxu0
          %v1129 = vadd.f32 %v1009, %v1128
          %v1130 = vpop.f32.mrb[0].mxu0
          %v1131 = vpop.f32.mrb[0].mxu0
          %1132 = vdwg.mxu0
          %s1133 = sld [smem:[#allocation4 + $0x2]]
          %vm1134 = vcmp.ge.f32.partialorder %v1127, 0.0
          %vm1135 = vcmp.ge.f32.partialorder %v1129, 0.0
          %v1136 = vstv %s1133
          %v1137 = vmul.f32 %v1136, %v1127
          %v1138 = vmul.f32 %v1136, %v1129
          %v1139 = vsel %vm1134, %v1127, %v1137
          %v1140 = vsel %vm1135, %v1129, %v1138
          %v1141 = vpack.c.bf16 %v1139, %v1139
          %v1142 = vpack.c.bf16 %v1140, %v1140
          %v1143 = vld [vmem:[#allocation11] sm:$0xff]
          %v1144 = vld [vmem:[#allocation11 + $0x8] sm:$0xff]
          %v1145 = vld [vmem:[#allocation11 + $0x10] sm:$0xff]
          %v1146 = vld [vmem:[#allocation11 + $0x18] sm:$0xff]
          %v1147 = vld [vmem:[#allocation11 + $0x20] sm:$0xff]
          %v1148 = vld [vmem:[#allocation11 + $0x28] sm:$0xff]
          %v1149 = vld [vmem:[#allocation11 + $0x30] sm:$0xff]
          %v1150 = vld [vmem:[#allocation11 + $0x38] sm:$0xff]
          %v1151 = vld [vmem:[#allocation11 + $0x40] sm:$0xff]
          %v1152 = vld [vmem:[#allocation11 + $0x48] sm:$0xff]
          %v1153 = vld [vmem:[#allocation11 + $0x50] sm:$0xff]
          %v1154 = vld [vmem:[#allocation11 + $0x58] sm:$0xff]
          %v1155 = vld [vmem:[#allocation11 + $0x60] sm:$0xff]
          %v1156 = vld [vmem:[#allocation11 + $0x68] sm:$0xff]
          %v1157 = vld [vmem:[#allocation11 + $0x70] sm:$0xff]
          %v1158 = vld [vmem:[#allocation11 + $0x78] sm:$0xff]
          %v1159 = vld [vmem:[#allocation11 + $0x80] sm:$0xff]
          %v1160 = vld [vmem:[#allocation11 + $0x88] sm:$0xff]
          %v1161 = vld [vmem:[#allocation11 + $0x90] sm:$0xff]
          %v1162 = vld [vmem:[#allocation11 + $0x98] sm:$0xff]
          %v1163 = vld [vmem:[#allocation11 + $0xa0] sm:$0xff]
          %v1164 = vld [vmem:[#allocation11 + $0xa8] sm:$0xff]
          %v1165 = vld [vmem:[#allocation11 + $0xb0] sm:$0xff]
          %v1166 = vld [vmem:[#allocation11 + $0xb8] sm:$0xff]
          %v1167 = vld [vmem:[#allocation11 + $0xc0] sm:$0xff]
          %v1168 = vld [vmem:[#allocation11 + $0xc8] sm:$0xff]
          %v1169 = vld [vmem:[#allocation11 + $0xd0] sm:$0xff]
          %v1170 = vld [vmem:[#allocation11 + $0xd8] sm:$0xff]
          %v1171 = vld [vmem:[#allocation11 + $0xe0] sm:$0xff]
          %v1172 = vld [vmem:[#allocation11 + $0xe8] sm:$0xff]
          %v1173 = vld [vmem:[#allocation11 + $0xf0] sm:$0xff]
          %v1174 = vld [vmem:[#allocation11 + $0xf8] sm:$0xff]
          %v1175 = vld [vmem:[#allocation11 + $0x100] sm:$0xff]
          %v1176 = vld [vmem:[#allocation11 + $0x108] sm:$0xff]
          %v1177 = vld [vmem:[#allocation11 + $0x110] sm:$0xff]
          %v1178 = vld [vmem:[#allocation11 + $0x118] sm:$0xff]
          %v1179 = vld [vmem:[#allocation11 + $0x120] sm:$0xff]
          %v1180 = vld [vmem:[#allocation11 + $0x128] sm:$0xff]
          %v1181 = vld [vmem:[#allocation11 + $0x130] sm:$0xff]
          %v1182 = vld [vmem:[#allocation11 + $0x138] sm:$0xff]
          %v1183 = vld [vmem:[#allocation11 + $0x140] sm:$0xff]
          %v1184 = vld [vmem:[#allocation11 + $0x148] sm:$0xff]
          %v1185 = vld [vmem:[#allocation11 + $0x150] sm:$0xff]
          %v1186 = vld [vmem:[#allocation11 + $0x158] sm:$0xff]
          %v1187 = vld [vmem:[#allocation11 + $0x160] sm:$0xff]
          %v1188 = vld [vmem:[#allocation11 + $0x168] sm:$0xff]
          %v1189 = vld [vmem:[#allocation11 + $0x170] sm:$0xff]
          %v1190 = vld [vmem:[#allocation11 + $0x178] sm:$0xff]
          %v1191 = vld [vmem:[#allocation11 + $0x180] sm:$0xff]
          %v1192 = vld [vmem:[#allocation11 + $0x188] sm:$0xff]
          %v1193 = vld [vmem:[#allocation11 + $0x190] sm:$0xff]
          %v1194 = vld [vmem:[#allocation11 + $0x198] sm:$0xff]
          %v1195 = vld [vmem:[#allocation11 + $0x1a0] sm:$0xff]
          %v1196 = vld [vmem:[#allocation11 + $0x1a8] sm:$0xff]
          %v1197 = vld [vmem:[#allocation11 + $0x1b0] sm:$0xff]
          %v1198 = vld [vmem:[#allocation11 + $0x1b8] sm:$0xff]
          %v1199 = vld [vmem:[#allocation11 + $0x1c0] sm:$0xff]
          %v1200 = vld [vmem:[#allocation11 + $0x1c8] sm:$0xff]
          %v1201 = vld [vmem:[#allocation11 + $0x1d0] sm:$0xff]
          %v1202 = vld [vmem:[#allocation11 + $0x1d8] sm:$0xff]
          %v1203 = vld [vmem:[#allocation11 + $0x1e0] sm:$0xff]
          %v1204 = vld [vmem:[#allocation11 + $0x1e8] sm:$0xff]
          %v1205 = vld [vmem:[#allocation11 + $0x1f0] sm:$0xff]
          %v1206 = vld [vmem:[#allocation11 + $0x1f8] sm:$0xff]
          %v1207 = vld [vmem:[#allocation20] sm:$0xf]
          %v1209 = vlaneseq
          %v1210 = vshrl.u32 %v1209, 7
          %v1211 = vsub.s32 0, %v1210
          %v1212 = vrot.slane %v1207, %v1211
          %v1213 = vlaneseq
          %v1214 = vshrl.u32 %v1213, 7
          %v1215 = vsub.s32 1, %v1214
          %v1216 = vrot.slane %v1207, %v1215
          %v1217 = vlaneseq
          %v1218 = vshrl.u32 %v1217, 7
          %v1219 = vsub.s32 2, %v1218
          %v1220 = vrot.slane %v1207, %v1219
          %v1221 = vlaneseq
          %v1222 = vshrl.u32 %v1221, 7
          %v1223 = vsub.s32 3, %v1222
          %v1224 = vrot.slane %v1207, %v1223
          %v1293 = vunpack.c.l.b16 %v1143
          %v1294 = vunpack.c.h.b16 %v1143
          %v1295 = vunpack.c.l.b16 %v1144
          %v1296 = vunpack.c.h.b16 %v1144
          %v1297 = vunpack.c.l.b16 %v1145
          %v1298 = vunpack.c.h.b16 %v1145
          %v1299 = vunpack.c.l.b16 %v1146
          %v1300 = vunpack.c.h.b16 %v1146
          %v1301 = vunpack.c.l.b16 %v1147
          %v1302 = vunpack.c.h.b16 %v1147
          %v1303 = vunpack.c.l.b16 %v1148
          %v1304 = vunpack.c.h.b16 %v1148
          %v1305 = vunpack.c.l.b16 %v1149
          %v1306 = vunpack.c.h.b16 %v1149
          %v1307 = vunpack.c.l.b16 %v1150
          %v1308 = vunpack.c.h.b16 %v1150
          %v1309 = vunpack.c.l.b16 %v1151
          %v1310 = vunpack.c.h.b16 %v1151
          %v1311 = vunpack.c.l.b16 %v1152
          %v1312 = vunpack.c.h.b16 %v1152
          %v1313 = vunpack.c.l.b16 %v1153
          %v1314 = vunpack.c.h.b16 %v1153
          %v1315 = vunpack.c.l.b16 %v1154
          %v1316 = vunpack.c.h.b16 %v1154
          %v1317 = vunpack.c.l.b16 %v1155
          %v1318 = vunpack.c.h.b16 %v1155
          %v1319 = vunpack.c.l.b16 %v1156
          %v1320 = vunpack.c.h.b16 %v1156
          %v1321 = vunpack.c.l.b16 %v1157
          %v1322 = vunpack.c.h.b16 %v1157
          %v1323 = vunpack.c.l.b16 %v1158
          %v1324 = vunpack.c.h.b16 %v1158
          %v1325 = vunpack.c.l.b16 %v1159
          %v1326 = vunpack.c.h.b16 %v1159
          %v1327 = vunpack.c.l.b16 %v1160
          %v1328 = vunpack.c.h.b16 %v1160
          %v1329 = vunpack.c.l.b16 %v1161
          %v1330 = vunpack.c.h.b16 %v1161
          %v1331 = vunpack.c.l.b16 %v1162
          %v1332 = vunpack.c.h.b16 %v1162
          %v1333 = vunpack.c.l.b16 %v1163
          %v1334 = vunpack.c.h.b16 %v1163
          %v1335 = vunpack.c.l.b16 %v1164
          %v1336 = vunpack.c.h.b16 %v1164
          %v1337 = vunpack.c.l.b16 %v1165
          %v1338 = vunpack.c.h.b16 %v1165
          %v1339 = vunpack.c.l.b16 %v1166
          %v1340 = vunpack.c.h.b16 %v1166
          %v1341 = vunpack.c.l.b16 %v1167
          %v1342 = vunpack.c.h.b16 %v1167
          %v1343 = vunpack.c.l.b16 %v1168
          %v1344 = vunpack.c.h.b16 %v1168
          %v1345 = vunpack.c.l.b16 %v1169
          %v1346 = vunpack.c.h.b16 %v1169
          %v1347 = vunpack.c.l.b16 %v1170
          %v1348 = vunpack.c.h.b16 %v1170
          %v1349 = vunpack.c.l.b16 %v1171
          %v1350 = vunpack.c.h.b16 %v1171
          %v1351 = vunpack.c.l.b16 %v1172
          %v1352 = vunpack.c.h.b16 %v1172
          %v1353 = vunpack.c.l.b16 %v1173
          %v1354 = vunpack.c.h.b16 %v1173
          %v1355 = vunpack.c.l.b16 %v1174
          %v1356 = vunpack.c.h.b16 %v1174
          %v1357 = vunpack.c.l.b16 %v1175
          %v1358 = vunpack.c.h.b16 %v1175
          %v1359 = vunpack.c.l.b16 %v1176
          %v1360 = vunpack.c.h.b16 %v1176
          %v1361 = vunpack.c.l.b16 %v1177
          %v1362 = vunpack.c.h.b16 %v1177
          %v1363 = vunpack.c.l.b16 %v1178
          %v1364 = vunpack.c.h.b16 %v1178
          %v1365 = vunpack.c.l.b16 %v1179
          %v1366 = vunpack.c.h.b16 %v1179
          %v1367 = vunpack.c.l.b16 %v1180
          %v1368 = vunpack.c.h.b16 %v1180
          %v1369 = vunpack.c.l.b16 %v1181
          %v1370 = vunpack.c.h.b16 %v1181
          %v1371 = vunpack.c.l.b16 %v1182
          %v1372 = vunpack.c.h.b16 %v1182
          %v1373 = vunpack.c.l.b16 %v1183
          %v1374 = vunpack.c.h.b16 %v1183
          %v1375 = vunpack.c.l.b16 %v1184
          %v1376 = vunpack.c.h.b16 %v1184
          %v1377 = vunpack.c.l.b16 %v1185
          %v1378 = vunpack.c.h.b16 %v1185
          %v1379 = vunpack.c.l.b16 %v1186
          %v1380 = vunpack.c.h.b16 %v1186
          %v1381 = vunpack.c.l.b16 %v1187
          %v1382 = vunpack.c.h.b16 %v1187
          %v1383 = vunpack.c.l.b16 %v1188
          %v1384 = vunpack.c.h.b16 %v1188
          %v1385 = vunpack.c.l.b16 %v1189
          %v1386 = vunpack.c.h.b16 %v1189
          %v1387 = vunpack.c.l.b16 %v1190
          %v1388 = vunpack.c.h.b16 %v1190
          %v1389 = vunpack.c.l.b16 %v1191
          %v1390 = vunpack.c.h.b16 %v1191
          %v1391 = vunpack.c.l.b16 %v1192
          %v1392 = vunpack.c.h.b16 %v1192
          %v1393 = vunpack.c.l.b16 %v1193
          %v1394 = vunpack.c.h.b16 %v1193
          %v1395 = vunpack.c.l.b16 %v1194
          %v1396 = vunpack.c.h.b16 %v1194
          %v1397 = vunpack.c.l.b16 %v1195
          %v1398 = vunpack.c.h.b16 %v1195
          %v1399 = vunpack.c.l.b16 %v1196
          %v1400 = vunpack.c.h.b16 %v1196
          %v1401 = vunpack.c.l.b16 %v1197
          %v1402 = vunpack.c.h.b16 %v1197
          %v1403 = vunpack.c.l.b16 %v1198
          %v1404 = vunpack.c.h.b16 %v1198
          %v1405 = vunpack.c.l.b16 %v1199
          %v1406 = vunpack.c.h.b16 %v1199
          %v1407 = vunpack.c.l.b16 %v1200
          %v1408 = vunpack.c.h.b16 %v1200
          %v1409 = vunpack.c.l.b16 %v1201
          %v1410 = vunpack.c.h.b16 %v1201
          %v1411 = vunpack.c.l.b16 %v1202
          %v1412 = vunpack.c.h.b16 %v1202
          %v1413 = vunpack.c.l.b16 %v1203
          %v1414 = vunpack.c.h.b16 %v1203
          %v1415 = vunpack.c.l.b16 %v1204
          %v1416 = vunpack.c.h.b16 %v1204
          %v1417 = vunpack.c.l.b16 %v1205
          %v1418 = vunpack.c.h.b16 %v1205
          %v1419 = vunpack.c.l.b16 %v1206
          %v1420 = vunpack.c.h.b16 %v1206
          %v1421 = vpack.c.b16 %v1297, %v1293
          %v1422 = vpack.c.b16 %v1298, %v1294
          %v1423 = vpack.c.b16 %v1299, %v1295
          %v1424 = vpack.c.b16 %v1300, %v1296
          %v1425 = vpack.c.b16 %v1305, %v1301
          %v1426 = vpack.c.b16 %v1306, %v1302
          %v1427 = vpack.c.b16 %v1307, %v1303
          %v1428 = vpack.c.b16 %v1308, %v1304
          %v1429 = vpack.c.b16 %v1313, %v1309
          %v1430 = vpack.c.b16 %v1314, %v1310
          %v1431 = vpack.c.b16 %v1315, %v1311
          %v1432 = vpack.c.b16 %v1316, %v1312
          %v1433 = vpack.c.b16 %v1321, %v1317
          %v1434 = vpack.c.b16 %v1322, %v1318
          %v1435 = vpack.c.b16 %v1323, %v1319
          %v1436 = vpack.c.b16 %v1324, %v1320
          %v1437 = vpack.c.b16 %v1329, %v1325
          %v1438 = vpack.c.b16 %v1330, %v1326
          %v1439 = vpack.c.b16 %v1331, %v1327
          %v1440 = vpack.c.b16 %v1332, %v1328
          %v1441 = vpack.c.b16 %v1337, %v1333
          %v1442 = vpack.c.b16 %v1338, %v1334
          %v1443 = vpack.c.b16 %v1339, %v1335
          %v1444 = vpack.c.b16 %v1340, %v1336
          %v1445 = vpack.c.b16 %v1345, %v1341
          %v1446 = vpack.c.b16 %v1346, %v1342
          %v1447 = vpack.c.b16 %v1347, %v1343
          %v1448 = vpack.c.b16 %v1348, %v1344
          %v1449 = vpack.c.b16 %v1353, %v1349
          %v1450 = vpack.c.b16 %v1354, %v1350
          %v1451 = vpack.c.b16 %v1355, %v1351
          %v1452 = vpack.c.b16 %v1356, %v1352
          %v1453 = vpack.c.b16 %v1361, %v1357
          %v1454 = vpack.c.b16 %v1362, %v1358
          %v1455 = vpack.c.b16 %v1363, %v1359
          %v1456 = vpack.c.b16 %v1364, %v1360
          %v1457 = vpack.c.b16 %v1369, %v1365
          %v1458 = vpack.c.b16 %v1370, %v1366
          %v1459 = vpack.c.b16 %v1371, %v1367
          %v1460 = vpack.c.b16 %v1372, %v1368
          %v1461 = vpack.c.b16 %v1377, %v1373
          %v1462 = vpack.c.b16 %v1378, %v1374
          %v1463 = vpack.c.b16 %v1379, %v1375
          %v1464 = vpack.c.b16 %v1380, %v1376
          %v1465 = vpack.c.b16 %v1385, %v1381
          %v1466 = vpack.c.b16 %v1386, %v1382
          %v1467 = vpack.c.b16 %v1387, %v1383
          %v1468 = vpack.c.b16 %v1388, %v1384
          %v1469 = vpack.c.b16 %v1393, %v1389
          %v1470 = vpack.c.b16 %v1394, %v1390
          %v1471 = vpack.c.b16 %v1395, %v1391
          %v1472 = vpack.c.b16 %v1396, %v1392
          %v1473 = vpack.c.b16 %v1401, %v1397
          %v1474 = vpack.c.b16 %v1402, %v1398
          %v1475 = vpack.c.b16 %v1403, %v1399
          %v1476 = vpack.c.b16 %v1404, %v1400
          %v1477 = vpack.c.b16 %v1409, %v1405
          %v1478 = vpack.c.b16 %v1410, %v1406
          %v1479 = vpack.c.b16 %v1411, %v1407
          %v1480 = vpack.c.b16 %v1412, %v1408
          %v1481 = vpack.c.b16 %v1417, %v1413
          %v1482 = vpack.c.b16 %v1418, %v1414
          %v1483 = vpack.c.b16 %v1419, %v1415
          %v1484 = vpack.c.b16 %v1420, %v1416
          %1549 = vmatprep.subr.bf16.mxu0 %v1422
          %1550 = vmatpush1.bf16.msra.mxu0 %v1421
          %1551 = vmatprep.subr.bf16.mxu0 %v1426
          %1552 = vmatpush1.bf16.msra.mxu0 %v1425
          %1553 = vmatprep.subr.bf16.mxu0 %v1430
          %1554 = vmatpush1.bf16.msra.mxu0 %v1429
          %1555 = vmatprep.subr.bf16.mxu0 %v1434
          %1556 = vmatpush1.bf16.msra.mxu0 %v1433
          %1557 = vmatprep.subr.bf16.mxu0 %v1438
          %1558 = vmatpush1.bf16.msra.mxu0 %v1437
          %1559 = vmatprep.subr.bf16.mxu0 %v1442
          %1560 = vmatpush1.bf16.msra.mxu0 %v1441
          %1561 = vmatprep.subr.bf16.mxu0 %v1446
          %1562 = vmatpush1.bf16.msra.mxu0 %v1445
          %1563 = vmatprep.subr.bf16.mxu0 %v1450
          %1564 = vmatpush1.bf16.msra.mxu0 %v1449
          %1565 = vmatprep.subr.bf16.mxu0 %v1454
          %1566 = vmatpush1.bf16.msra.mxu0 %v1453
          %1567 = vmatprep.subr.bf16.mxu0 %v1458
          %1568 = vmatpush1.bf16.msra.mxu0 %v1457
          %1569 = vmatprep.subr.bf16.mxu0 %v1462
          %1570 = vmatpush1.bf16.msra.mxu0 %v1461
          %1571 = vmatprep.subr.bf16.mxu0 %v1466
          %1572 = vmatpush1.bf16.msra.mxu0 %v1465
          %1573 = vmatprep.subr.bf16.mxu0 %v1470
          %1574 = vmatpush1.bf16.msra.mxu0 %v1469
          %1575 = vmatprep.subr.bf16.mxu0 %v1474
          %1576 = vmatpush1.bf16.msra.mxu0 %v1473
          %1577 = vmatprep.subr.bf16.mxu0 %v1478
          %1578 = vmatpush1.bf16.msra.mxu0 %v1477
          %1579 = vmatprep.subr.bf16.mxu0 %v1482
          %1580 = vmatpush1.bf16.msra.mxu0 %v1481
          %1581 = vmatprep.mubr.bf16.mxu0 %v1142
          %1582 = vmatmul.mubr.bf16.gmra.mrb[0].mxu0 %v1141
          %v1583 = vpop.f32.mrb[0].mxu0
          %v1584 = vadd.f32 %v1212, %v1583
          %v1585 = vpop.f32.mrb[0].mxu0
          %v1586 = vadd.f32 %v1216, %v1585
          %v1587 = vpop.f32.mrb[0].mxu0
          %v1588 = vpop.f32.mrb[0].mxu0
          %1589 = vdwg.mxu0
          %1590 = vmatprep.subr.bf16.mxu0 %v1424
          %1591 = vmatpush1.bf16.msra.mxu0 %v1423
          %1592 = vmatprep.subr.bf16.mxu0 %v1428
          %1593 = vmatpush1.bf16.msra.mxu0 %v1427
          %1594 = vmatprep.subr.bf16.mxu0 %v1432
          %1595 = vmatpush1.bf16.msra.mxu0 %v1431
          %1596 = vmatprep.subr.bf16.mxu0 %v1436
          %1597 = vmatpush1.bf16.msra.mxu0 %v1435
          %1598 = vmatprep.subr.bf16.mxu0 %v1440
          %1599 = vmatpush1.bf16.msra.mxu0 %v1439
          %1600 = vmatprep.subr.bf16.mxu0 %v1444
          %1601 = vmatpush1.bf16.msra.mxu0 %v1443
          %1602 = vmatprep.subr.bf16.mxu0 %v1448
          %1603 = vmatpush1.bf16.msra.mxu0 %v1447
          %1604 = vmatprep.subr.bf16.mxu0 %v1452
          %1605 = vmatpush1.bf16.msra.mxu0 %v1451
          %1606 = vmatprep.subr.bf16.mxu0 %v1456
          %1607 = vmatpush1.bf16.msra.mxu0 %v1455
          %1608 = vmatprep.subr.bf16.mxu0 %v1460
          %1609 = vmatpush1.bf16.msra.mxu0 %v1459
          %1610 = vmatprep.subr.bf16.mxu0 %v1464
          %1611 = vmatpush1.bf16.msra.mxu0 %v1463
          %1612 = vmatprep.subr.bf16.mxu0 %v1468
          %1613 = vmatpush1.bf16.msra.mxu0 %v1467
          %1614 = vmatprep.subr.bf16.mxu0 %v1472
          %1615 = vmatpush1.bf16.msra.mxu0 %v1471
          %1616 = vmatprep.subr.bf16.mxu0 %v1476
          %1617 = vmatpush1.bf16.msra.mxu0 %v1475
          %1618 = vmatprep.subr.bf16.mxu0 %v1480
          %1619 = vmatpush1.bf16.msra.mxu0 %v1479
          %1620 = vmatprep.subr.bf16.mxu0 %v1484
          %1621 = vmatpush1.bf16.msra.mxu0 %v1483
          %1622 = vmatprep.mubr.bf16.mxu0 %v1142
          %1623 = vmatmul.mubr.bf16.gmra.mrb[0].mxu0 %v1141
          %v1624 = vpop.f32.mrb[0].mxu0
          %v1625 = vadd.f32 %v1220, %v1624
          %v1626 = vpop.f32.mrb[0].mxu0
          %v1627 = vadd.f32 %v1224, %v1626
          %v1628 = vpop.f32.mrb[0].mxu0
          %v1629 = vpop.f32.mrb[0].mxu0
          %1630 = vdwg.mxu0
          %s1631 = sld [smem:[#allocation4 + $0x3]]
          %vm1632 = vcmp.ge.f32.partialorder %v1584, 0.0
          %vm1633 = vcmp.ge.f32.partialorder %v1586, 0.0
          %vm1634 = vcmp.ge.f32.partialorder %v1625, 0.0
          %vm1635 = vcmp.ge.f32.partialorder %v1627, 0.0
          %v1636 = vstv %s1631
          %v1637 = vmul.f32 %v1636, %v1584
          %v1638 = vmul.f32 %v1636, %v1586
          %v1639 = vmul.f32 %v1636, %v1625
          %v1640 = vmul.f32 %v1636, %v1627
          %v1641 = vsel %vm1632, %v1584, %v1637
          %v1642 = vsel %vm1633, %v1586, %v1638
          %v1643 = vsel %vm1634, %v1625, %v1639
          %v1644 = vsel %vm1635, %v1627, %v1640
          %v1645 = vpack.c.bf16 %v1641, %v1641
          %v1646 = vpack.c.bf16 %v1642, %v1642
          %v1647 = vpack.c.bf16 %v1643, %v1643
          %v1648 = vpack.c.bf16 %v1644, %v1644
          %v1649 = vld [vmem:[#allocation13] sm:$0xff]
          %v1650 = vld [vmem:[#allocation13 + $0x8] sm:$0xff]
          %v1651 = vld [vmem:[#allocation13 + $0x10] sm:$0xff]
          %v1652 = vld [vmem:[#allocation13 + $0x18] sm:$0xff]
          %v1653 = vld [vmem:[#allocation13 + $0x20] sm:$0xff]
          %v1654 = vld [vmem:[#allocation13 + $0x28] sm:$0xff]
          %v1655 = vld [vmem:[#allocation13 + $0x30] sm:$0xff]
          %v1656 = vld [vmem:[#allocation13 + $0x38] sm:$0xff]
          %v1657 = vld [vmem:[#allocation13 + $0x40] sm:$0xff]
          %v1658 = vld [vmem:[#allocation13 + $0x48] sm:$0xff]
          %v1659 = vld [vmem:[#allocation13 + $0x50] sm:$0xff]
          %v1660 = vld [vmem:[#allocation13 + $0x58] sm:$0xff]
          %v1661 = vld [vmem:[#allocation13 + $0x60] sm:$0xff]
          %v1662 = vld [vmem:[#allocation13 + $0x68] sm:$0xff]
          %v1663 = vld [vmem:[#allocation13 + $0x70] sm:$0xff]
          %v1664 = vld [vmem:[#allocation13 + $0x78] sm:$0xff]
          %v1665 = vld [vmem:[#allocation13 + $0x80] sm:$0xff]
          %v1666 = vld [vmem:[#allocation13 + $0x88] sm:$0xff]
          %v1667 = vld [vmem:[#allocation13 + $0x90] sm:$0xff]
          %v1668 = vld [vmem:[#allocation13 + $0x98] sm:$0xff]
          %v1669 = vld [vmem:[#allocation13 + $0xa0] sm:$0xff]
          %v1670 = vld [vmem:[#allocation13 + $0xa8] sm:$0xff]
          %v1671 = vld [vmem:[#allocation13 + $0xb0] sm:$0xff]
          %v1672 = vld [vmem:[#allocation13 + $0xb8] sm:$0xff]
          %v1673 = vld [vmem:[#allocation13 + $0xc0] sm:$0xff]
          %v1674 = vld [vmem:[#allocation13 + $0xc8] sm:$0xff]
          %v1675 = vld [vmem:[#allocation13 + $0xd0] sm:$0xff]
          %v1676 = vld [vmem:[#allocation13 + $0xd8] sm:$0xff]
          %v1677 = vld [vmem:[#allocation13 + $0xe0] sm:$0xff]
          %v1678 = vld [vmem:[#allocation13 + $0xe8] sm:$0xff]
          %v1679 = vld [vmem:[#allocation13 + $0xf0] sm:$0xff]
          %v1680 = vld [vmem:[#allocation13 + $0xf8] sm:$0xff]
          %v1681 = vld [vmem:[#allocation13 + $0x100] sm:$0xff]
          %v1682 = vld [vmem:[#allocation13 + $0x108] sm:$0xff]
          %v1683 = vld [vmem:[#allocation13 + $0x110] sm:$0xff]
          %v1684 = vld [vmem:[#allocation13 + $0x118] sm:$0xff]
          %v1685 = vld [vmem:[#allocation13 + $0x120] sm:$0xff]
          %v1686 = vld [vmem:[#allocation13 + $0x128] sm:$0xff]
          %v1687 = vld [vmem:[#allocation13 + $0x130] sm:$0xff]
          %v1688 = vld [vmem:[#allocation13 + $0x138] sm:$0xff]
          %v1689 = vld [vmem:[#allocation13 + $0x140] sm:$0xff]
          %v1690 = vld [vmem:[#allocation13 + $0x148] sm:$0xff]
          %v1691 = vld [vmem:[#allocation13 + $0x150] sm:$0xff]
          %v1692 = vld [vmem:[#allocation13 + $0x158] sm:$0xff]
          %v1693 = vld [vmem:[#allocation13 + $0x160] sm:$0xff]
          %v1694 = vld [vmem:[#allocation13 + $0x168] sm:$0xff]
          %v1695 = vld [vmem:[#allocation13 + $0x170] sm:$0xff]
          %v1696 = vld [vmem:[#allocation13 + $0x178] sm:$0xff]
          %v1697 = vld [vmem:[#allocation13 + $0x180] sm:$0xff]
          %v1698 = vld [vmem:[#allocation13 + $0x188] sm:$0xff]
          %v1699 = vld [vmem:[#allocation13 + $0x190] sm:$0xff]
          %v1700 = vld [vmem:[#allocation13 + $0x198] sm:$0xff]
          %v1701 = vld [vmem:[#allocation13 + $0x1a0] sm:$0xff]
          %v1702 = vld [vmem:[#allocation13 + $0x1a8] sm:$0xff]
          %v1703 = vld [vmem:[#allocation13 + $0x1b0] sm:$0xff]
          %v1704 = vld [vmem:[#allocation13 + $0x1b8] sm:$0xff]
          %v1705 = vld [vmem:[#allocation13 + $0x1c0] sm:$0xff]
          %v1706 = vld [vmem:[#allocation13 + $0x1c8] sm:$0xff]
          %v1707 = vld [vmem:[#allocation13 + $0x1d0] sm:$0xff]
          %v1708 = vld [vmem:[#allocation13 + $0x1d8] sm:$0xff]
          %v1709 = vld [vmem:[#allocation13 + $0x1e0] sm:$0xff]
          %v1710 = vld [vmem:[#allocation13 + $0x1e8] sm:$0xff]
          %v1711 = vld [vmem:[#allocation13 + $0x1f0] sm:$0xff]
          %v1712 = vld [vmem:[#allocation13 + $0x1f8] sm:$0xff]
          %v1713 = vld [vmem:[#allocation22] sm:$0x3]
          %v1715 = vlaneseq
          %v1716 = vshrl.u32 %v1715, 7
          %v1717 = vsub.s32 0, %v1716
          %v1718 = vrot.slane %v1713, %v1717
          %v1719 = vlaneseq
          %v1720 = vshrl.u32 %v1719, 7
          %v1721 = vsub.s32 1, %v1720
          %v1722 = vrot.slane %v1713, %v1721
          %v1789 = vunpack.c.l.b16 %v1649
          %v1790 = vunpack.c.h.b16 %v1649
          %v1791 = vunpack.c.l.b16 %v1650
          %v1792 = vunpack.c.h.b16 %v1650
          %v1793 = vunpack.c.l.b16 %v1651
          %v1794 = vunpack.c.h.b16 %v1651
          %v1795 = vunpack.c.l.b16 %v1652
          %v1796 = vunpack.c.h.b16 %v1652
          %v1797 = vunpack.c.l.b16 %v1653
          %v1798 = vunpack.c.h.b16 %v1653
          %v1799 = vunpack.c.l.b16 %v1654
          %v1800 = vunpack.c.h.b16 %v1654
          %v1801 = vunpack.c.l.b16 %v1655
          %v1802 = vunpack.c.h.b16 %v1655
          %v1803 = vunpack.c.l.b16 %v1656
          %v1804 = vunpack.c.h.b16 %v1656
          %v1805 = vunpack.c.l.b16 %v1657
          %v1806 = vunpack.c.h.b16 %v1657
          %v1807 = vunpack.c.l.b16 %v1658
          %v1808 = vunpack.c.h.b16 %v1658
          %v1809 = vunpack.c.l.b16 %v1659
          %v1810 = vunpack.c.h.b16 %v1659
          %v1811 = vunpack.c.l.b16 %v1660
          %v1812 = vunpack.c.h.b16 %v1660
          %v1813 = vunpack.c.l.b16 %v1661
          %v1814 = vunpack.c.h.b16 %v1661
          %v1815 = vunpack.c.l.b16 %v1662
          %v1816 = vunpack.c.h.b16 %v1662
          %v1817 = vunpack.c.l.b16 %v1663
          %v1818 = vunpack.c.h.b16 %v1663
          %v1819 = vunpack.c.l.b16 %v1664
          %v1820 = vunpack.c.h.b16 %v1664
          %v1821 = vunpack.c.l.b16 %v1665
          %v1822 = vunpack.c.h.b16 %v1665
          %v1823 = vunpack.c.l.b16 %v1666
          %v1824 = vunpack.c.h.b16 %v1666
          %v1825 = vunpack.c.l.b16 %v1667
          %v1826 = vunpack.c.h.b16 %v1667
          %v1827 = vunpack.c.l.b16 %v1668
          %v1828 = vunpack.c.h.b16 %v1668
          %v1829 = vunpack.c.l.b16 %v1669
          %v1830 = vunpack.c.h.b16 %v1669
          %v1831 = vunpack.c.l.b16 %v1670
          %v1832 = vunpack.c.h.b16 %v1670
          %v1833 = vunpack.c.l.b16 %v1671
          %v1834 = vunpack.c.h.b16 %v1671
          %v1835 = vunpack.c.l.b16 %v1672
          %v1836 = vunpack.c.h.b16 %v1672
          %v1837 = vunpack.c.l.b16 %v1673
          %v1838 = vunpack.c.h.b16 %v1673
          %v1839 = vunpack.c.l.b16 %v1674
          %v1840 = vunpack.c.h.b16 %v1674
          %v1841 = vunpack.c.l.b16 %v1675
          %v1842 = vunpack.c.h.b16 %v1675
          %v1843 = vunpack.c.l.b16 %v1676
          %v1844 = vunpack.c.h.b16 %v1676
          %v1845 = vunpack.c.l.b16 %v1677
          %v1846 = vunpack.c.h.b16 %v1677
          %v1847 = vunpack.c.l.b16 %v1678
          %v1848 = vunpack.c.h.b16 %v1678
          %v1849 = vunpack.c.l.b16 %v1679
          %v1850 = vunpack.c.h.b16 %v1679
          %v1851 = vunpack.c.l.b16 %v1680
          %v1852 = vunpack.c.h.b16 %v1680
          %v1853 = vunpack.c.l.b16 %v1681
          %v1854 = vunpack.c.h.b16 %v1681
          %v1855 = vunpack.c.l.b16 %v1682
          %v1856 = vunpack.c.h.b16 %v1682
          %v1857 = vunpack.c.l.b16 %v1683
          %v1858 = vunpack.c.h.b16 %v1683
          %v1859 = vunpack.c.l.b16 %v1684
          %v1860 = vunpack.c.h.b16 %v1684
          %v1861 = vunpack.c.l.b16 %v1685
          %v1862 = vunpack.c.h.b16 %v1685
          %v1863 = vunpack.c.l.b16 %v1686
          %v1864 = vunpack.c.h.b16 %v1686
          %v1865 = vunpack.c.l.b16 %v1687
          %v1866 = vunpack.c.h.b16 %v1687
          %v1867 = vunpack.c.l.b16 %v1688
          %v1868 = vunpack.c.h.b16 %v1688
          %v1869 = vunpack.c.l.b16 %v1689
          %v1870 = vunpack.c.h.b16 %v1689
          %v1871 = vunpack.c.l.b16 %v1690
          %v1872 = vunpack.c.h.b16 %v1690
          %v1873 = vunpack.c.l.b16 %v1691
          %v1874 = vunpack.c.h.b16 %v1691
          %v1875 = vunpack.c.l.b16 %v1692
          %v1876 = vunpack.c.h.b16 %v1692
          %v1877 = vunpack.c.l.b16 %v1693
          %v1878 = vunpack.c.h.b16 %v1693
          %v1879 = vunpack.c.l.b16 %v1694
          %v1880 = vunpack.c.h.b16 %v1694
          %v1881 = vunpack.c.l.b16 %v1695
          %v1882 = vunpack.c.h.b16 %v1695
          %v1883 = vunpack.c.l.b16 %v1696
          %v1884 = vunpack.c.h.b16 %v1696
          %v1885 = vunpack.c.l.b16 %v1697
          %v1886 = vunpack.c.h.b16 %v1697
          %v1887 = vunpack.c.l.b16 %v1698
          %v1888 = vunpack.c.h.b16 %v1698
          %v1889 = vunpack.c.l.b16 %v1699
          %v1890 = vunpack.c.h.b16 %v1699
          %v1891 = vunpack.c.l.b16 %v1700
          %v1892 = vunpack.c.h.b16 %v1700
          %v1893 = vunpack.c.l.b16 %v1701
          %v1894 = vunpack.c.h.b16 %v1701
          %v1895 = vunpack.c.l.b16 %v1702
          %v1896 = vunpack.c.h.b16 %v1702
          %v1897 = vunpack.c.l.b16 %v1703
          %v1898 = vunpack.c.h.b16 %v1703
          %v1899 = vunpack.c.l.b16 %v1704
          %v1900 = vunpack.c.h.b16 %v1704
          %v1901 = vunpack.c.l.b16 %v1705
          %v1902 = vunpack.c.h.b16 %v1705
          %v1903 = vunpack.c.l.b16 %v1706
          %v1904 = vunpack.c.h.b16 %v1706
          %v1905 = vunpack.c.l.b16 %v1707
          %v1906 = vunpack.c.h.b16 %v1707
          %v1907 = vunpack.c.l.b16 %v1708
          %v1908 = vunpack.c.h.b16 %v1708
          %v1909 = vunpack.c.l.b16 %v1709
          %v1910 = vunpack.c.h.b16 %v1709
          %v1911 = vunpack.c.l.b16 %v1710
          %v1912 = vunpack.c.h.b16 %v1710
          %v1913 = vunpack.c.l.b16 %v1711
          %v1914 = vunpack.c.h.b16 %v1711
          %v1915 = vunpack.c.l.b16 %v1712
          %v1916 = vunpack.c.h.b16 %v1712
          %v1917 = vpack.c.b16 %v1791, %v1789
          %v1918 = vpack.c.b16 %v1792, %v1790
          %v1919 = vpack.c.b16 %v1795, %v1793
          %v1920 = vpack.c.b16 %v1796, %v1794
          %v1921 = vpack.c.b16 %v1799, %v1797
          %v1922 = vpack.c.b16 %v1800, %v1798
          %v1923 = vpack.c.b16 %v1803, %v1801
          %v1924 = vpack.c.b16 %v1804, %v1802
          %v1925 = vpack.c.b16 %v1807, %v1805
          %v1926 = vpack.c.b16 %v1808, %v1806
          %v1927 = vpack.c.b16 %v1811, %v1809
          %v1928 = vpack.c.b16 %v1812, %v1810
          %v1929 = vpack.c.b16 %v1815, %v1813
          %v1930 = vpack.c.b16 %v1816, %v1814
          %v1931 = vpack.c.b16 %v1819, %v1817
          %v1932 = vpack.c.b16 %v1820, %v1818
          %v1933 = vpack.c.b16 %v1823, %v1821
          %v1934 = vpack.c.b16 %v1824, %v1822
          %v1935 = vpack.c.b16 %v1827, %v1825
          %v1936 = vpack.c.b16 %v1828, %v1826
          %v1937 = vpack.c.b16 %v1831, %v1829
          %v1938 = vpack.c.b16 %v1832, %v1830
          %v1939 = vpack.c.b16 %v1835, %v1833
          %v1940 = vpack.c.b16 %v1836, %v1834
          %v1941 = vpack.c.b16 %v1839, %v1837
          %v1942 = vpack.c.b16 %v1840, %v1838
          %v1943 = vpack.c.b16 %v1843, %v1841
          %v1944 = vpack.c.b16 %v1844, %v1842
          %v1945 = vpack.c.b16 %v1847, %v1845
          %v1946 = vpack.c.b16 %v1848, %v1846
          %v1947 = vpack.c.b16 %v1851, %v1849
          %v1948 = vpack.c.b16 %v1852, %v1850
          %v1949 = vpack.c.b16 %v1855, %v1853
          %v1950 = vpack.c.b16 %v1856, %v1854
          %v1951 = vpack.c.b16 %v1859, %v1857
          %v1952 = vpack.c.b16 %v1860, %v1858
          %v1953 = vpack.c.b16 %v1863, %v1861
          %v1954 = vpack.c.b16 %v1864, %v1862
          %v1955 = vpack.c.b16 %v1867, %v1865
          %v1956 = vpack.c.b16 %v1868, %v1866
          %v1957 = vpack.c.b16 %v1871, %v1869
          %v1958 = vpack.c.b16 %v1872, %v1870
          %v1959 = vpack.c.b16 %v1875, %v1873
          %v1960 = vpack.c.b16 %v1876, %v1874
          %v1961 = vpack.c.b16 %v1879, %v1877
          %v1962 = vpack.c.b16 %v1880, %v1878
          %v1963 = vpack.c.b16 %v1883, %v1881
          %v1964 = vpack.c.b16 %v1884, %v1882
          %v1965 = vpack.c.b16 %v1887, %v1885
          %v1966 = vpack.c.b16 %v1888, %v1886
          %v1967 = vpack.c.b16 %v1891, %v1889
          %v1968 = vpack.c.b16 %v1892, %v1890
          %v1969 = vpack.c.b16 %v1895, %v1893
          %v1970 = vpack.c.b16 %v1896, %v1894
          %v1971 = vpack.c.b16 %v1899, %v1897
          %v1972 = vpack.c.b16 %v1900, %v1898
          %v1973 = vpack.c.b16 %v1903, %v1901
          %v1974 = vpack.c.b16 %v1904, %v1902
          %v1975 = vpack.c.b16 %v1907, %v1905
          %v1976 = vpack.c.b16 %v1908, %v1906
          %v1977 = vpack.c.b16 %v1911, %v1909
          %v1978 = vpack.c.b16 %v1912, %v1910
          %v1979 = vpack.c.b16 %v1915, %v1913
          %v1980 = vpack.c.b16 %v1916, %v1914
          %2045 = vmatprep.subr.bf16.mxu0 %v1918
          %2046 = vmatpush1.bf16.msra.mxu0 %v1917
          %2047 = vmatprep.subr.bf16.mxu0 %v1920
          %2048 = vmatpush1.bf16.msra.mxu0 %v1919
          %2049 = vmatprep.subr.bf16.mxu0 %v1922
          %2050 = vmatpush1.bf16.msra.mxu0 %v1921
          %2051 = vmatprep.subr.bf16.mxu0 %v1924
          %2052 = vmatpush1.bf16.msra.mxu0 %v1923
          %2053 = vmatprep.subr.bf16.mxu0 %v1926
          %2054 = vmatpush1.bf16.msra.mxu0 %v1925
          %2055 = vmatprep.subr.bf16.mxu0 %v1928
          %2056 = vmatpush1.bf16.msra.mxu0 %v1927
          %2057 = vmatprep.subr.bf16.mxu0 %v1930
          %2058 = vmatpush1.bf16.msra.mxu0 %v1929
          %2059 = vmatprep.subr.bf16.mxu0 %v1932
          %2060 = vmatpush1.bf16.msra.mxu0 %v1931
          %2061 = vmatprep.subr.bf16.mxu0 %v1934
          %2062 = vmatpush1.bf16.msra.mxu0 %v1933
          %2063 = vmatprep.subr.bf16.mxu0 %v1936
          %2064 = vmatpush1.bf16.msra.mxu0 %v1935
          %2065 = vmatprep.subr.bf16.mxu0 %v1938
          %2066 = vmatpush1.bf16.msra.mxu0 %v1937
          %2067 = vmatprep.subr.bf16.mxu0 %v1940
          %2068 = vmatpush1.bf16.msra.mxu0 %v1939
          %2069 = vmatprep.subr.bf16.mxu0 %v1942
          %2070 = vmatpush1.bf16.msra.mxu0 %v1941
          %2071 = vmatprep.subr.bf16.mxu0 %v1944
          %2072 = vmatpush1.bf16.msra.mxu0 %v1943
          %2073 = vmatprep.subr.bf16.mxu0 %v1946
          %2074 = vmatpush1.bf16.msra.mxu0 %v1945
          %2075 = vmatprep.subr.bf16.mxu0 %v1948
          %2076 = vmatpush1.bf16.msra.mxu0 %v1947
          %2077 = vmatprep.mubr.bf16.mxu0 %v1646
          %2078 = vmatmul.mubr.bf16.gmra.mrb[0].mxu0 %v1645
          %v2079 = vpop.f32.mrb[0].mxu0
          %v2080 = vadd.f32 %v1718, %v2079
          %v2081 = vpop.f32.mrb[0].mxu0
          %v2082 = vadd.f32 %v1722, %v2081
          %v2083 = vpop.f32.mrb[0].mxu0
          %v2084 = vpop.f32.mrb[0].mxu0
          %2085 = vdwg.mxu0
          %2086 = vmatprep.subr.bf16.mxu0 %v1950
          %2087 = vmatpush1.bf16.msra.mxu0 %v1949
          %2088 = vmatprep.subr.bf16.mxu0 %v1952
          %2089 = vmatpush1.bf16.msra.mxu0 %v1951
          %2090 = vmatprep.subr.bf16.mxu0 %v1954
          %2091 = vmatpush1.bf16.msra.mxu0 %v1953
          %2092 = vmatprep.subr.bf16.mxu0 %v1956
          %2093 = vmatpush1.bf16.msra.mxu0 %v1955
          %2094 = vmatprep.subr.bf16.mxu0 %v1958
          %2095 = vmatpush1.bf16.msra.mxu0 %v1957
          %2096 = vmatprep.subr.bf16.mxu0 %v1960
          %2097 = vmatpush1.bf16.msra.mxu0 %v1959
          %2098 = vmatprep.subr.bf16.mxu0 %v1962
          %2099 = vmatpush1.bf16.msra.mxu0 %v1961
          %2100 = vmatprep.subr.bf16.mxu0 %v1964
          %2101 = vmatpush1.bf16.msra.mxu0 %v1963
          %2102 = vmatprep.subr.bf16.mxu0 %v1966
          %2103 = vmatpush1.bf16.msra.mxu0 %v1965
          %2104 = vmatprep.subr.bf16.mxu0 %v1968
          %2105 = vmatpush1.bf16.msra.mxu0 %v1967
          %2106 = vmatprep.subr.bf16.mxu0 %v1970
          %2107 = vmatpush1.bf16.msra.mxu0 %v1969
          %2108 = vmatprep.subr.bf16.mxu0 %v1972
          %2109 = vmatpush1.bf16.msra.mxu0 %v1971
          %2110 = vmatprep.subr.bf16.mxu0 %v1974
          %2111 = vmatpush1.bf16.msra.mxu0 %v1973
          %2112 = vmatprep.subr.bf16.mxu0 %v1976
          %2113 = vmatpush1.bf16.msra.mxu0 %v1975
          %2114 = vmatprep.subr.bf16.mxu0 %v1978
          %2115 = vmatpush1.bf16.msra.mxu0 %v1977
          %2116 = vmatprep.subr.bf16.mxu0 %v1980
          %2117 = vmatpush1.bf16.msra.mxu0 %v1979
          %2118 = vmatprep.mubr.bf16.mxu0 %v1648
          %2119 = vmatmul.mubr.bf16.gmra.mrb[0].mxu0 %v1647
          %v2120 = vpop.f32.mrb[0].mxu0
          %v2121 = vadd.f32 %v2080, %v2120
          %v2122 = vpop.f32.mrb[0].mxu0
          %v2123 = vadd.f32 %v2082, %v2122
          %v2124 = vpop.f32.mrb[0].mxu0
          %v2125 = vpop.f32.mrb[0].mxu0
          %2126 = vdwg.mxu0
          %s2127 = sld [smem:[#allocation4 + $0x4]]
          %vm2128 = vcmp.ge.f32.partialorder %v2121, 0.0
          %vm2129 = vcmp.ge.f32.partialorder %v2123, 0.0
          %v2130 = vstv %s2127
          %v2131 = vmul.f32 %v2130, %v2121
          %v2132 = vmul.f32 %v2130, %v2123
          %v2133 = vsel %vm2128, %v2121, %v2131
          %v2134 = vsel %vm2129, %v2123, %v2132
          %v2135 = vpack.c.bf16 %v2133, %v2133
          %v2136 = vpack.c.bf16 %v2134, %v2134
          %v2137 = vld [vmem:[#allocation14] sm:$0xf]
          %v2138 = vld [vmem:[#allocation14 + $0x4] sm:$0xf]
          %v2139 = vld [vmem:[#allocation14 + $0x8] sm:$0xf]
          %v2140 = vld [vmem:[#allocation14 + $0xc] sm:$0xf]
          %v2141 = vld [vmem:[#allocation14 + $0x10] sm:$0xf]
          %v2142 = vld [vmem:[#allocation14 + $0x14] sm:$0xf]
          %v2143 = vld [vmem:[#allocation14 + $0x18] sm:$0xf]
          %v2144 = vld [vmem:[#allocation14 + $0x1c] sm:$0xf]
          %v2145 = vld [vmem:[#allocation14 + $0x20] sm:$0xf]
          %v2146 = vld [vmem:[#allocation14 + $0x24] sm:$0xf]
          %v2147 = vld [vmem:[#allocation14 + $0x28] sm:$0xf]
          %v2148 = vld [vmem:[#allocation14 + $0x2c] sm:$0xf]
          %v2149 = vld [vmem:[#allocation14 + $0x30] sm:$0xf]
          %v2150 = vld [vmem:[#allocation14 + $0x34] sm:$0xf]
          %v2151 = vld [vmem:[#allocation14 + $0x38] sm:$0xf]
          %v2152 = vld [vmem:[#allocation14 + $0x3c] sm:$0xf]
          %v2153 = vld [vmem:[#allocation14 + $0x40] sm:$0xf]
          %v2154 = vld [vmem:[#allocation14 + $0x44] sm:$0xf]
          %v2155 = vld [vmem:[#allocation14 + $0x48] sm:$0xf]
          %v2156 = vld [vmem:[#allocation14 + $0x4c] sm:$0xf]
          %v2157 = vld [vmem:[#allocation14 + $0x50] sm:$0xf]
          %v2158 = vld [vmem:[#allocation14 + $0x54] sm:$0xf]
          %v2159 = vld [vmem:[#allocation14 + $0x58] sm:$0xf]
          %v2160 = vld [vmem:[#allocation14 + $0x5c] sm:$0xf]
          %v2161 = vld [vmem:[#allocation14 + $0x60] sm:$0xf]
          %v2162 = vld [vmem:[#allocation14 + $0x64] sm:$0xf]
          %v2163 = vld [vmem:[#allocation14 + $0x68] sm:$0xf]
          %v2164 = vld [vmem:[#allocation14 + $0x6c] sm:$0xf]
          %v2165 = vld [vmem:[#allocation14 + $0x70] sm:$0xf]
          %v2166 = vld [vmem:[#allocation14 + $0x74] sm:$0xf]
          %v2167 = vld [vmem:[#allocation14 + $0x78] sm:$0xf]
          %v2168 = vld [vmem:[#allocation14 + $0x7c] sm:$0xf]
          %v2169 = vld [vmem:[#allocation23] sm:$0x1]
          %v2171 = vlaneseq
          %v2172 = vshrl.u32 %v2171, 7
          %v2173 = vsub.s32 0, %v2172
          %v2174 = vrot.slane %v2169, %v2173
          %v2208 = vunpack.c.l.b16 %v2137
          %v2209 = vunpack.c.l.b16 %v2138
          %v2210 = vunpack.c.l.b16 %v2139
          %v2211 = vunpack.c.l.b16 %v2140
          %v2212 = vunpack.c.l.b16 %v2141
          %v2213 = vunpack.c.l.b16 %v2142
          %v2214 = vunpack.c.l.b16 %v2143
          %v2215 = vunpack.c.l.b16 %v2144
          %v2216 = vunpack.c.l.b16 %v2145
          %v2217 = vunpack.c.l.b16 %v2146
          %v2218 = vunpack.c.l.b16 %v2147
          %v2219 = vunpack.c.l.b16 %v2148
          %v2220 = vunpack.c.l.b16 %v2149
          %v2221 = vunpack.c.l.b16 %v2150
          %v2222 = vunpack.c.l.b16 %v2151
          %v2223 = vunpack.c.l.b16 %v2152
          %v2224 = vunpack.c.l.b16 %v2153
          %v2225 = vunpack.c.l.b16 %v2154
          %v2226 = vunpack.c.l.b16 %v2155
          %v2227 = vunpack.c.l.b16 %v2156
          %v2228 = vunpack.c.l.b16 %v2157
          %v2229 = vunpack.c.l.b16 %v2158
          %v2230 = vunpack.c.l.b16 %v2159
          %v2231 = vunpack.c.l.b16 %v2160
          %v2232 = vunpack.c.l.b16 %v2161
          %v2233 = vunpack.c.l.b16 %v2162
          %v2234 = vunpack.c.l.b16 %v2163
          %v2235 = vunpack.c.l.b16 %v2164
          %v2236 = vunpack.c.l.b16 %v2165
          %v2237 = vunpack.c.l.b16 %v2166
          %v2238 = vunpack.c.l.b16 %v2167
          %v2239 = vunpack.c.l.b16 %v2168
          %v2240 = vpack.c.b16 %v2209, %v2208
          %v2241 = vpack.c.b16 %v2211, %v2210
          %v2242 = vpack.c.b16 %v2213, %v2212
          %v2243 = vpack.c.b16 %v2215, %v2214
          %v2244 = vpack.c.b16 %v2217, %v2216
          %v2245 = vpack.c.b16 %v2219, %v2218
          %v2246 = vpack.c.b16 %v2221, %v2220
          %v2247 = vpack.c.b16 %v2223, %v2222
          %v2248 = vpack.c.b16 %v2225, %v2224
          %v2249 = vpack.c.b16 %v2227, %v2226
          %v2250 = vpack.c.b16 %v2229, %v2228
          %v2251 = vpack.c.b16 %v2231, %v2230
          %v2252 = vpack.c.b16 %v2233, %v2232
          %v2253 = vpack.c.b16 %v2235, %v2234
          %v2254 = vpack.c.b16 %v2237, %v2236
          %v2255 = vpack.c.b16 %v2239, %v2238
          %2272 = vmatprep.subr.bf16.mxu0 0
          %2273 = vmatpush1.bf16.msra.mxu0 %v2240
          %2274 = vmatprep.subr.bf16.mxu0 0
          %2275 = vmatpush1.bf16.msra.mxu0 %v2241
          %2276 = vmatprep.subr.bf16.mxu0 0
          %2277 = vmatpush1.bf16.msra.mxu0 %v2242
          %2278 = vmatprep.subr.bf16.mxu0 0
          %2279 = vmatpush1.bf16.msra.mxu0 %v2243
          %2280 = vmatprep.subr.bf16.mxu0 0
          %2281 = vmatpush1.bf16.msra.mxu0 %v2244
          %2282 = vmatprep.subr.bf16.mxu0 0
          %2283 = vmatpush1.bf16.msra.mxu0 %v2245
          %2284 = vmatprep.subr.bf16.mxu0 0
          %2285 = vmatpush1.bf16.msra.mxu0 %v2246
          %2286 = vmatprep.subr.bf16.mxu0 0
          %2287 = vmatpush1.bf16.msra.mxu0 %v2247
          %2288 = vmatprep.subr.bf16.mxu0 0
          %2289 = vmatpush1.bf16.msra.mxu0 %v2248
          %2290 = vmatprep.subr.bf16.mxu0 0
          %2291 = vmatpush1.bf16.msra.mxu0 %v2249
          %2292 = vmatprep.subr.bf16.mxu0 0
          %2293 = vmatpush1.bf16.msra.mxu0 %v2250
          %2294 = vmatprep.subr.bf16.mxu0 0
          %2295 = vmatpush1.bf16.msra.mxu0 %v2251
          %2296 = vmatprep.subr.bf16.mxu0 0
          %2297 = vmatpush1.bf16.msra.mxu0 %v2252
          %2298 = vmatprep.subr.bf16.mxu0 0
          %2299 = vmatpush1.bf16.msra.mxu0 %v2253
          %2300 = vmatprep.subr.bf16.mxu0 0
          %2301 = vmatpush1.bf16.msra.mxu0 %v2254
          %2302 = vmatprep.subr.bf16.mxu0 0
          %2303 = vmatpush1.bf16.msra.mxu0 %v2255
          %2304 = vmatprep.mubr.bf16.mxu0 %v2136
          %2305 = vmatmul.mubr.bf16.gmra.mrb[0].mxu0 %v2135
          %v2306 = vpop.f32.mrb[0].mxu0
          %v2307 = vadd.f32 %v2174, %v2306
          %v2308 = vpop.f32.mrb[0].mxu0
          %v2309 = vpop.f32.mrb[0].mxu0
          %v2310 = vpop.f32.mrb[0].mxu0
          %2311 = vdwg.mxu0
          %s2312 = sld [smem:[#allocation4 + $0x5]]
          %vm2313 = vcmp.ge.f32.partialorder %v2307, 0.0
          %v2314 = vstv %s2312
          %v2315 = vmul.f32 %v2314, %v2307
          %v2316 = vsel %vm2313, %v2307, %v2315
          %v2317 = vpack.c.bf16 %v2316, %v2316
          %v2318 = vld [vmem:[%s8] sm:$0xf]
          %v2319 = vld [vmem:[%s8 + $0x4] sm:$0xf]
          %v2320 = vld [vmem:[%s8 + $0x8] sm:$0xf]
          %v2321 = vld [vmem:[%s8 + $0xc] sm:$0xf]
          %v2322 = vld [vmem:[%s8 + $0x10] sm:$0xf]
          %v2323 = vld [vmem:[%s8 + $0x14] sm:$0xf]
          %v2324 = vld [vmem:[%s8 + $0x18] sm:$0xf]
          %v2325 = vld [vmem:[%s8 + $0x1c] sm:$0xf]
          %v2326 = vld [vmem:[%s8 + $0x20] sm:$0xf]
          %v2327 = vld [vmem:[%s8 + $0x24] sm:$0xf]
          %v2328 = vld [vmem:[%s8 + $0x28] sm:$0xf]
          %v2329 = vld [vmem:[%s8 + $0x2c] sm:$0xf]
          %v2330 = vld [vmem:[%s8 + $0x30] sm:$0xf]
          %v2331 = vld [vmem:[%s8 + $0x34] sm:$0xf]
          %v2332 = vld [vmem:[%s8 + $0x38] sm:$0xf]
          %v2333 = vld [vmem:[%s8 + $0x3c] sm:$0xf]
          %v2334 = vld [vmem:[#allocation25] sm:$0x1]
          %v2336 = vlaneseq
          %v2337 = vshrl.u32 %v2336, 7
          %v2338 = vsub.s32 0, %v2337
          %v2339 = vrot.slane %v2334, %v2338
          %v2357 = vunpack.c.l.b16 %v2318
          %v2358 = vunpack.c.l.b16 %v2319
          %v2359 = vunpack.c.l.b16 %v2320
          %v2360 = vunpack.c.l.b16 %v2321
          %v2361 = vunpack.c.l.b16 %v2322
          %v2362 = vunpack.c.l.b16 %v2323
          %v2363 = vunpack.c.l.b16 %v2324
          %v2364 = vunpack.c.l.b16 %v2325
          %v2365 = vunpack.c.l.b16 %v2326
          %v2366 = vunpack.c.l.b16 %v2327
          %v2367 = vunpack.c.l.b16 %v2328
          %v2368 = vunpack.c.l.b16 %v2329
          %v2369 = vunpack.c.l.b16 %v2330
          %v2370 = vunpack.c.l.b16 %v2331
          %v2371 = vunpack.c.l.b16 %v2332
          %v2372 = vunpack.c.l.b16 %v2333
          %v2373 = vpack.c.b16 %v2358, %v2357
          %v2374 = vpack.c.b16 %v2360, %v2359
          %v2375 = vpack.c.b16 %v2362, %v2361
          %v2376 = vpack.c.b16 %v2364, %v2363
          %v2377 = vpack.c.b16 %v2366, %v2365
          %v2378 = vpack.c.b16 %v2368, %v2367
          %v2379 = vpack.c.b16 %v2370, %v2369
          %v2380 = vpack.c.b16 %v2372, %v2371
          %2389 = vmatprep.subr.bf16.mxu0 0
          %2390 = vmatpush1.bf16.msra.mxu0 %v2373
          %2391 = vmatprep.subr.bf16.mxu0 0
          %2392 = vmatpush1.bf16.msra.mxu0 %v2374
          %2393 = vmatprep.subr.bf16.mxu0 0
          %2394 = vmatpush1.bf16.msra.mxu0 %v2375
          %2395 = vmatprep.subr.bf16.mxu0 0
          %2396 = vmatpush1.bf16.msra.mxu0 %v2376
          %2397 = vmatprep.subr.bf16.mxu0 0
          %2398 = vmatpush1.bf16.msra.mxu0 %v2377
          %2399 = vmatprep.subr.bf16.mxu0 0
          %2400 = vmatpush1.bf16.msra.mxu0 %v2378
          %2401 = vmatprep.subr.bf16.mxu0 0
          %2402 = vmatpush1.bf16.msra.mxu0 %v2379
          %2403 = vmatprep.subr.bf16.mxu0 0
          %2404 = vmatpush1.bf16.msra.mxu0 %v2380
          %2405 = vmatprep.subr.bf16.mxu0 0
          %2406 = vmatpush1.bf16.msra.mxu0 0
          %2407 = vmatprep.subr.bf16.mxu0 0
          %2408 = vmatpush1.bf16.msra.mxu0 0
          %2409 = vmatprep.subr.bf16.mxu0 0
          %2410 = vmatpush1.bf16.msra.mxu0 0
          %2411 = vmatprep.subr.bf16.mxu0 0
          %2412 = vmatpush1.bf16.msra.mxu0 0
          %2413 = vmatprep.subr.bf16.mxu0 0
          %2414 = vmatpush1.bf16.msra.mxu0 0
          %2415 = vmatprep.subr.bf16.mxu0 0
          %2416 = vmatpush1.bf16.msra.mxu0 0
          %2417 = vmatprep.subr.bf16.mxu0 0
          %2418 = vmatpush1.bf16.msra.mxu0 0
          %2419 = vmatprep.subr.bf16.mxu0 0
          %2420 = vmatpush1.bf16.msra.mxu0 0
          %2421 = vmatprep.mubr.bf16.mxu0 0
          %2422 = vmatmul.mubr.bf16.gmra.mrb[0].mxu0 %v2317
          %v2423 = vpop.f32.mrb[0].mxu0
          %v2424 = vadd.f32 %v2339, %v2423
          %v2425 = vpop.f32.mrb[0].mxu0
          %v2426 = vpop.f32.mrb[0].mxu0
          %v2427 = vpop.f32.mrb[0].mxu0
          %2428 = vdwg.mxu0
          %s2429 = sld [smem:[#allocation4 + $0x6]]
          %vm2430 = vcmp.ge.f32.partialorder %v2424, 0.0
          %v2431 = vstv %s2429
          %v2432 = vmul.f32 %v2431, %v2424
          %v2433 = vsel %vm2430, %v2424, %v2432
          %v2434 = vpack.c.bf16 %v2433, %v2433
          %vm2435 = vcmask 519168
          %2436 = vst.msk [vmem:[#allocation2] sm:$0xf] %vm2435, %v2434
        $region152: #{tpu_custom_call.1} parent=87 // pred_fallthru
          _
        %v2437 = vld [vmem:[#allocation2] sm:$0xf]
        %v2438 = vld [vmem:[%s715] sm:$0xff]
        %v2439 = vld [vmem:[%s715 + $0x8] sm:$0xff]
        %v2440 = vld [vmem:[%s715 + $0x10] sm:$0xff]
        %v2441 = vld [vmem:[%s715 + $0x18] sm:$0xff]
        %v2442 = vld [vmem:[%s715 + $0x20] sm:$0xff]
        %v2443 = vld [vmem:[%s715 + $0x28] sm:$0xff]
        %v2444 = vld [vmem:[%s715 + $0x30] sm:$0xff]
        %v2445 = vld [vmem:[%s715 + $0x38] sm:$0xff]
        %v2446 = vld [vmem:[%s715 + $0x40] sm:$0xff]
        %v2447 = vld [vmem:[%s715 + $0x48] sm:$0xff]
        %v2448 = vld [vmem:[%s715 + $0x50] sm:$0xff]
        %v2449 = vld [vmem:[%s715 + $0x58] sm:$0xff]
        %v2450 = vld [vmem:[%s715 + $0x60] sm:$0xff]
        %v2451 = vld [vmem:[%s715 + $0x68] sm:$0xff]
        %v2452 = vld [vmem:[%s715 + $0x70] sm:$0xff]
        %v2453 = vld [vmem:[%s715 + $0x78] sm:$0xff]
        %v2454 = vld [vmem:[%s715 + $0x80] sm:$0xff]
        %v2455 = vld [vmem:[%s715 + $0x88] sm:$0xff]
        %v2456 = vld [vmem:[%s715 + $0x90] sm:$0xff]
        %v2457 = vld [vmem:[%s715 + $0x98] sm:$0xff]
        %v2458 = vld [vmem:[%s715 + $0xa0] sm:$0xff]
        %v2459 = vld [vmem:[%s715 + $0xa8] sm:$0xff]
        %v2460 = vld [vmem:[%s715 + $0xb0] sm:$0xff]
        %v2461 = vld [vmem:[%s715 + $0xb8] sm:$0xff]
        %v2462 = vld [vmem:[%s715 + $0xc0] sm:$0xff]
        %v2463 = vld [vmem:[%s715 + $0xc8] sm:$0xff]
        %v2464 = vld [vmem:[%s715 + $0xd0] sm:$0xff]
        %v2465 = vld [vmem:[%s715 + $0xd8] sm:$0xff]
        %v2466 = vld [vmem:[%s715 + $0xe0] sm:$0xff]
        %v2467 = vld [vmem:[%s715 + $0xe8] sm:$0xff]
        %v2468 = vld [vmem:[%s715 + $0xf0] sm:$0xff]
        %v2469 = vld [vmem:[%s715 + $0xf8] sm:$0xff]
        %v2470 = vld [vmem:[%s715 + $0x100] sm:$0xff]
        %v2471 = vld [vmem:[%s715 + $0x108] sm:$0xff]
        %v2472 = vld [vmem:[%s715 + $0x110] sm:$0xff]
        %v2473 = vld [vmem:[%s715 + $0x118] sm:$0xff]
        %v2474 = vld [vmem:[%s715 + $0x120] sm:$0xff]
        %v2475 = vld [vmem:[%s715 + $0x128] sm:$0xff]
        %v2476 = vld [vmem:[%s715 + $0x130] sm:$0xff]
        %v2477 = vld [vmem:[%s715 + $0x138] sm:$0xff]
        %v2478 = vld [vmem:[%s715 + $0x140] sm:$0xff]
        %v2479 = vld [vmem:[%s715 + $0x148] sm:$0xff]
        %v2480 = vld [vmem:[%s715 + $0x150] sm:$0xff]
        %v2481 = vld [vmem:[%s715 + $0x158] sm:$0xff]
        %v2482 = vld [vmem:[%s715 + $0x160] sm:$0xff]
        %v2483 = vld [vmem:[%s715 + $0x168] sm:$0xff]
        %v2484 = vld [vmem:[%s715 + $0x170] sm:$0xff]
        %v2485 = vld [vmem:[%s715 + $0x178] sm:$0xff]
        %v2486 = vld [vmem:[%s715 + $0x180] sm:$0xff]
        %v2487 = vld [vmem:[%s715 + $0x188] sm:$0xff]
        %v2488 = vld [vmem:[%s715 + $0x190] sm:$0xff]
        %v2489 = vld [vmem:[%s715 + $0x198] sm:$0xff]
        %v2490 = vld [vmem:[%s715 + $0x1a0] sm:$0xff]
        %v2491 = vld [vmem:[%s715 + $0x1a8] sm:$0xff]
        %v2492 = vld [vmem:[%s715 + $0x1b0] sm:$0xff]
        %v2493 = vld [vmem:[%s715 + $0x1b8] sm:$0xff]
        %v2494 = vld [vmem:[%s715 + $0x1c0] sm:$0xff]
        %v2495 = vld [vmem:[%s715 + $0x1c8] sm:$0xff]
        %v2496 = vld [vmem:[%s715 + $0x1d0] sm:$0xff]
        %v2497 = vld [vmem:[%s715 + $0x1d8] sm:$0xff]
        %v2498 = vld [vmem:[%s715 + $0x1e0] sm:$0xff]
        %v2499 = vld [vmem:[%s715 + $0x1e8] sm:$0xff]
        %v2500 = vld [vmem:[%s715 + $0x1f0] sm:$0xff]
        %v2501 = vld [vmem:[%s715 + $0x1f8] sm:$0xff]
        %v2502 = vld [vmem:[%s724] sm:$0xff]
        %v2503 = vld [vmem:[%s724 + $0x8] sm:$0xff]
        %v2506 = vlaneseq
        %v2507 = vshrl.u32 %v2506, 7
        %v2508 = vsub.s32 0, %v2507
        %v2509 = vrot.slane %v2502, %v2508
        %v2510 = vlaneseq
        %v2511 = vshrl.u32 %v2510, 7
        %v2512 = vsub.s32 1, %v2511
        %v2513 = vrot.slane %v2502, %v2512
        %v2514 = vlaneseq
        %v2515 = vshrl.u32 %v2514, 7
        %v2516 = vsub.s32 2, %v2515
        %v2517 = vrot.slane %v2502, %v2516
        %v2518 = vlaneseq
        %v2519 = vshrl.u32 %v2518, 7
        %v2520 = vsub.s32 3, %v2519
        %v2521 = vrot.slane %v2502, %v2520
        %v2522 = vlaneseq
        %v2523 = vshrl.u32 %v2522, 7
        %v2524 = vsub.s32 4, %v2523
        %v2525 = vrot.slane %v2502, %v2524
        %v2526 = vlaneseq
        %v2527 = vshrl.u32 %v2526, 7
        %v2528 = vsub.s32 5, %v2527
        %v2529 = vrot.slane %v2502, %v2528
        %v2530 = vlaneseq
        %v2531 = vshrl.u32 %v2530, 7
        %v2532 = vsub.s32 6, %v2531
        %v2533 = vrot.slane %v2502, %v2532
        %v2534 = vlaneseq
        %v2535 = vshrl.u32 %v2534, 7
        %v2536 = vsub.s32 7, %v2535
        %v2537 = vrot.slane %v2502, %v2536
        %v2538 = vlaneseq
        %v2539 = vshrl.u32 %v2538, 7
        %v2540 = vsub.s32 0, %v2539
        %v2541 = vrot.slane %v2503, %v2540
        %v2542 = vlaneseq
        %v2543 = vshrl.u32 %v2542, 7
        %v2544 = vsub.s32 1, %v2543
        %v2545 = vrot.slane %v2503, %v2544
        %v2546 = vlaneseq
        %v2547 = vshrl.u32 %v2546, 7
        %v2548 = vsub.s32 2, %v2547
        %v2549 = vrot.slane %v2503, %v2548
        %v2550 = vlaneseq
        %v2551 = vshrl.u32 %v2550, 7
        %v2552 = vsub.s32 3, %v2551
        %v2553 = vrot.slane %v2503, %v2552
        %v2554 = vlaneseq
        %v2555 = vshrl.u32 %v2554, 7
        %v2556 = vsub.s32 4, %v2555
        %v2557 = vrot.slane %v2503, %v2556
        %v2558 = vlaneseq
        %v2559 = vshrl.u32 %v2558, 7
        %v2560 = vsub.s32 5, %v2559
        %v2561 = vrot.slane %v2503, %v2560
        %v2562 = vlaneseq
        %v2563 = vshrl.u32 %v2562, 7
        %v2564 = vsub.s32 6, %v2563
        %v2565 = vrot.slane %v2503, %v2564
        %v2566 = vlaneseq
        %v2567 = vshrl.u32 %v2566, 7
        %v2568 = vsub.s32 7, %v2567
        %v2569 = vrot.slane %v2503, %v2568
        %v2650 = vunpack.c.l.b16 %v2438
        %v2651 = vunpack.c.h.b16 %v2438
        %v2652 = vunpack.c.l.b16 %v2439
        %v2653 = vunpack.c.h.b16 %v2439
        %v2654 = vunpack.c.l.b16 %v2440
        %v2655 = vunpack.c.h.b16 %v2440
        %v2656 = vunpack.c.l.b16 %v2441
        %v2657 = vunpack.c.h.b16 %v2441
        %v2658 = vunpack.c.l.b16 %v2442
        %v2659 = vunpack.c.h.b16 %v2442
        %v2660 = vunpack.c.l.b16 %v2443
        %v2661 = vunpack.c.h.b16 %v2443
        %v2662 = vunpack.c.l.b16 %v2444
        %v2663 = vunpack.c.h.b16 %v2444
        %v2664 = vunpack.c.l.b16 %v2445
        %v2665 = vunpack.c.h.b16 %v2445
        %v2666 = vunpack.c.l.b16 %v2446
        %v2667 = vunpack.c.h.b16 %v2446
        %v2668 = vunpack.c.l.b16 %v2447
        %v2669 = vunpack.c.h.b16 %v2447
        %v2670 = vunpack.c.l.b16 %v2448
        %v2671 = vunpack.c.h.b16 %v2448
        %v2672 = vunpack.c.l.b16 %v2449
        %v2673 = vunpack.c.h.b16 %v2449
        %v2674 = vunpack.c.l.b16 %v2450
        %v2675 = vunpack.c.h.b16 %v2450
        %v2676 = vunpack.c.l.b16 %v2451
        %v2677 = vunpack.c.h.b16 %v2451
        %v2678 = vunpack.c.l.b16 %v2452
        %v2679 = vunpack.c.h.b16 %v2452
        %v2680 = vunpack.c.l.b16 %v2453
        %v2681 = vunpack.c.h.b16 %v2453
        %v2682 = vunpack.c.l.b16 %v2454
        %v2683 = vunpack.c.h.b16 %v2454
        %v2684 = vunpack.c.l.b16 %v2455
        %v2685 = vunpack.c.h.b16 %v2455
        %v2686 = vunpack.c.l.b16 %v2456
        %v2687 = vunpack.c.h.b16 %v2456
        %v2688 = vunpack.c.l.b16 %v2457
        %v2689 = vunpack.c.h.b16 %v2457
        %v2690 = vunpack.c.l.b16 %v2458
        %v2691 = vunpack.c.h.b16 %v2458
        %v2692 = vunpack.c.l.b16 %v2459
        %v2693 = vunpack.c.h.b16 %v2459
        %v2694 = vunpack.c.l.b16 %v2460
        %v2695 = vunpack.c.h.b16 %v2460
        %v2696 = vunpack.c.l.b16 %v2461
        %v2697 = vunpack.c.h.b16 %v2461
        %v2698 = vunpack.c.l.b16 %v2462
        %v2699 = vunpack.c.h.b16 %v2462
        %v2700 = vunpack.c.l.b16 %v2463
        %v2701 = vunpack.c.h.b16 %v2463
        %v2702 = vunpack.c.l.b16 %v2464
        %v2703 = vunpack.c.h.b16 %v2464
        %v2704 = vunpack.c.l.b16 %v2465
        %v2705 = vunpack.c.h.b16 %v2465
        %v2706 = vunpack.c.l.b16 %v2466
        %v2707 = vunpack.c.h.b16 %v2466
        %v2708 = vunpack.c.l.b16 %v2467
        %v2709 = vunpack.c.h.b16 %v2467
        %v2710 = vunpack.c.l.b16 %v2468
        %v2711 = vunpack.c.h.b16 %v2468
        %v2712 = vunpack.c.l.b16 %v2469
        %v2713 = vunpack.c.h.b16 %v2469
        %v2714 = vunpack.c.l.b16 %v2470
        %v2715 = vunpack.c.h.b16 %v2470
        %v2716 = vunpack.c.l.b16 %v2471
        %v2717 = vunpack.c.h.b16 %v2471
        %v2718 = vunpack.c.l.b16 %v2472
        %v2719 = vunpack.c.h.b16 %v2472
        %v2720 = vunpack.c.l.b16 %v2473
        %v2721 = vunpack.c.h.b16 %v2473
        %v2722 = vunpack.c.l.b16 %v2474
        %v2723 = vunpack.c.h.b16 %v2474
        %v2724 = vunpack.c.l.b16 %v2475
        %v2725 = vunpack.c.h.b16 %v2475
        %v2726 = vunpack.c.l.b16 %v2476
        %v2727 = vunpack.c.h.b16 %v2476
        %v2728 = vunpack.c.l.b16 %v2477
        %v2729 = vunpack.c.h.b16 %v2477
        %v2730 = vunpack.c.l.b16 %v2478
        %v2731 = vunpack.c.h.b16 %v2478
        %v2732 = vunpack.c.l.b16 %v2479
        %v2733 = vunpack.c.h.b16 %v2479
        %v2734 = vunpack.c.l.b16 %v2480
        %v2735 = vunpack.c.h.b16 %v2480
        %v2736 = vunpack.c.l.b16 %v2481
        %v2737 = vunpack.c.h.b16 %v2481
        %v2738 = vunpack.c.l.b16 %v2482
        %v2739 = vunpack.c.h.b16 %v2482
        %v2740 = vunpack.c.l.b16 %v2483
        %v2741 = vunpack.c.h.b16 %v2483
        %v2742 = vunpack.c.l.b16 %v2484
        %v2743 = vunpack.c.h.b16 %v2484
        %v2744 = vunpack.c.l.b16 %v2485
        %v2745 = vunpack.c.h.b16 %v2485
        %v2746 = vunpack.c.l.b16 %v2486
        %v2747 = vunpack.c.h.b16 %v2486
        %v2748 = vunpack.c.l.b16 %v2487
        %v2749 = vunpack.c.h.b16 %v2487
        %v2750 = vunpack.c.l.b16 %v2488
        %v2751 = vunpack.c.h.b16 %v2488
        %v2752 = vunpack.c.l.b16 %v2489
        %v2753 = vunpack.c.h.b16 %v2489
        %v2754 = vunpack.c.l.b16 %v2490
        %v2755 = vunpack.c.h.b16 %v2490
        %v2756 = vunpack.c.l.b16 %v2491
        %v2757 = vunpack.c.h.b16 %v2491
        %v2758 = vunpack.c.l.b16 %v2492
        %v2759 = vunpack.c.h.b16 %v2492
        %v2760 = vunpack.c.l.b16 %v2493
        %v2761 = vunpack.c.h.b16 %v2493
        %v2762 = vunpack.c.l.b16 %v2494
        %v2763 = vunpack.c.h.b16 %v2494
        %v2764 = vunpack.c.l.b16 %v2495
        %v2765 = vunpack.c.h.b16 %v2495
        %v2766 = vunpack.c.l.b16 %v2496
        %v2767 = vunpack.c.h.b16 %v2496
        %v2768 = vunpack.c.l.b16 %v2497
        %v2769 = vunpack.c.h.b16 %v2497
        %v2770 = vunpack.c.l.b16 %v2498
        %v2771 = vunpack.c.h.b16 %v2498
        %v2772 = vunpack.c.l.b16 %v2499
        %v2773 = vunpack.c.h.b16 %v2499
        %v2774 = vunpack.c.l.b16 %v2500
        %v2775 = vunpack.c.h.b16 %v2500
        %v2776 = vunpack.c.l.b16 %v2501
        %v2777 = vunpack.c.h.b16 %v2501
        %v2778 = vpack.c.b16 %v2666, %v2650
        %v2779 = vpack.c.b16 %v2667, %v2651
        %v2780 = vpack.c.b16 %v2668, %v2652
        %v2781 = vpack.c.b16 %v2669, %v2653
        %v2782 = vpack.c.b16 %v2670, %v2654
        %v2783 = vpack.c.b16 %v2671, %v2655
        %v2784 = vpack.c.b16 %v2672, %v2656
        %v2785 = vpack.c.b16 %v2673, %v2657
        %v2786 = vpack.c.b16 %v2674, %v2658
        %v2787 = vpack.c.b16 %v2675, %v2659
        %v2788 = vpack.c.b16 %v2676, %v2660
        %v2789 = vpack.c.b16 %v2677, %v2661
        %v2790 = vpack.c.b16 %v2678, %v2662
        %v2791 = vpack.c.b16 %v2679, %v2663
        %v2792 = vpack.c.b16 %v2680, %v2664
        %v2793 = vpack.c.b16 %v2681, %v2665
        %v2794 = vpack.c.b16 %v2698, %v2682
        %v2795 = vpack.c.b16 %v2699, %v2683
        %v2796 = vpack.c.b16 %v2700, %v2684
        %v2797 = vpack.c.b16 %v2701, %v2685
        %v2798 = vpack.c.b16 %v2702, %v2686
        %v2799 = vpack.c.b16 %v2703, %v2687
        %v2800 = vpack.c.b16 %v2704, %v2688
        %v2801 = vpack.c.b16 %v2705, %v2689
        %v2802 = vpack.c.b16 %v2706, %v2690
        %v2803 = vpack.c.b16 %v2707, %v2691
        %v2804 = vpack.c.b16 %v2708, %v2692
        %v2805 = vpack.c.b16 %v2709, %v2693
        %v2806 = vpack.c.b16 %v2710, %v2694
        %v2807 = vpack.c.b16 %v2711, %v2695
        %v2808 = vpack.c.b16 %v2712, %v2696
        %v2809 = vpack.c.b16 %v2713, %v2697
        %v2810 = vpack.c.b16 %v2730, %v2714
        %v2811 = vpack.c.b16 %v2731, %v2715
        %v2812 = vpack.c.b16 %v2732, %v2716
        %v2813 = vpack.c.b16 %v2733, %v2717
        %v2814 = vpack.c.b16 %v2734, %v2718
        %v2815 = vpack.c.b16 %v2735, %v2719
        %v2816 = vpack.c.b16 %v2736, %v2720
        %v2817 = vpack.c.b16 %v2737, %v2721
        %v2818 = vpack.c.b16 %v2738, %v2722
        %v2819 = vpack.c.b16 %v2739, %v2723
        %v2820 = vpack.c.b16 %v2740, %v2724
        %v2821 = vpack.c.b16 %v2741, %v2725
        %v2822 = vpack.c.b16 %v2742, %v2726
        %v2823 = vpack.c.b16 %v2743, %v2727
        %v2824 = vpack.c.b16 %v2744, %v2728
        %v2825 = vpack.c.b16 %v2745, %v2729
        %v2826 = vpack.c.b16 %v2762, %v2746
        %v2827 = vpack.c.b16 %v2763, %v2747
        %v2828 = vpack.c.b16 %v2764, %v2748
        %v2829 = vpack.c.b16 %v2765, %v2749
        %v2830 = vpack.c.b16 %v2766, %v2750
        %v2831 = vpack.c.b16 %v2767, %v2751
        %v2832 = vpack.c.b16 %v2768, %v2752
        %v2833 = vpack.c.b16 %v2769, %v2753
        %v2834 = vpack.c.b16 %v2770, %v2754
        %v2835 = vpack.c.b16 %v2771, %v2755
        %v2836 = vpack.c.b16 %v2772, %v2756
        %v2837 = vpack.c.b16 %v2773, %v2757
        %v2838 = vpack.c.b16 %v2774, %v2758
        %v2839 = vpack.c.b16 %v2775, %v2759
        %v2840 = vpack.c.b16 %v2776, %v2760
        %v2841 = vpack.c.b16 %v2777, %v2761
        %vm2906 = vcmask 523264
        %v2908 = vsel %vm2906, %v2437, 0
        %2910 = vmatprep.subr.bf16.mxu0 %v2779
        %2911 = vmatpush1.bf16.msra.mxu0 %v2778
        %2912 = vmatprep.subr.bf16.mxu0 %v2795
        %2913 = vmatpush1.bf16.msra.mxu0 %v2794
        %2914 = vmatprep.subr.bf16.mxu0 %v2811
        %2915 = vmatpush1.bf16.msra.mxu0 %v2810
        %2916 = vmatprep.subr.bf16.mxu0 %v2827
        %2917 = vmatpush1.bf16.msra.mxu0 %v2826
        %2918 = vmatprep.subr.bf16.mxu0 0
        %2919 = vmatpush1.bf16.msra.mxu0 0
        %2920 = vmatprep.subr.bf16.mxu0 0
        %2921 = vmatpush1.bf16.msra.mxu0 0
        %2922 = vmatprep.subr.bf16.mxu0 0
        %2923 = vmatpush1.bf16.msra.mxu0 0
        %2924 = vmatprep.subr.bf16.mxu0 0
        %2925 = vmatpush1.bf16.msra.mxu0 0
        %2926 = vmatprep.subr.bf16.mxu0 0
        %2927 = vmatpush1.bf16.msra.mxu0 0
        %2928 = vmatprep.subr.bf16.mxu0 0
        %2929 = vmatpush1.bf16.msra.mxu0 0
        %2930 = vmatprep.subr.bf16.mxu0 0
        %2931 = vmatpush1.bf16.msra.mxu0 0
        %2932 = vmatprep.subr.bf16.mxu0 0
        %2933 = vmatpush1.bf16.msra.mxu0 0
        %2934 = vmatprep.subr.bf16.mxu0 0
        %2935 = vmatpush1.bf16.msra.mxu0 0
        %2936 = vmatprep.subr.bf16.mxu0 0
        %2937 = vmatpush1.bf16.msra.mxu0 0
        %2938 = vmatprep.subr.bf16.mxu0 0
        %2939 = vmatpush1.bf16.msra.mxu0 0
        %2940 = vmatprep.subr.bf16.mxu0 0
        %2941 = vmatpush1.bf16.msra.mxu0 0
        %2942 = vmatprep.mubr.bf16.mxu0 0
        %2943 = vmatmul.mubr.bf16.gmra.mrb[0].mxu0 %v2908
        %v2944 = vpop.f32.mrb[0].mxu0
        %v2945 = vadd.f32 %v2509, %v2944
        %v2946 = vpop.f32.mrb[0].mxu0
        %v2947 = vadd.f32 %v2513, %v2946
        %v2948 = vpop.f32.mrb[0].mxu0
        %v2949 = vpop.f32.mrb[0].mxu0
        %2950 = vdwg.mxu0
        %2951 = vmatprep.subr.bf16.mxu0 %v2781
        %2952 = vmatpush1.bf16.msra.mxu0 %v2780
        %2953 = vmatprep.subr.bf16.mxu0 %v2797
        %2954 = vmatpush1.bf16.msra.mxu0 %v2796
        %2955 = vmatprep.subr.bf16.mxu0 %v2813
        %2956 = vmatpush1.bf16.msra.mxu0 %v2812
        %2957 = vmatprep.subr.bf16.mxu0 %v2829
        %2958 = vmatpush1.bf16.msra.mxu0 %v2828
        %2959 = vmatprep.subr.bf16.mxu0 0
        %2960 = vmatpush1.bf16.msra.mxu0 0
        %2961 = vmatprep.subr.bf16.mxu0 0
        %2962 = vmatpush1.bf16.msra.mxu0 0
        %2963 = vmatprep.subr.bf16.mxu0 0
        %2964 = vmatpush1.bf16.msra.mxu0 0
        %2965 = vmatprep.subr.bf16.mxu0 0
        %2966 = vmatpush1.bf16.msra.mxu0 0
        %2967 = vmatprep.subr.bf16.mxu0 0
        %2968 = vmatpush1.bf16.msra.mxu0 0
        %2969 = vmatprep.subr.bf16.mxu0 0
        %2970 = vmatpush1.bf16.msra.mxu0 0
        %2971 = vmatprep.subr.bf16.mxu0 0
        %2972 = vmatpush1.bf16.msra.mxu0 0
        %2973 = vmatprep.subr.bf16.mxu0 0
        %2974 = vmatpush1.bf16.msra.mxu0 0
        %2975 = vmatprep.subr.bf16.mxu0 0
        %2976 = vmatpush1.bf16.msra.mxu0 0
        %2977 = vmatprep.subr.bf16.mxu0 0
        %2978 = vmatpush1.bf16.msra.mxu0 0
        %2979 = vmatprep.subr.bf16.mxu0 0
        %2980 = vmatpush1.bf16.msra.mxu0 0
        %2981 = vmatprep.subr.bf16.mxu0 0
        %2982 = vmatpush1.bf16.msra.mxu0 0
        %2983 = vmatprep.mubr.bf16.mxu0 0
        %2984 = vmatmul.mubr.bf16.gmra.mrb[0].mxu0 %v2908
        %v2985 = vpop.f32.mrb[0].mxu0
        %v2986 = vadd.f32 %v2517, %v2985
        %v2987 = vpop.f32.mrb[0].mxu0
        %v2988 = vadd.f32 %v2521, %v2987
        %v2989 = vpop.f32.mrb[0].mxu0
        %v2990 = vpop.f32.mrb[0].mxu0
        %2991 = vdwg.mxu0
        %2992 = vmatprep.subr.bf16.mxu0 %v2783
        %2993 = vmatpush1.bf16.msra.mxu0 %v2782
        %2994 = vmatprep.subr.bf16.mxu0 %v2799
        %2995 = vmatpush1.bf16.msra.mxu0 %v2798
        %2996 = vmatprep.subr.bf16.mxu0 %v2815
        %2997 = vmatpush1.bf16.msra.mxu0 %v2814
        %2998 = vmatprep.subr.bf16.mxu0 %v2831
        %2999 = vmatpush1.bf16.msra.mxu0 %v2830
        %3000 = vmatprep.subr.bf16.mxu0 0
        %3001 = vmatpush1.bf16.msra.mxu0 0
        %3002 = vmatprep.subr.bf16.mxu0 0
        %3003 = vmatpush1.bf16.msra.mxu0 0
        %3004 = vmatprep.subr.bf16.mxu0 0
        %3005 = vmatpush1.bf16.msra.mxu0 0
        %3006 = vmatprep.subr.bf16.mxu0 0
        %3007 = vmatpush1.bf16.msra.mxu0 0
        %3008 = vmatprep.subr.bf16.mxu0 0
        %3009 = vmatpush1.bf16.msra.mxu0 0
        %3010 = vmatprep.subr.bf16.mxu0 0
        %3011 = vmatpush1.bf16.msra.mxu0 0
        %3012 = vmatprep.subr.bf16.mxu0 0
        %3013 = vmatpush1.bf16.msra.mxu0 0
        %3014 = vmatprep.subr.bf16.mxu0 0
        %3015 = vmatpush1.bf16.msra.mxu0 0
        %3016 = vmatprep.subr.bf16.mxu0 0
        %3017 = vmatpush1.bf16.msra.mxu0 0
        %3018 = vmatprep.subr.bf16.mxu0 0
        %3019 = vmatpush1.bf16.msra.mxu0 0
        %3020 = vmatprep.subr.bf16.mxu0 0
        %3021 = vmatpush1.bf16.msra.mxu0 0
        %3022 = vmatprep.subr.bf16.mxu0 0
        %3023 = vmatpush1.bf16.msra.mxu0 0
        %3024 = vmatprep.mubr.bf16.mxu0 0
        %3025 = vmatmul.mubr.bf16.gmra.mrb[0].mxu0 %v2908
        %v3026 = vpop.f32.mrb[0].mxu0
        %v3027 = vadd.f32 %v2525, %v3026
        %v3028 = vpop.f32.mrb[0].mxu0
        %v3029 = vadd.f32 %v2529, %v3028
        %v3030 = vpop.f32.mrb[0].mxu0
        %v3031 = vpop.f32.mrb[0].mxu0
        %3032 = vdwg.mxu0
        %3033 = vmatprep.subr.bf16.mxu0 %v2785
        %3034 = vmatpush1.bf16.msra.mxu0 %v2784
        %3035 = vmatprep.subr.bf16.mxu0 %v2801
        %3036 = vmatpush1.bf16.msra.mxu0 %v2800
        %3037 = vmatprep.subr.bf16.mxu0 %v2817
        %3038 = vmatpush1.bf16.msra.mxu0 %v2816
        %3039 = vmatprep.subr.bf16.mxu0 %v2833
        %3040 = vmatpush1.bf16.msra.mxu0 %v2832
        %3041 = vmatprep.subr.bf16.mxu0 0
        %3042 = vmatpush1.bf16.msra.mxu0 0
        %3043 = vmatprep.subr.bf16.mxu0 0
        %3044 = vmatpush1.bf16.msra.mxu0 0
        %3045 = vmatprep.subr.bf16.mxu0 0
        %3046 = vmatpush1.bf16.msra.mxu0 0
        %3047 = vmatprep.subr.bf16.mxu0 0
        %3048 = vmatpush1.bf16.msra.mxu0 0
        %3049 = vmatprep.subr.bf16.mxu0 0
        %3050 = vmatpush1.bf16.msra.mxu0 0
        %3051 = vmatprep.subr.bf16.mxu0 0
        %3052 = vmatpush1.bf16.msra.mxu0 0
        %3053 = vmatprep.subr.bf16.mxu0 0
        %3054 = vmatpush1.bf16.msra.mxu0 0
        %3055 = vmatprep.subr.bf16.mxu0 0
        %3056 = vmatpush1.bf16.msra.mxu0 0
        %3057 = vmatprep.subr.bf16.mxu0 0
        %3058 = vmatpush1.bf16.msra.mxu0 0
        %3059 = vmatprep.subr.bf16.mxu0 0
        %3060 = vmatpush1.bf16.msra.mxu0 0
        %3061 = vmatprep.subr.bf16.mxu0 0
        %3062 = vmatpush1.bf16.msra.mxu0 0
        %3063 = vmatprep.subr.bf16.mxu0 0
        %3064 = vmatpush1.bf16.msra.mxu0 0
        %3065 = vmatprep.mubr.bf16.mxu0 0
        %3066 = vmatmul.mubr.bf16.gmra.mrb[0].mxu0 %v2908
        %v3067 = vpop.f32.mrb[0].mxu0
        %v3068 = vadd.f32 %v2533, %v3067
        %v3069 = vpop.f32.mrb[0].mxu0
        %v3070 = vadd.f32 %v2537, %v3069
        %v3071 = vpop.f32.mrb[0].mxu0
        %v3072 = vpop.f32.mrb[0].mxu0
        %3073 = vdwg.mxu0
        %3074 = vmatprep.subr.bf16.mxu0 %v2787
        %3075 = vmatpush1.bf16.msra.mxu0 %v2786
        %3076 = vmatprep.subr.bf16.mxu0 %v2803
        %3077 = vmatpush1.bf16.msra.mxu0 %v2802
        %3078 = vmatprep.subr.bf16.mxu0 %v2819
        %3079 = vmatpush1.bf16.msra.mxu0 %v2818
        %3080 = vmatprep.subr.bf16.mxu0 %v2835
        %3081 = vmatpush1.bf16.msra.mxu0 %v2834
        %3082 = vmatprep.subr.bf16.mxu0 0
        %3083 = vmatpush1.bf16.msra.mxu0 0
        %3084 = vmatprep.subr.bf16.mxu0 0
        %3085 = vmatpush1.bf16.msra.mxu0 0
        %3086 = vmatprep.subr.bf16.mxu0 0
        %3087 = vmatpush1.bf16.msra.mxu0 0
        %3088 = vmatprep.subr.bf16.mxu0 0
        %3089 = vmatpush1.bf16.msra.mxu0 0
        %3090 = vmatprep.subr.bf16.mxu0 0
        %3091 = vmatpush1.bf16.msra.mxu0 0
        %3092 = vmatprep.subr.bf16.mxu0 0
        %3093 = vmatpush1.bf16.msra.mxu0 0
        %3094 = vmatprep.subr.bf16.mxu0 0
        %3095 = vmatpush1.bf16.msra.mxu0 0
        %3096 = vmatprep.subr.bf16.mxu0 0
        %3097 = vmatpush1.bf16.msra.mxu0 0
        %3098 = vmatprep.subr.bf16.mxu0 0
        %3099 = vmatpush1.bf16.msra.mxu0 0
        %3100 = vmatprep.subr.bf16.mxu0 0
        %3101 = vmatpush1.bf16.msra.mxu0 0
        %3102 = vmatprep.subr.bf16.mxu0 0
        %3103 = vmatpush1.bf16.msra.mxu0 0
        %3104 = vmatprep.subr.bf16.mxu0 0
        %3105 = vmatpush1.bf16.msra.mxu0 0
        %3106 = vmatprep.mubr.bf16.mxu0 0
        %3107 = vmatmul.mubr.bf16.gmra.mrb[0].mxu0 %v2908
        %v3108 = vpop.f32.mrb[0].mxu0
        %v3109 = vadd.f32 %v2541, %v3108
        %v3110 = vpop.f32.mrb[0].mxu0
        %v3111 = vadd.f32 %v2545, %v3110
        %v3112 = vpop.f32.mrb[0].mxu0
        %v3113 = vpop.f32.mrb[0].mxu0
        %3114 = vdwg.mxu0
        %3115 = vmatprep.subr.bf16.mxu0 %v2789
        %3116 = vmatpush1.bf16.msra.mxu0 %v2788
        %3117 = vmatprep.subr.bf16.mxu0 %v2805
        %3118 = vmatpush1.bf16.msra.mxu0 %v2804
        %3119 = vmatprep.subr.bf16.mxu0 %v2821
        %3120 = vmatpush1.bf16.msra.mxu0 %v2820
        %3121 = vmatprep.subr.bf16.mxu0 %v2837
        %3122 = vmatpush1.bf16.msra.mxu0 %v2836
        %3123 = vmatprep.subr.bf16.mxu0 0
        %3124 = vmatpush1.bf16.msra.mxu0 0
        %3125 = vmatprep.subr.bf16.mxu0 0
        %3126 = vmatpush1.bf16.msra.mxu0 0
        %3127 = vmatprep.subr.bf16.mxu0 0
        %3128 = vmatpush1.bf16.msra.mxu0 0
        %3129 = vmatprep.subr.bf16.mxu0 0
        %3130 = vmatpush1.bf16.msra.mxu0 0
        %3131 = vmatprep.subr.bf16.mxu0 0
        %3132 = vmatpush1.bf16.msra.mxu0 0
        %3133 = vmatprep.subr.bf16.mxu0 0
        %3134 = vmatpush1.bf16.msra.mxu0 0
        %3135 = vmatprep.subr.bf16.mxu0 0
        %3136 = vmatpush1.bf16.msra.mxu0 0
        %3137 = vmatprep.subr.bf16.mxu0 0
        %3138 = vmatpush1.bf16.msra.mxu0 0
        %3139 = vmatprep.subr.bf16.mxu0 0
        %3140 = vmatpush1.bf16.msra.mxu0 0
        %3141 = vmatprep.subr.bf16.mxu0 0
        %3142 = vmatpush1.bf16.msra.mxu0 0
        %3143 = vmatprep.subr.bf16.mxu0 0
        %3144 = vmatpush1.bf16.msra.mxu0 0
        %3145 = vmatprep.subr.bf16.mxu0 0
        %3146 = vmatpush1.bf16.msra.mxu0 0
        %3147 = vmatprep.mubr.bf16.mxu0 0
        %3148 = vmatmul.mubr.bf16.gmra.mrb[0].mxu0 %v2908
        %v3149 = vpop.f32.mrb[0].mxu0
        %v3150 = vadd.f32 %v2549, %v3149
        %v3151 = vpop.f32.mrb[0].mxu0
        %v3152 = vadd.f32 %v2553, %v3151
        %v3153 = vpop.f32.mrb[0].mxu0
        %v3154 = vpop.f32.mrb[0].mxu0
        %3155 = vdwg.mxu0
        %3156 = vmatprep.subr.bf16.mxu0 %v2791
        %3157 = vmatpush1.bf16.msra.mxu0 %v2790
        %3158 = vmatprep.subr.bf16.mxu0 %v2807
        %3159 = vmatpush1.bf16.msra.mxu0 %v2806
        %3160 = vmatprep.subr.bf16.mxu0 %v2823
        %3161 = vmatpush1.bf16.msra.mxu0 %v2822
        %3162 = vmatprep.subr.bf16.mxu0 %v2839
        %3163 = vmatpush1.bf16.msra.mxu0 %v2838
        %3164 = vmatprep.subr.bf16.mxu0 0
        %3165 = vmatpush1.bf16.msra.mxu0 0
        %3166 = vmatprep.subr.bf16.mxu0 0
        %3167 = vmatpush1.bf16.msra.mxu0 0
        %3168 = vmatprep.subr.bf16.mxu0 0
        %3169 = vmatpush1.bf16.msra.mxu0 0
        %3170 = vmatprep.subr.bf16.mxu0 0
        %3171 = vmatpush1.bf16.msra.mxu0 0
        %3172 = vmatprep.subr.bf16.mxu0 0
        %3173 = vmatpush1.bf16.msra.mxu0 0
        %3174 = vmatprep.subr.bf16.mxu0 0
        %3175 = vmatpush1.bf16.msra.mxu0 0
        %3176 = vmatprep.subr.bf16.mxu0 0
        %3177 = vmatpush1.bf16.msra.mxu0 0
        %3178 = vmatprep.subr.bf16.mxu0 0
        %3179 = vmatpush1.bf16.msra.mxu0 0
        %3180 = vmatprep.subr.bf16.mxu0 0
        %3181 = vmatpush1.bf16.msra.mxu0 0
        %3182 = vmatprep.subr.bf16.mxu0 0
        %3183 = vmatpush1.bf16.msra.mxu0 0
        %3184 = vmatprep.subr.bf16.mxu0 0
        %3185 = vmatpush1.bf16.msra.mxu0 0
        %3186 = vmatprep.subr.bf16.mxu0 0
        %3187 = vmatpush1.bf16.msra.mxu0 0
        %3188 = vmatprep.mubr.bf16.mxu0 0
        %3189 = vmatmul.mubr.bf16.gmra.mrb[0].mxu0 %v2908
        %v3190 = vpop.f32.mrb[0].mxu0
        %v3191 = vadd.f32 %v2557, %v3190
        %v3192 = vpop.f32.mrb[0].mxu0
        %v3193 = vadd.f32 %v2561, %v3192
        %v3194 = vpop.f32.mrb[0].mxu0
        %v3195 = vpop.f32.mrb[0].mxu0
        %3196 = vdwg.mxu0
        %3197 = vmatprep.subr.bf16.mxu0 %v2793
        %3198 = vmatpush1.bf16.msra.mxu0 %v2792
        %3199 = vmatprep.subr.bf16.mxu0 %v2809
        %3200 = vmatpush1.bf16.msra.mxu0 %v2808
        %3201 = vmatprep.subr.bf16.mxu0 %v2825
        %3202 = vmatpush1.bf16.msra.mxu0 %v2824
        %3203 = vmatprep.subr.bf16.mxu0 %v2841
        %3204 = vmatpush1.bf16.msra.mxu0 %v2840
        %3205 = vmatprep.subr.bf16.mxu0 0
        %3206 = vmatpush1.bf16.msra.mxu0 0
        %3207 = vmatprep.subr.bf16.mxu0 0
        %3208 = vmatpush1.bf16.msra.mxu0 0
        %3209 = vmatprep.subr.bf16.mxu0 0
        %3210 = vmatpush1.bf16.msra.mxu0 0
        %3211 = vmatprep.subr.bf16.mxu0 0
        %3212 = vmatpush1.bf16.msra.mxu0 0
        %3213 = vmatprep.subr.bf16.mxu0 0
        %3214 = vmatpush1.bf16.msra.mxu0 0
        %3215 = vmatprep.subr.bf16.mxu0 0
        %3216 = vmatpush1.bf16.msra.mxu0 0
        %3217 = vmatprep.subr.bf16.mxu0 0
        %3218 = vmatpush1.bf16.msra.mxu0 0
        %3219 = vmatprep.subr.bf16.mxu0 0
        %3220 = vmatpush1.bf16.msra.mxu0 0
        %3221 = vmatprep.subr.bf16.mxu0 0
        %3222 = vmatpush1.bf16.msra.mxu0 0
        %3223 = vmatprep.subr.bf16.mxu0 0
        %3224 = vmatpush1.bf16.msra.mxu0 0
        %3225 = vmatprep.subr.bf16.mxu0 0
        %3226 = vmatpush1.bf16.msra.mxu0 0
        %3227 = vmatprep.subr.bf16.mxu0 0
        %3228 = vmatpush1.bf16.msra.mxu0 0
        %3229 = vmatprep.mubr.bf16.mxu0 0
        %3230 = vmatmul.mubr.bf16.gmra.mrb[0].mxu0 %v2908
        %v3231 = vpop.f32.mrb[0].mxu0
        %v3232 = vadd.f32 %v2565, %v3231
        %v3233 = vpop.f32.mrb[0].mxu0
        %v3234 = vadd.f32 %v2569, %v3233
        %v3235 = vpop.f32.mrb[0].mxu0
        %v3236 = vpop.f32.mrb[0].mxu0
        %3237 = vdwg.mxu0
        %v3238 = vxor.u32 %v2945, 2147483648
        %v3239 = vxor.u32 %v2947, 2147483648
        %v3240 = vxor.u32 %v2986, 2147483648
        %v3241 = vxor.u32 %v2988, 2147483648
        %v3242 = vxor.u32 %v3027, 2147483648
        %v3243 = vxor.u32 %v3029, 2147483648
        %v3244 = vxor.u32 %v3068, 2147483648
        %v3245 = vxor.u32 %v3070, 2147483648
        %v3246 = vxor.u32 %v3109, 2147483648
        %v3247 = vxor.u32 %v3111, 2147483648
        %v3248 = vxor.u32 %v3150, 2147483648
        %v3249 = vxor.u32 %v3152, 2147483648
        %v3250 = vxor.u32 %v3191, 2147483648
        %v3251 = vxor.u32 %v3193, 2147483648
        %v3252 = vxor.u32 %v3232, 2147483648
        %v3253 = vxor.u32 %v3234, 2147483648
        %v3254 = vmul.f32 %v3238, 1.442695
        %v3255 = vpow.pop %v3254
        %v3256 = vmul.f32 %v3239, 1.442695
        %v3257 = vpow.pop %v3256
        %v3258 = vmul.f32 %v3240, 1.442695
        %v3259 = vpow.pop %v3258
        %v3260 = vmul.f32 %v3241, 1.442695
        %v3261 = vpow.pop %v3260
        %v3262 = vmul.f32 %v3242, 1.442695
        %v3263 = vpow.pop %v3262
        %v3264 = vmul.f32 %v3243, 1.442695
        %v3265 = vpow.pop %v3264
        %v3266 = vmul.f32 %v3244, 1.442695
        %v3267 = vpow.pop %v3266
        %v3268 = vmul.f32 %v3245, 1.442695
        %v3269 = vpow.pop %v3268
        %v3270 = vmul.f32 %v3246, 1.442695
        %v3271 = vpow.pop %v3270
        %v3272 = vmul.f32 %v3247, 1.442695
        %v3273 = vpow.pop %v3272
        %v3274 = vmul.f32 %v3248, 1.442695
        %v3275 = vpow.pop %v3274
        %v3276 = vmul.f32 %v3249, 1.442695
        %v3277 = vpow.pop %v3276
        %v3278 = vmul.f32 %v3250, 1.442695
        %v3279 = vpow.pop %v3278
        %v3280 = vmul.f32 %v3251, 1.442695
        %v3281 = vpow.pop %v3280
        %v3282 = vmul.f32 %v3252, 1.442695
        %v3283 = vpow.pop %v3282
        %v3284 = vmul.f32 %v3253, 1.442695
        %v3285 = vpow.pop %v3284
        %v3286 = vadd.f32 %v3255, 1.0
        %v3287 = vadd.f32 %v3257, 1.0
        %v3288 = vadd.f32 %v3259, 1.0
        %v3289 = vadd.f32 %v3261, 1.0
        %v3290 = vadd.f32 %v3263, 1.0
        %v3291 = vadd.f32 %v3265, 1.0
        %v3292 = vadd.f32 %v3267, 1.0
        %v3293 = vadd.f32 %v3269, 1.0
        %v3294 = vadd.f32 %v3271, 1.0
        %v3295 = vadd.f32 %v3273, 1.0
        %v3296 = vadd.f32 %v3275, 1.0
        %v3297 = vadd.f32 %v3277, 1.0
        %v3298 = vadd.f32 %v3279, 1.0
        %v3299 = vadd.f32 %v3281, 1.0
        %v3300 = vadd.f32 %v3283, 1.0
        %v3301 = vadd.f32 %v3285, 1.0
        %v3302 = vrcp.pop %v3286
        %v3303 = vmul.f32 1.0, %v3302
        %v3304 = vrcp.pop %v3287
        %v3305 = vmul.f32 1.0, %v3304
        %v3306 = vrcp.pop %v3288
        %v3307 = vmul.f32 1.0, %v3306
        %v3308 = vrcp.pop %v3289
        %v3309 = vmul.f32 1.0, %v3308
        %v3310 = vrcp.pop %v3290
        %v3311 = vmul.f32 1.0, %v3310
        %v3312 = vrcp.pop %v3291
        %v3313 = vmul.f32 1.0, %v3312
        %v3314 = vrcp.pop %v3292
        %v3315 = vmul.f32 1.0, %v3314
        %v3316 = vrcp.pop %v3293
        %v3317 = vmul.f32 1.0, %v3316
        %v3318 = vrcp.pop %v3294
        %v3319 = vmul.f32 1.0, %v3318
        %v3320 = vrcp.pop %v3295
        %v3321 = vmul.f32 1.0, %v3320
        %v3322 = vrcp.pop %v3296
        %v3323 = vmul.f32 1.0, %v3322
        %v3324 = vrcp.pop %v3297
        %v3325 = vmul.f32 1.0, %v3324
        %v3326 = vrcp.pop %v3298
        %v3327 = vmul.f32 1.0, %v3326
        %v3328 = vrcp.pop %v3299
        %v3329 = vmul.f32 1.0, %v3328
        %v3330 = vrcp.pop %v3300
        %v3331 = vmul.f32 1.0, %v3330
        %v3332 = vrcp.pop %v3301
        %v3333 = vmul.f32 1.0, %v3332
        %3334 = vst [vmem:[%s779] sm:$0xff] %v3303
        %3335 = vst [vmem:[%s779 + $0x8] sm:$0xff] %v3305
        %3336 = vst [vmem:[%s779 + $0x10] sm:$0xff] %v3307
        %3337 = vst [vmem:[%s779 + $0x18] sm:$0xff] %v3309
        %3338 = vst [vmem:[%s779 + $0x20] sm:$0xff] %v3311
        %3339 = vst [vmem:[%s779 + $0x28] sm:$0xff] %v3313
        %3340 = vst [vmem:[%s779 + $0x30] sm:$0xff] %v3315
        %3341 = vst [vmem:[%s779 + $0x38] sm:$0xff] %v3317
        %3342 = vst [vmem:[%s779 + $0x40] sm:$0xff] %v3319
        %3343 = vst [vmem:[%s779 + $0x48] sm:$0xff] %v3321
        %3344 = vst [vmem:[%s779 + $0x50] sm:$0xff] %v3323
        %3345 = vst [vmem:[%s779 + $0x58] sm:$0xff] %v3325
        %3346 = vst [vmem:[%s779 + $0x60] sm:$0xff] %v3327
        %3347 = vst [vmem:[%s779 + $0x68] sm:$0xff] %v3329
        %3348 = vst [vmem:[%s779 + $0x70] sm:$0xff] %v3331
        %3349 = vst [vmem:[%s779 + $0x78] sm:$0xff] %v3333
        %s3350 = sand.u32 %s421, 1
        %s3351 = scalar_lea.sflag [#allocation7], %s3350
        %s3352 = sand.u32 %s421, 1
        %s3353 = smul.addr %s3352, 128
        %s3354 = scalar_lea.vmem [#allocation29], %s3353
        // Predicated region
        $region153: #{tpu_custom_call.1} parent=87 // pred_check
          %p3355 = pneg %p431
        $region154: #{tpu_custom_call.1} parent=87 // pred_check_branch
          %3357 = sbr.rel (%p3355) target = $region156
        $region155: #{tpu_custom_call.1} parent=87 // pred_region
          %s3358 = smul.u32 16, %s46
          %s3360 = ssub.s32 2048, 2048
          %3361 = vsyncadd %s3351, %s3360
          %s3362 = smul.addr %s3358, 128
          %s3363 = scalar_lea.hbm %s18, %s3362
          %s3365 = sshll.u32 %s3354, 4
          %s3366 = int_to_ptr.vmem [resolvable:$true] %s3365
          %3368 = dma.vmem_to_hbm [thread:$0]  %s3366, 2048, %s3363, %s3351
        $region156: #{tpu_custom_call.1} parent=87 // pred_fallthru
          _
      $region88: #{tpu_custom_call.1} parent=5 // pred_fallthru
        _
      %p3369 = scmp.le.s32.totalorder 2, %s41
      // Predicated region
      $region157: #{tpu_custom_call.1} parent=5 // pred_check
        %p3370 = pneg %p3369
      $region158: #{tpu_custom_call.1} parent=5 // pred_check_branch
        %3372 = sbr.rel (%p3370) target = $region160
      $region159: #{tpu_custom_call.1} parent=5 // pred_region
        %s3373 = ssub.s32 %s41, 2
        // Predicated region
        $region161: #{tpu_custom_call.1} parent=159 // pred_check
          %p3374 = pneg %p437
        $region162: #{tpu_custom_call.1} parent=159 // pred_check_branch
          %3376 = sbr.rel (%p3374) target = $region164
        $region163: #{tpu_custom_call.1} parent=159 // pred_region
          %s3377 = sand.u32 %s422, 1
          %s3378 = scalar_lea.sflag [#allocation7], %s3377
          %s3379 = sand.u32 %s422, 1
          %s3380 = smul.addr %s3379, 128
          %s3381 = scalar_lea.vmem [#allocation29], %s3380
          %3382 = dma.done %s3378, 2048
        $region164: #{tpu_custom_call.1} parent=159 // pred_fallthru
          _
      $region160: #{tpu_custom_call.1} parent=5 // pred_fallthru
        _
    $region6: #{tpu_custom_call.1} parent=1 // loop_footer
      %s45 = sadd.s32 1, %s41
    $region7: #{tpu_custom_call.1} parent=1 // loop_footer_branch
      %40 = sbr.rel target = $region3
    $region8: #{tpu_custom_call.1} parent=1 // loop_exit
      _
    %3383 = vsyncpa [#allocation6], 1
    %s3384 = scalar_lea.sflag [#allocation6], 1
    %3385 = vsyncpa %s3384, 1
    %3386 = vsyncpa [#allocation9], 1
    %3387 = vsyncpa [#allocation12], 1
    %3388 = vsyncpa [#allocation15], 1
    %3389 = vsyncpa [#allocation18], 1
    %3390 = vsyncpa [#allocation21], 1
    %3391 = vsyncpa [#allocation24], 1
    %3392 = vsyncpa [#allocation27], 1
    %s3393 = scalar_lea.sflag [#allocation27], 1
    %3394 = vsyncpa %s3393, 1
    %3395 = vsyncpa [#allocation7], 1
    %s3396 = scalar_lea.sflag [#allocation7], 1
    %3397 = vsyncpa %s3396, 1

</llo_original>
